<compile_context>
chip_gen: v5e
topology: v5e:2x2
jax: 0.10.0
libtpu: 0.0.40
codegen_flags: <defaults>
</compile_context>

<pallas_src>
import jax
import jax.numpy as jnp
from jax.experimental import pallas as pl
from jax.experimental.pallas import tpu as pltpu


# ------------------------------ fused forward kernel ------------------------------
def _reference_net_kernel(x_ref,
                          aa1_ref, ab1_ref, aa2_ref, ab2_ref, aa3_ref, ab3_ref,
                          sv1_ref, tv1_ref, sv2_ref, tv2_ref, sv3_ref, tv3_ref,
                          f1_ref, fb1_ref, fw2_ref, fb2_ref, fw3_ref, fb3_ref,
                          o_ref):
    bt = x_ref.shape[1]

    def conv_wpooled(x, aa_ref, ab_ref):
        """3x3 same-conv + the horizontal half of the 2x2 max pool.

        x: (H, bt, Win*Cin) value.  aa/ab: (3, Win*Cin, Wout*Cout) banded conv
        matrices with the even/odd pool-column selection folded in.  Returns the
        W-pooled conv output, shape (H, bt, Wout*Cout).
        """
        h, b, k = x.shape
        n = aa_ref.shape[-1]

        def mm(rows, a):                       # rows: (r, b, k) value, a: (k, n)
            r = rows.shape[0]
            y = jnp.dot(rows.reshape(r * b, k), a,
                        preferred_element_type=jnp.float32)
            return y.reshape(r, b, n)

        zrow = jnp.zeros((1, b, n), jnp.float32)

        def conv(a_ref):                       # sum over the 3 kernel rows (ky)
            # out[h'] = in[h'-1] @ A0 + in[h'] @ A1 + in[h'+1] @ A2  (H zero-pad)
            top = jnp.concatenate([zrow, mm(x[:h - 1], a_ref[0])], axis=0)
            mid = mm(x, a_ref[1])
            bot = jnp.concatenate([mm(x[1:], a_ref[2]), zrow], axis=0)
            return top + mid + bot

        return jnp.maximum(conv(aa_ref), conv(ab_ref))

    def hpool_bn_relu(wp, s_ref, t_ref, lead_pad):
        """Vertical half of the 2x2 max pool, then folded BatchNorm + ReLU."""
        h, b, n = wp.shape
        if lead_pad:                           # MaxPool2d(2, padding=1) on odd H:
            pairs = wp[1:].reshape((h - 1) // 2, 2, b, n)   # rows (1,2),(3,4),(5,6)
            hp = jnp.concatenate(
                [wp[0:1], jnp.maximum(pairs[:, 0], pairs[:, 1])], axis=0)
        else:                                  # rows (0,1),(2,3),...
            pairs = wp.reshape(h // 2, 2, b, n)
            hp = jnp.maximum(pairs[:, 0], pairs[:, 1])
        return jnp.maximum(hp * s_ref[...] + t_ref[...], 0.0)

    x = x_ref[...].astype(jnp.float32)                              # (28, bt,  28)
    y1 = hpool_bn_relu(conv_wpooled(x, aa1_ref, ab1_ref),
                       sv1_ref, tv1_ref, lead_pad=False)            # (14, bt, 112)
    y2 = hpool_bn_relu(conv_wpooled(y1, aa2_ref, ab2_ref),
                       sv2_ref, tv2_ref, lead_pad=False)            # ( 7, bt, 112)
    y3 = hpool_bn_relu(conv_wpooled(y2, aa3_ref, ab3_ref),
                       sv3_ref, tv3_ref, lead_pad=True)             # ( 4, bt, 128)

    # flatten + fc1 fused: fc1 weight rows were pre-permuted to the (h, w, c) lane
    # order, so fc1 is 4 accumulated (bt, 128) @ (128, 128) MXU matmuls.
    acc = jnp.zeros((bt, f1_ref.shape[-1]), jnp.float32)
    for hh in range(f1_ref.shape[0]):
        acc = acc + jnp.dot(y3[hh], f1_ref[hh],
                            preferred_element_type=jnp.float32)
    h1 = jnp.maximum(acc + fb1_ref[...], 0.0)                       # fc1 + ReLU
    h2 = jnp.maximum(jnp.dot(h1, fw2_ref[...],
                             preferred_element_type=jnp.float32) + fb2_ref[...],
                     0.0)                                           # fc2 + ReLU
    o_ref[...] = jnp.dot(h2, fw3_ref[...],
                         preferred_element_type=jnp.float32) + fb3_ref[...]


# --------------------------------- wrapper -----------------------------------------
def reference_net_forward(x_nchw, q, *, batch_tile=128, num_classes=10,
                          core_parallel=False):
    """x_nchw: (B, 1, 28, 28) float32 (PyTorch layout).  q: prepare_params() output."""
    B, C, H, W = x_nchw.shape
    assert C == 1 and (H, W) == (28, 28), (
        "ReferenceNet's fc1 expects 32*4*4 features, i.e. a 1x28x28 input")

    # (B,1,28,28) -> (H, B, W): H on the major axis, batch on sublanes, W on lanes.
    x = x_nchw.astype(jnp.float32).reshape(B, H, W)

    # Batch tiling: one big tile per grid step; small batches run as a single step.
    batch_tile = max(8, (int(batch_tile) // 8) * 8)   # keep bt a multiple of 8
    if B <= batch_tile:
        bt, n_tiles = B, 1
    else:
        bt, n_tiles = batch_tile, -(-B // batch_tile)
    Bp = bt * n_tiles
    if Bp != B:
        x = jnp.concatenate([x, jnp.zeros((Bp - B, H, W), x.dtype)], axis=0)
    x = x.transpose(1, 0, 2)                          # (H, Bp, W)

    consts = (q["Aa1"], q["Ab1"], q["Aa2"], q["Ab2"], q["Aa3"], q["Ab3"],
              q["sv1"], q["tv1"], q["sv2"], q["tv2"], q["sv3"], q["tv3"],
              q["F1"], q["fb1"], q["fw2"], q["fb2"], q["fw3"], q["fb3"])

    def full_spec(a):
        nd = a.ndim
        return pl.BlockSpec(a.shape, lambda i, _nd=nd: (0,) * _nd)

    n_out = q["fw3"].shape[-1]                        # 128 (lane-dense, padded classes)

    out = pl.pallas_call(
        _reference_net_kernel,
        out_shape=jax.ShapeDtypeStruct((Bp, n_out), jnp.float32),
        grid=(n_tiles,),
        in_specs=[pl.BlockSpec((H, bt, W), lambda i: (0, i, 0))]
                 + [full_spec(a) for a in consts],
        out_specs=pl.BlockSpec((bt, n_out), lambda i: (i, 0)),
        compiler_params=pltpu.CompilerParams(
            dimension_semantics=((pltpu.CORE_PARALLEL,) if core_parallel
                                 else ("parallel",)),
            vmem_limit_bytes=48 * 1024 * 1024),
    )(x, *consts)

    return out[:B, :num_classes]


# ----------------------- one-time parameter massaging ------------------------------
def prepare_params(p):
    """Done once outside the kernel (zero runtime cost)."""
    f32 = jnp.float32

    def banded(w, wi):
        """(3,3,Cin,Cout) kernel -> 3 banded matrices of shape (wi*Cin, wi*Cout).

        A[ky][wi_*Cin+ci, wo*Cout+co] = w[ky, wi_-wo+1, ci, co] (zero outside the
        3-tap band): the kx taps and the 'same' W zero-padding are folded in.
        """
        return jnp.stack([
            sum(jnp.kron(jnp.eye(wi, k=1 - kx, dtype=f32), w[ky, kx])
                for kx in range(3))
            for ky in range(3)])

    def pool_cols(wi, wo, cout, lead_pad):
        """0/1 lane-selection matrices implementing the W half of the max pool."""
        r = jnp.arange(wi)[:, None]
        j = jnp.arange(wo)[None, :]
        if lead_pad:   # MaxPool2d(2, padding=1): windows (-1,0),(1,2),(3,4),(5,6)
            ca, cb = jnp.maximum(2 * j - 1, 0), 2 * j
        else:          # MaxPool2d(2): windows (0,1),(2,3),...
            ca, cb = 2 * j, 2 * j + 1
        eye_c = jnp.eye(cout, dtype=f32)
        return (jnp.kron((r == ca).astype(f32), eye_c),
                jnp.kron((r == cb).astype(f32), eye_c))

    q = {}
    for name, wi, lead in (("1", 28, False), ("2", 14, False), ("3", 7, True)):
        w = p[f"w{name}"].astype(f32)
        cout = w.shape[-1]
        wo = (wi + (1 if lead else 0)) // 2
        a = banded(w, wi)                                 # (3, wi*Cin, wi*Cout)
        sa, sb = pool_cols(wi, wo, cout, lead)            # (wi*Cout, wo*Cout)
        q[f"Aa{name}"] = a @ sa                           # fold W-pool selection
        q[f"Ab{name}"] = a @ sb
        # Folded BatchNorm (conv bias folded into the shift -- exact, a per-channel
        # constant commutes with max pooling), tiled to the (w, c) lane order.
        s = p[f"s{name}"].reshape(-1)
        t = (p[f"t{name}"] + p[f"s{name}"] * p[f"b{name}"]).reshape(-1)
        q[f"sv{name}"] = jnp.tile(s, wo).reshape(1, wo * cout)
        q[f"tv{name}"] = jnp.tile(t, wo).reshape(1, wo * cout)

    # fc1 rows: PyTorch flatten order (c, h, w) -> per-h blocks in (w, c) lane order.
    c3 = p["w3"].shape[-1]
    side = int(round((p["fw1"].shape[0] // c3) ** 0.5))
    q["F1"] = (p["fw1"].reshape(c3, side, side, -1)
               .transpose(1, 2, 0, 3)
               .reshape(side, side * c3, -1))
    q["fb1"] = p["fb1"]
    q["fw2"], q["fb2"] = p["fw2"], p["fb2"]
    # Lane-dense output: zero-pad the class dim to 128 (wrapper slices [:, :10]).
    n_cls = p["fw3"].shape[-1]
    q["fw3"] = jnp.zeros((p["fw3"].shape[0], 128), f32).at[:, :n_cls].set(p["fw3"])
    q["fb3"] = jnp.zeros((1, 128), f32).at[:, :n_cls].set(p["fb3"])
    return q


# --------------------------- deterministic parameters -------------------------------
def init_params(key, kernel=3, num_filters=8):
    eps = 1e-5

    def conv_params(k, cin, cout):
        k1, k2, k3, k4, k5, k6 = jax.random.split(k, 6)
        fan_in = cin * kernel * kernel
        w = jax.random.normal(k1, (kernel, kernel, cin, cout), jnp.float32) / jnp.sqrt(fan_in)
        b = 0.1 * jax.random.normal(k2, (1, cout), jnp.float32)
        gamma = 1.0 + 0.1 * jax.random.normal(k3, (1, cout), jnp.float32)
        beta = 0.1 * jax.random.normal(k4, (1, cout), jnp.float32)
        rmean = 0.1 * jax.random.normal(k5, (1, cout), jnp.float32)
        rvar = 1.0 + 0.5 * jax.random.uniform(k6, (1, cout), jnp.float32)
        scale = gamma / jnp.sqrt(rvar + eps)
        shift = beta - rmean * scale
        return w, b, scale, shift

    def fc_params(k, din, dout):
        k1, k2 = jax.random.split(k)
        w = jax.random.normal(k1, (din, dout), jnp.float32) / jnp.sqrt(din)
        b = 0.1 * jax.random.normal(k2, (1, dout), jnp.float32)
        return w, b

    kc1, kc2, kc3, kf1, kf2, kf3 = jax.random.split(key, 6)
    p = {}
    p["w1"], p["b1"], p["s1"], p["t1"] = conv_params(kc1, 1, num_filters)
    p["w2"], p["b2"], p["s2"], p["t2"] = conv_params(kc2, num_filters, num_filters * 2)
    p["w3"], p["b3"], p["s3"], p["t3"] = conv_params(kc3, num_filters * 2, num_filters * 4)
    p["fw1"], p["fb1"] = fc_params(kf1, num_filters * 4 * 4 * 4, 128)
    p["fw2"], p["fb2"] = fc_params(kf2, 128, 128)
    p["fw3"], p["fb3"] = fc_params(kf3, 128, 10)
    return p


if __name__ == "__main__":
    key = jax.random.PRNGKey(0)
    pkey, xkey = jax.random.split(key)
    params = init_params(pkey)
    q = prepare_params(params)                                   # one-time, outside jit
    x = jax.random.normal(xkey, (2, 1, 28, 28), jnp.float32)     # NCHW, as PyTorch sees it
    fwd = jax.jit(reference_net_forward)
    out = jax.block_until_ready(fwd(x, q))
    assert out.shape == (2, 10) and out.dtype == jnp.float32
    assert bool(jnp.all(jnp.isfinite(out)))
    print("KERNEL_OK")
</pallas_src>

<mosaic_0001>
module attributes {stable_mosaic.version = 11 : i64} {
  func.func @_reference_net_kernel(%arg0: i32, %arg1: memref<28x2x28xf32, #tpu.memory_space<vmem>>, %arg2: memref<3x28x112xf32, #tpu.memory_space<vmem>>, %arg3: memref<3x28x112xf32, #tpu.memory_space<vmem>>, %arg4: memref<3x112x112xf32, #tpu.memory_space<vmem>>, %arg5: memref<3x112x112xf32, #tpu.memory_space<vmem>>, %arg6: memref<3x112x128xf32, #tpu.memory_space<vmem>>, %arg7: memref<3x112x128xf32, #tpu.memory_space<vmem>>, %arg8: memref<1x112xf32, #tpu.memory_space<vmem>>, %arg9: memref<1x112xf32, #tpu.memory_space<vmem>>, %arg10: memref<1x112xf32, #tpu.memory_space<vmem>>, %arg11: memref<1x112xf32, #tpu.memory_space<vmem>>, %arg12: memref<1x128xf32, #tpu.memory_space<vmem>>, %arg13: memref<1x128xf32, #tpu.memory_space<vmem>>, %arg14: memref<4x128x128xf32, #tpu.memory_space<vmem>>, %arg15: memref<1x128xf32, #tpu.memory_space<vmem>>, %arg16: memref<128x128xf32, #tpu.memory_space<vmem>>, %arg17: memref<1x128xf32, #tpu.memory_space<vmem>>, %arg18: memref<128x128xf32, #tpu.memory_space<vmem>>, %arg19: memref<1x128xf32, #tpu.memory_space<vmem>>, %arg20: memref<2x128xf32, #tpu.memory_space<vmem>>) attributes {dimension_semantics = [#tpu.dimension_semantics<parallel>], iteration_bounds = array<i64: 1>, scalar_prefetch = 0 : i64, scratch_operands = 0 : i64, tpu.core_type = #tpu.core_type<tc>, window_params = [{transform_indices = @transform_0, window_bounds = array<i64: 28, 2, 28>}, {pipeline_mode = #tpu.pipeline_mode<synchronous>, transform_indices = @transform_1, window_bounds = array<i64: 3, 28, 112>}, {pipeline_mode = #tpu.pipeline_mode<synchronous>, transform_indices = @transform_2, window_bounds = array<i64: 3, 28, 112>}, {pipeline_mode = #tpu.pipeline_mode<synchronous>, transform_indices = @transform_3, window_bounds = array<i64: 3, 112, 112>}, {pipeline_mode = #tpu.pipeline_mode<synchronous>, transform_indices = @transform_4, window_bounds = array<i64: 3, 112, 112>}, {pipeline_mode = #tpu.pipeline_mode<synchronous>, transform_indices = @transform_5, window_bounds = array<i64: 3, 112, 128>}, {pipeline_mode = #tpu.pipeline_mode<synchronous>, transform_indices = @transform_6, window_bounds = array<i64: 3, 112, 128>}, {pipeline_mode = #tpu.pipeline_mode<synchronous>, transform_indices = @transform_7, window_bounds = array<i64: 1, 112>}, {pipeline_mode = #tpu.pipeline_mode<synchronous>, transform_indices = @transform_8, window_bounds = array<i64: 1, 112>}, {pipeline_mode = #tpu.pipeline_mode<synchronous>, transform_indices = @transform_9, window_bounds = array<i64: 1, 112>}, {pipeline_mode = #tpu.pipeline_mode<synchronous>, transform_indices = @transform_10, window_bounds = array<i64: 1, 112>}, {pipeline_mode = #tpu.pipeline_mode<synchronous>, transform_indices = @transform_11, window_bounds = array<i64: 1, 128>}, {pipeline_mode = #tpu.pipeline_mode<synchronous>, transform_indices = @transform_12, window_bounds = array<i64: 1, 128>}, {pipeline_mode = #tpu.pipeline_mode<synchronous>, transform_indices = @transform_13, window_bounds = array<i64: 4, 128, 128>}, {pipeline_mode = #tpu.pipeline_mode<synchronous>, transform_indices = @transform_14, window_bounds = array<i64: 1, 128>}, {pipeline_mode = #tpu.pipeline_mode<synchronous>, transform_indices = @transform_15, window_bounds = array<i64: 128, 128>}, {pipeline_mode = #tpu.pipeline_mode<synchronous>, transform_indices = @transform_16, window_bounds = array<i64: 1, 128>}, {pipeline_mode = #tpu.pipeline_mode<synchronous>, transform_indices = @transform_17, window_bounds = array<i64: 128, 128>}, {pipeline_mode = #tpu.pipeline_mode<synchronous>, transform_indices = @transform_18, window_bounds = array<i64: 1, 128>}, {transform_indices = @transform_19, window_bounds = array<i64: 2, 128>}]} {
    %c0 = arith.constant 0 : index
    %c0_0 = arith.constant 0 : index
    %c0_1 = arith.constant 0 : index
    %0 = vector.load %arg1[%c0, %c0_0, %c0_1] : memref<28x2x28xf32, #tpu.memory_space<vmem>>, vector<28x2x28xf32>
    %cst = arith.constant 0.000000e+00 : f32
    %1 = vector.broadcast %cst : f32 to vector<1x2x112xf32>
    %2 = vector.extract_strided_slice %0 {offsets = [0, 0, 0], sizes = [27, 2, 28], strides = [1, 1, 1]} : vector<28x2x28xf32> to vector<27x2x28xf32>
    %c0_2 = arith.constant 0 : index
    %c0_3 = arith.constant 0 : index
    %c0_4 = arith.constant 0 : index
    %3 = vector.load %arg2[%c0_2, %c0_3, %c0_4] : memref<3x28x112xf32, #tpu.memory_space<vmem>>, vector<1x28x112xf32>
    %4 = vector.shape_cast %3 : vector<1x28x112xf32> to vector<28x112xf32>
    %5 = vector.shape_cast %2 : vector<27x2x28xf32> to vector<54x28xf32>
    %cst_5 = arith.constant dense<0.000000e+00> : vector<54x112xf32>
    %6 = tpu.matmul %5, %4, %cst_5 {dimension_numbers = #tpu.dot_dimension_numbers<[1], [0], [0], [1], [0, 0, 1, 1], [], []>} : vector<54x28xf32>, vector<28x112xf32>, vector<54x112xf32> -> vector<54x112xf32>
    %7 = vector.shape_cast %6 : vector<54x112xf32> to vector<27x2x112xf32>
    %8 = tpu.concatenate %1, %7 in 0 : vector<1x2x112xf32>, vector<27x2x112xf32> -> vector<28x2x112xf32>
    %c1 = arith.constant 1 : index
    %c0_6 = arith.constant 0 : index
    %c0_7 = arith.constant 0 : index
    %9 = vector.load %arg2[%c1, %c0_6, %c0_7] : memref<3x28x112xf32, #tpu.memory_space<vmem>>, vector<1x28x112xf32>
    %10 = vector.shape_cast %9 : vector<1x28x112xf32> to vector<28x112xf32>
    %11 = vector.shape_cast %0 : vector<28x2x28xf32> to vector<56x28xf32>
    %cst_8 = arith.constant dense<0.000000e+00> : vector<56x112xf32>
    %12 = tpu.matmul %11, %10, %cst_8 {dimension_numbers = #tpu.dot_dimension_numbers<[1], [0], [0], [1], [0, 0, 1, 1], [], []>} : vector<56x28xf32>, vector<28x112xf32>, vector<56x112xf32> -> vector<56x112xf32>
    %13 = vector.shape_cast %12 : vector<56x112xf32> to vector<28x2x112xf32>
    %14 = vector.extract_strided_slice %0 {offsets = [1, 0, 0], sizes = [27, 2, 28], strides = [1, 1, 1]} : vector<28x2x28xf32> to vector<27x2x28xf32>
    %c2 = arith.constant 2 : index
    %c0_9 = arith.constant 0 : index
    %c0_10 = arith.constant 0 : index
    %15 = vector.load %arg2[%c2, %c0_9, %c0_10] : memref<3x28x112xf32, #tpu.memory_space<vmem>>, vector<1x28x112xf32>
    %16 = vector.shape_cast %15 : vector<1x28x112xf32> to vector<28x112xf32>
    %17 = vector.shape_cast %14 : vector<27x2x28xf32> to vector<54x28xf32>
    %cst_11 = arith.constant dense<0.000000e+00> : vector<54x112xf32>
    %18 = tpu.matmul %17, %16, %cst_11 {dimension_numbers = #tpu.dot_dimension_numbers<[1], [0], [0], [1], [0, 0, 1, 1], [], []>} : vector<54x28xf32>, vector<28x112xf32>, vector<54x112xf32> -> vector<54x112xf32>
    %19 = vector.shape_cast %18 : vector<54x112xf32> to vector<27x2x112xf32>
    %20 = tpu.concatenate %19, %1 in 0 : vector<27x2x112xf32>, vector<1x2x112xf32> -> vector<28x2x112xf32>
    %21 = arith.addf %8, %13 : vector<28x2x112xf32>
    %22 = arith.addf %21, %20 : vector<28x2x112xf32>
    %23 = vector.extract_strided_slice %0 {offsets = [0, 0, 0], sizes = [27, 2, 28], strides = [1, 1, 1]} : vector<28x2x28xf32> to vector<27x2x28xf32>
    %c0_12 = arith.constant 0 : index
    %c0_13 = arith.constant 0 : index
    %c0_14 = arith.constant 0 : index
    %24 = vector.load %arg3[%c0_12, %c0_13, %c0_14] : memref<3x28x112xf32, #tpu.memory_space<vmem>>, vector<1x28x112xf32>
    %25 = vector.shape_cast %24 : vector<1x28x112xf32> to vector<28x112xf32>
    %26 = vector.shape_cast %23 : vector<27x2x28xf32> to vector<54x28xf32>
    %cst_15 = arith.constant dense<0.000000e+00> : vector<54x112xf32>
    %27 = tpu.matmul %26, %25, %cst_15 {dimension_numbers = #tpu.dot_dimension_numbers<[1], [0], [0], [1], [0, 0, 1, 1], [], []>} : vector<54x28xf32>, vector<28x112xf32>, vector<54x112xf32> -> vector<54x112xf32>
    %28 = vector.shape_cast %27 : vector<54x112xf32> to vector<27x2x112xf32>
    %29 = tpu.concatenate %1, %28 in 0 : vector<1x2x112xf32>, vector<27x2x112xf32> -> vector<28x2x112xf32>
    %c1_16 = arith.constant 1 : index
    %c0_17 = arith.constant 0 : index
    %c0_18 = arith.constant 0 : index
    %30 = vector.load %arg3[%c1_16, %c0_17, %c0_18] : memref<3x28x112xf32, #tpu.memory_space<vmem>>, vector<1x28x112xf32>
    %31 = vector.shape_cast %30 : vector<1x28x112xf32> to vector<28x112xf32>
    %32 = vector.shape_cast %0 : vector<28x2x28xf32> to vector<56x28xf32>
    %cst_19 = arith.constant dense<0.000000e+00> : vector<56x112xf32>
    %33 = tpu.matmul %32, %31, %cst_19 {dimension_numbers = #tpu.dot_dimension_numbers<[1], [0], [0], [1], [0, 0, 1, 1], [], []>} : vector<56x28xf32>, vector<28x112xf32>, vector<56x112xf32> -> vector<56x112xf32>
    %34 = vector.shape_cast %33 : vector<56x112xf32> to vector<28x2x112xf32>
    %35 = vector.extract_strided_slice %0 {offsets = [1, 0, 0], sizes = [27, 2, 28], strides = [1, 1, 1]} : vector<28x2x28xf32> to vector<27x2x28xf32>
    %c2_20 = arith.constant 2 : index
    %c0_21 = arith.constant 0 : index
    %c0_22 = arith.constant 0 : index
    %36 = vector.load %arg3[%c2_20, %c0_21, %c0_22] : memref<3x28x112xf32, #tpu.memory_space<vmem>>, vector<1x28x112xf32>
    %37 = vector.shape_cast %36 : vector<1x28x112xf32> to vector<28x112xf32>
    %38 = vector.shape_cast %35 : vector<27x2x28xf32> to vector<54x28xf32>
    %cst_23 = arith.constant dense<0.000000e+00> : vector<54x112xf32>
    %39 = tpu.matmul %38, %37, %cst_23 {dimension_numbers = #tpu.dot_dimension_numbers<[1], [0], [0], [1], [0, 0, 1, 1], [], []>} : vector<54x28xf32>, vector<28x112xf32>, vector<54x112xf32> -> vector<54x112xf32>
    %40 = vector.shape_cast %39 : vector<54x112xf32> to vector<27x2x112xf32>
    %41 = tpu.concatenate %40, %1 in 0 : vector<27x2x112xf32>, vector<1x2x112xf32> -> vector<28x2x112xf32>
    %42 = arith.addf %29, %34 : vector<28x2x112xf32>
    %43 = arith.addf %42, %41 : vector<28x2x112xf32>
    %44 = arith.maximumf %22, %43 : vector<28x2x112xf32>
    %45 = vector.shape_cast %44 : vector<28x2x112xf32> to vector<14x2x2x112xf32>
    %46 = vector.extract_strided_slice %45 {offsets = [0, 0, 0, 0], sizes = [14, 1, 2, 112], strides = [1, 1, 1, 1]} : vector<14x2x2x112xf32> to vector<14x1x2x112xf32>
    %47 = vector.shape_cast %46 : vector<14x1x2x112xf32> to vector<14x2x112xf32>
    %48 = vector.extract_strided_slice %45 {offsets = [0, 1, 0, 0], sizes = [14, 1, 2, 112], strides = [1, 1, 1, 1]} : vector<14x2x2x112xf32> to vector<14x1x2x112xf32>
    %49 = vector.shape_cast %48 : vector<14x1x2x112xf32> to vector<14x2x112xf32>
    %50 = arith.maximumf %47, %49 : vector<14x2x112xf32>
    %c0_24 = arith.constant 0 : index
    %c0_25 = arith.constant 0 : index
    %51 = vector.load %arg8[%c0_24, %c0_25] : memref<1x112xf32, #tpu.memory_space<vmem>>, vector<1x112xf32>
    %52 = vector.shape_cast %51 : vector<1x112xf32> to vector<1x1x112xf32>
    %53 = vector.broadcast %52 : vector<1x1x112xf32> to vector<14x2x112xf32>
    %54 = arith.mulf %50, %53 : vector<14x2x112xf32>
    %c0_26 = arith.constant 0 : index
    %c0_27 = arith.constant 0 : index
    %55 = vector.load %arg9[%c0_26, %c0_27] : memref<1x112xf32, #tpu.memory_space<vmem>>, vector<1x112xf32>
    %56 = vector.shape_cast %55 : vector<1x112xf32> to vector<1x1x112xf32>
    %57 = vector.broadcast %56 : vector<1x1x112xf32> to vector<14x2x112xf32>
    %58 = arith.addf %54, %57 : vector<14x2x112xf32>
    %cst_28 = arith.constant 0.000000e+00 : f32
    %59 = vector.broadcast %cst_28 : f32 to vector<14x2x112xf32>
    %60 = arith.maximumf %58, %59 : vector<14x2x112xf32>
    %cst_29 = arith.constant 0.000000e+00 : f32
    %61 = vector.broadcast %cst_29 : f32 to vector<1x2x112xf32>
    %62 = vector.extract_strided_slice %60 {offsets = [0, 0, 0], sizes = [13, 2, 112], strides = [1, 1, 1]} : vector<14x2x112xf32> to vector<13x2x112xf32>
    %c0_30 = arith.constant 0 : index
    %c0_31 = arith.constant 0 : index
    %c0_32 = arith.constant 0 : index
    %63 = vector.load %arg4[%c0_30, %c0_31, %c0_32] : memref<3x112x112xf32, #tpu.memory_space<vmem>>, vector<1x112x112xf32>
    %64 = vector.shape_cast %63 : vector<1x112x112xf32> to vector<112x112xf32>
    %65 = vector.shape_cast %62 : vector<13x2x112xf32> to vector<26x112xf32>
    %cst_33 = arith.constant dense<0.000000e+00> : vector<26x112xf32>
    %66 = tpu.matmul %65, %64, %cst_33 {dimension_numbers = #tpu.dot_dimension_numbers<[1], [0], [0], [1], [0, 0, 1, 1], [], []>} : vector<26x112xf32>, vector<112x112xf32>, vector<26x112xf32> -> vector<26x112xf32>
    %67 = vector.shape_cast %66 : vector<26x112xf32> to vector<13x2x112xf32>
    %68 = tpu.concatenate %61, %67 in 0 : vector<1x2x112xf32>, vector<13x2x112xf32> -> vector<14x2x112xf32>
    %c1_34 = arith.constant 1 : index
    %c0_35 = arith.constant 0 : index
    %c0_36 = arith.constant 0 : index
    %69 = vector.load %arg4[%c1_34, %c0_35, %c0_36] : memref<3x112x112xf32, #tpu.memory_space<vmem>>, vector<1x112x112xf32>
    %70 = vector.shape_cast %69 : vector<1x112x112xf32> to vector<112x112xf32>
    %71 = vector.shape_cast %60 : vector<14x2x112xf32> to vector<28x112xf32>
    %cst_37 = arith.constant dense<0.000000e+00> : vector<28x112xf32>
    %72 = tpu.matmul %71, %70, %cst_37 {dimension_numbers = #tpu.dot_dimension_numbers<[1], [0], [0], [1], [0, 0, 1, 1], [], []>} : vector<28x112xf32>, vector<112x112xf32>, vector<28x112xf32> -> vector<28x112xf32>
    %73 = vector.shape_cast %72 : vector<28x112xf32> to vector<14x2x112xf32>
    %74 = vector.extract_strided_slice %60 {offsets = [1, 0, 0], sizes = [13, 2, 112], strides = [1, 1, 1]} : vector<14x2x112xf32> to vector<13x2x112xf32>
    %c2_38 = arith.constant 2 : index
    %c0_39 = arith.constant 0 : index
    %c0_40 = arith.constant 0 : index
    %75 = vector.load %arg4[%c2_38, %c0_39, %c0_40] : memref<3x112x112xf32, #tpu.memory_space<vmem>>, vector<1x112x112xf32>
    %76 = vector.shape_cast %75 : vector<1x112x112xf32> to vector<112x112xf32>
    %77 = vector.shape_cast %74 : vector<13x2x112xf32> to vector<26x112xf32>
    %cst_41 = arith.constant dense<0.000000e+00> : vector<26x112xf32>
    %78 = tpu.matmul %77, %76, %cst_41 {dimension_numbers = #tpu.dot_dimension_numbers<[1], [0], [0], [1], [0, 0, 1, 1], [], []>} : vector<26x112xf32>, vector<112x112xf32>, vector<26x112xf32> -> vector<26x112xf32>
    %79 = vector.shape_cast %78 : vector<26x112xf32> to vector<13x2x112xf32>
    %80 = tpu.concatenate %79, %61 in 0 : vector<13x2x112xf32>, vector<1x2x112xf32> -> vector<14x2x112xf32>
    %81 = arith.addf %68, %73 : vector<14x2x112xf32>
    %82 = arith.addf %81, %80 : vector<14x2x112xf32>
    %83 = vector.extract_strided_slice %60 {offsets = [0, 0, 0], sizes = [13, 2, 112], strides = [1, 1, 1]} : vector<14x2x112xf32> to vector<13x2x112xf32>
    %c0_42 = arith.constant 0 : index
    %c0_43 = arith.constant 0 : index
    %c0_44 = arith.constant 0 : index
    %84 = vector.load %arg5[%c0_42, %c0_43, %c0_44] : memref<3x112x112xf32, #tpu.memory_space<vmem>>, vector<1x112x112xf32>
    %85 = vector.shape_cast %84 : vector<1x112x112xf32> to vector<112x112xf32>
    %86 = vector.shape_cast %83 : vector<13x2x112xf32> to vector<26x112xf32>
    %cst_45 = arith.constant dense<0.000000e+00> : vector<26x112xf32>
    %87 = tpu.matmul %86, %85, %cst_45 {dimension_numbers = #tpu.dot_dimension_numbers<[1], [0], [0], [1], [0, 0, 1, 1], [], []>} : vector<26x112xf32>, vector<112x112xf32>, vector<26x112xf32> -> vector<26x112xf32>
    %88 = vector.shape_cast %87 : vector<26x112xf32> to vector<13x2x112xf32>
    %89 = tpu.concatenate %61, %88 in 0 : vector<1x2x112xf32>, vector<13x2x112xf32> -> vector<14x2x112xf32>
    %c1_46 = arith.constant 1 : index
    %c0_47 = arith.constant 0 : index
    %c0_48 = arith.constant 0 : index
    %90 = vector.load %arg5[%c1_46, %c0_47, %c0_48] : memref<3x112x112xf32, #tpu.memory_space<vmem>>, vector<1x112x112xf32>
    %91 = vector.shape_cast %90 : vector<1x112x112xf32> to vector<112x112xf32>
    %92 = vector.shape_cast %60 : vector<14x2x112xf32> to vector<28x112xf32>
    %cst_49 = arith.constant dense<0.000000e+00> : vector<28x112xf32>
    %93 = tpu.matmul %92, %91, %cst_49 {dimension_numbers = #tpu.dot_dimension_numbers<[1], [0], [0], [1], [0, 0, 1, 1], [], []>} : vector<28x112xf32>, vector<112x112xf32>, vector<28x112xf32> -> vector<28x112xf32>
    %94 = vector.shape_cast %93 : vector<28x112xf32> to vector<14x2x112xf32>
    %95 = vector.extract_strided_slice %60 {offsets = [1, 0, 0], sizes = [13, 2, 112], strides = [1, 1, 1]} : vector<14x2x112xf32> to vector<13x2x112xf32>
    %c2_50 = arith.constant 2 : index
    %c0_51 = arith.constant 0 : index
    %c0_52 = arith.constant 0 : index
    %96 = vector.load %arg5[%c2_50, %c0_51, %c0_52] : memref<3x112x112xf32, #tpu.memory_space<vmem>>, vector<1x112x112xf32>
    %97 = vector.shape_cast %96 : vector<1x112x112xf32> to vector<112x112xf32>
    %98 = vector.shape_cast %95 : vector<13x2x112xf32> to vector<26x112xf32>
    %cst_53 = arith.constant dense<0.000000e+00> : vector<26x112xf32>
    %99 = tpu.matmul %98, %97, %cst_53 {dimension_numbers = #tpu.dot_dimension_numbers<[1], [0], [0], [1], [0, 0, 1, 1], [], []>} : vector<26x112xf32>, vector<112x112xf32>, vector<26x112xf32> -> vector<26x112xf32>
    %100 = vector.shape_cast %99 : vector<26x112xf32> to vector<13x2x112xf32>
    %101 = tpu.concatenate %100, %61 in 0 : vector<13x2x112xf32>, vector<1x2x112xf32> -> vector<14x2x112xf32>
    %102 = arith.addf %89, %94 : vector<14x2x112xf32>
    %103 = arith.addf %102, %101 : vector<14x2x112xf32>
    %104 = arith.maximumf %82, %103 : vector<14x2x112xf32>
    %105 = vector.shape_cast %104 : vector<14x2x112xf32> to vector<7x2x2x112xf32>
    %106 = vector.extract_strided_slice %105 {offsets = [0, 0, 0, 0], sizes = [7, 1, 2, 112], strides = [1, 1, 1, 1]} : vector<7x2x2x112xf32> to vector<7x1x2x112xf32>
    %107 = vector.shape_cast %106 : vector<7x1x2x112xf32> to vector<7x2x112xf32>
    %108 = vector.extract_strided_slice %105 {offsets = [0, 1, 0, 0], sizes = [7, 1, 2, 112], strides = [1, 1, 1, 1]} : vector<7x2x2x112xf32> to vector<7x1x2x112xf32>
    %109 = vector.shape_cast %108 : vector<7x1x2x112xf32> to vector<7x2x112xf32>
    %110 = arith.maximumf %107, %109 : vector<7x2x112xf32>
    %c0_54 = arith.constant 0 : index
    %c0_55 = arith.constant 0 : index
    %111 = vector.load %arg10[%c0_54, %c0_55] : memref<1x112xf32, #tpu.memory_space<vmem>>, vector<1x112xf32>
    %112 = vector.shape_cast %111 : vector<1x112xf32> to vector<1x1x112xf32>
    %113 = vector.broadcast %112 : vector<1x1x112xf32> to vector<7x2x112xf32>
    %114 = arith.mulf %110, %113 : vector<7x2x112xf32>
    %c0_56 = arith.constant 0 : index
    %c0_57 = arith.constant 0 : index
    %115 = vector.load %arg11[%c0_56, %c0_57] : memref<1x112xf32, #tpu.memory_space<vmem>>, vector<1x112xf32>
    %116 = vector.shape_cast %115 : vector<1x112xf32> to vector<1x1x112xf32>
    %117 = vector.broadcast %116 : vector<1x1x112xf32> to vector<7x2x112xf32>
    %118 = arith.addf %114, %117 : vector<7x2x112xf32>
    %cst_58 = arith.constant 0.000000e+00 : f32
    %119 = vector.broadcast %cst_58 : f32 to vector<7x2x112xf32>
    %120 = arith.maximumf %118, %119 : vector<7x2x112xf32>
    %cst_59 = arith.constant 0.000000e+00 : f32
    %121 = vector.broadcast %cst_59 : f32 to vector<1x2x128xf32>
    %122 = vector.extract_strided_slice %120 {offsets = [0, 0, 0], sizes = [6, 2, 112], strides = [1, 1, 1]} : vector<7x2x112xf32> to vector<6x2x112xf32>
    %c0_60 = arith.constant 0 : index
    %c0_61 = arith.constant 0 : index
    %c0_62 = arith.constant 0 : index
    %123 = vector.load %arg6[%c0_60, %c0_61, %c0_62] : memref<3x112x128xf32, #tpu.memory_space<vmem>>, vector<1x112x128xf32>
    %124 = vector.shape_cast %123 : vector<1x112x128xf32> to vector<112x128xf32>
    %125 = vector.shape_cast %122 : vector<6x2x112xf32> to vector<12x112xf32>
    %cst_63 = arith.constant dense<0.000000e+00> : vector<12x128xf32>
    %126 = tpu.matmul %125, %124, %cst_63 {dimension_numbers = #tpu.dot_dimension_numbers<[1], [0], [0], [1], [0, 0, 1, 1], [], []>} : vector<12x112xf32>, vector<112x128xf32>, vector<12x128xf32> -> vector<12x128xf32>
    %127 = vector.shape_cast %126 : vector<12x128xf32> to vector<6x2x128xf32>
    %128 = tpu.concatenate %121, %127 in 0 : vector<1x2x128xf32>, vector<6x2x128xf32> -> vector<7x2x128xf32>
    %c1_64 = arith.constant 1 : index
    %c0_65 = arith.constant 0 : index
    %c0_66 = arith.constant 0 : index
    %129 = vector.load %arg6[%c1_64, %c0_65, %c0_66] : memref<3x112x128xf32, #tpu.memory_space<vmem>>, vector<1x112x128xf32>
    %130 = vector.shape_cast %129 : vector<1x112x128xf32> to vector<112x128xf32>
    %131 = vector.shape_cast %120 : vector<7x2x112xf32> to vector<14x112xf32>
    %cst_67 = arith.constant dense<0.000000e+00> : vector<14x128xf32>
    %132 = tpu.matmul %131, %130, %cst_67 {dimension_numbers = #tpu.dot_dimension_numbers<[1], [0], [0], [1], [0, 0, 1, 1], [], []>} : vector<14x112xf32>, vector<112x128xf32>, vector<14x128xf32> -> vector<14x128xf32>
    %133 = vector.shape_cast %132 : vector<14x128xf32> to vector<7x2x128xf32>
    %134 = vector.extract_strided_slice %120 {offsets = [1, 0, 0], sizes = [6, 2, 112], strides = [1, 1, 1]} : vector<7x2x112xf32> to vector<6x2x112xf32>
    %c2_68 = arith.constant 2 : index
    %c0_69 = arith.constant 0 : index
    %c0_70 = arith.constant 0 : index
    %135 = vector.load %arg6[%c2_68, %c0_69, %c0_70] : memref<3x112x128xf32, #tpu.memory_space<vmem>>, vector<1x112x128xf32>
    %136 = vector.shape_cast %135 : vector<1x112x128xf32> to vector<112x128xf32>
    %137 = vector.shape_cast %134 : vector<6x2x112xf32> to vector<12x112xf32>
    %cst_71 = arith.constant dense<0.000000e+00> : vector<12x128xf32>
    %138 = tpu.matmul %137, %136, %cst_71 {dimension_numbers = #tpu.dot_dimension_numbers<[1], [0], [0], [1], [0, 0, 1, 1], [], []>} : vector<12x112xf32>, vector<112x128xf32>, vector<12x128xf32> -> vector<12x128xf32>
    %139 = vector.shape_cast %138 : vector<12x128xf32> to vector<6x2x128xf32>
    %140 = tpu.concatenate %139, %121 in 0 : vector<6x2x128xf32>, vector<1x2x128xf32> -> vector<7x2x128xf32>
    %141 = arith.addf %128, %133 : vector<7x2x128xf32>
    %142 = arith.addf %141, %140 : vector<7x2x128xf32>
    %143 = vector.extract_strided_slice %120 {offsets = [0, 0, 0], sizes = [6, 2, 112], strides = [1, 1, 1]} : vector<7x2x112xf32> to vector<6x2x112xf32>
    %c0_72 = arith.constant 0 : index
    %c0_73 = arith.constant 0 : index
    %c0_74 = arith.constant 0 : index
    %144 = vector.load %arg7[%c0_72, %c0_73, %c0_74] : memref<3x112x128xf32, #tpu.memory_space<vmem>>, vector<1x112x128xf32>
    %145 = vector.shape_cast %144 : vector<1x112x128xf32> to vector<112x128xf32>
    %146 = vector.shape_cast %143 : vector<6x2x112xf32> to vector<12x112xf32>
    %cst_75 = arith.constant dense<0.000000e+00> : vector<12x128xf32>
    %147 = tpu.matmul %146, %145, %cst_75 {dimension_numbers = #tpu.dot_dimension_numbers<[1], [0], [0], [1], [0, 0, 1, 1], [], []>} : vector<12x112xf32>, vector<112x128xf32>, vector<12x128xf32> -> vector<12x128xf32>
    %148 = vector.shape_cast %147 : vector<12x128xf32> to vector<6x2x128xf32>
    %149 = tpu.concatenate %121, %148 in 0 : vector<1x2x128xf32>, vector<6x2x128xf32> -> vector<7x2x128xf32>
    %c1_76 = arith.constant 1 : index
    %c0_77 = arith.constant 0 : index
    %c0_78 = arith.constant 0 : index
    %150 = vector.load %arg7[%c1_76, %c0_77, %c0_78] : memref<3x112x128xf32, #tpu.memory_space<vmem>>, vector<1x112x128xf32>
    %151 = vector.shape_cast %150 : vector<1x112x128xf32> to vector<112x128xf32>
    %152 = vector.shape_cast %120 : vector<7x2x112xf32> to vector<14x112xf32>
    %cst_79 = arith.constant dense<0.000000e+00> : vector<14x128xf32>
    %153 = tpu.matmul %152, %151, %cst_79 {dimension_numbers = #tpu.dot_dimension_numbers<[1], [0], [0], [1], [0, 0, 1, 1], [], []>} : vector<14x112xf32>, vector<112x128xf32>, vector<14x128xf32> -> vector<14x128xf32>
    %154 = vector.shape_cast %153 : vector<14x128xf32> to vector<7x2x128xf32>
    %155 = vector.extract_strided_slice %120 {offsets = [1, 0, 0], sizes = [6, 2, 112], strides = [1, 1, 1]} : vector<7x2x112xf32> to vector<6x2x112xf32>
    %c2_80 = arith.constant 2 : index
    %c0_81 = arith.constant 0 : index
    %c0_82 = arith.constant 0 : index
    %156 = vector.load %arg7[%c2_80, %c0_81, %c0_82] : memref<3x112x128xf32, #tpu.memory_space<vmem>>, vector<1x112x128xf32>
    %157 = vector.shape_cast %156 : vector<1x112x128xf32> to vector<112x128xf32>
    %158 = vector.shape_cast %155 : vector<6x2x112xf32> to vector<12x112xf32>
    %cst_83 = arith.constant dense<0.000000e+00> : vector<12x128xf32>
    %159 = tpu.matmul %158, %157, %cst_83 {dimension_numbers = #tpu.dot_dimension_numbers<[1], [0], [0], [1], [0, 0, 1, 1], [], []>} : vector<12x112xf32>, vector<112x128xf32>, vector<12x128xf32> -> vector<12x128xf32>
    %160 = vector.shape_cast %159 : vector<12x128xf32> to vector<6x2x128xf32>
    %161 = tpu.concatenate %160, %121 in 0 : vector<6x2x128xf32>, vector<1x2x128xf32> -> vector<7x2x128xf32>
    %162 = arith.addf %149, %154 : vector<7x2x128xf32>
    %163 = arith.addf %162, %161 : vector<7x2x128xf32>
    %164 = arith.maximumf %142, %163 : vector<7x2x128xf32>
    %165 = vector.extract_strided_slice %164 {offsets = [1, 0, 0], sizes = [6, 2, 128], strides = [1, 1, 1]} : vector<7x2x128xf32> to vector<6x2x128xf32>
    %166 = vector.shape_cast %165 : vector<6x2x128xf32> to vector<3x2x2x128xf32>
    %167 = vector.extract_strided_slice %164 {offsets = [0, 0, 0], sizes = [1, 2, 128], strides = [1, 1, 1]} : vector<7x2x128xf32> to vector<1x2x128xf32>
    %168 = vector.extract_strided_slice %166 {offsets = [0, 0, 0, 0], sizes = [3, 1, 2, 128], strides = [1, 1, 1, 1]} : vector<3x2x2x128xf32> to vector<3x1x2x128xf32>
    %169 = vector.shape_cast %168 : vector<3x1x2x128xf32> to vector<3x2x128xf32>
    %170 = vector.extract_strided_slice %166 {offsets = [0, 1, 0, 0], sizes = [3, 1, 2, 128], strides = [1, 1, 1, 1]} : vector<3x2x2x128xf32> to vector<3x1x2x128xf32>
    %171 = vector.shape_cast %170 : vector<3x1x2x128xf32> to vector<3x2x128xf32>
    %172 = arith.maximumf %169, %171 : vector<3x2x128xf32>
    %173 = tpu.concatenate %167, %172 in 0 : vector<1x2x128xf32>, vector<3x2x128xf32> -> vector<4x2x128xf32>
    %c0_84 = arith.constant 0 : index
    %c0_85 = arith.constant 0 : index
    %174 = vector.load %arg12[%c0_84, %c0_85] : memref<1x128xf32, #tpu.memory_space<vmem>>, vector<1x128xf32>
    %175 = vector.shape_cast %174 : vector<1x128xf32> to vector<1x1x128xf32>
    %176 = vector.broadcast %175 : vector<1x1x128xf32> to vector<4x2x128xf32>
    %177 = arith.mulf %173, %176 : vector<4x2x128xf32>
    %c0_86 = arith.constant 0 : index
    %c0_87 = arith.constant 0 : index
    %178 = vector.load %arg13[%c0_86, %c0_87] : memref<1x128xf32, #tpu.memory_space<vmem>>, vector<1x128xf32>
    %179 = vector.shape_cast %178 : vector<1x128xf32> to vector<1x1x128xf32>
    %180 = vector.broadcast %179 : vector<1x1x128xf32> to vector<4x2x128xf32>
    %181 = arith.addf %177, %180 : vector<4x2x128xf32>
    %cst_88 = arith.constant 0.000000e+00 : f32
    %182 = vector.broadcast %cst_88 : f32 to vector<4x2x128xf32>
    %183 = arith.maximumf %181, %182 : vector<4x2x128xf32>
    %cst_89 = arith.constant 0.000000e+00 : f32
    %184 = vector.broadcast %cst_89 : f32 to vector<2x128xf32>
    %185 = vector.extract_strided_slice %183 {offsets = [0, 0, 0], sizes = [1, 2, 128], strides = [1, 1, 1]} : vector<4x2x128xf32> to vector<1x2x128xf32>
    %186 = vector.shape_cast %185 : vector<1x2x128xf32> to vector<2x128xf32>
    %c0_90 = arith.constant 0 : index
    %c0_91 = arith.constant 0 : index
    %c0_92 = arith.constant 0 : index
    %187 = vector.load %arg14[%c0_90, %c0_91, %c0_92] : memref<4x128x128xf32, #tpu.memory_space<vmem>>, vector<1x128x128xf32>
    %188 = vector.shape_cast %187 : vector<1x128x128xf32> to vector<128x128xf32>
    %cst_93 = arith.constant dense<0.000000e+00> : vector<2x128xf32>
    %189 = tpu.matmul %186, %188, %cst_93 {dimension_numbers = #tpu.dot_dimension_numbers<[1], [0], [0], [1], [0, 0, 1, 1], [], []>} : vector<2x128xf32>, vector<128x128xf32>, vector<2x128xf32> -> vector<2x128xf32>
    %190 = arith.addf %184, %189 : vector<2x128xf32>
    %191 = vector.extract_strided_slice %183 {offsets = [1, 0, 0], sizes = [1, 2, 128], strides = [1, 1, 1]} : vector<4x2x128xf32> to vector<1x2x128xf32>
    %192 = vector.shape_cast %191 : vector<1x2x128xf32> to vector<2x128xf32>
    %c1_94 = arith.constant 1 : index
    %c0_95 = arith.constant 0 : index
    %c0_96 = arith.constant 0 : index
    %193 = vector.load %arg14[%c1_94, %c0_95, %c0_96] : memref<4x128x128xf32, #tpu.memory_space<vmem>>, vector<1x128x128xf32>
    %194 = vector.shape_cast %193 : vector<1x128x128xf32> to vector<128x128xf32>
    %cst_97 = arith.constant dense<0.000000e+00> : vector<2x128xf32>
    %195 = tpu.matmul %192, %194, %cst_97 {dimension_numbers = #tpu.dot_dimension_numbers<[1], [0], [0], [1], [0, 0, 1, 1], [], []>} : vector<2x128xf32>, vector<128x128xf32>, vector<2x128xf32> -> vector<2x128xf32>
    %196 = arith.addf %190, %195 : vector<2x128xf32>
    %197 = vector.extract_strided_slice %183 {offsets = [2, 0, 0], sizes = [1, 2, 128], strides = [1, 1, 1]} : vector<4x2x128xf32> to vector<1x2x128xf32>
    %198 = vector.shape_cast %197 : vector<1x2x128xf32> to vector<2x128xf32>
    %c2_98 = arith.constant 2 : index
    %c0_99 = arith.constant 0 : index
    %c0_100 = arith.constant 0 : index
    %199 = vector.load %arg14[%c2_98, %c0_99, %c0_100] : memref<4x128x128xf32, #tpu.memory_space<vmem>>, vector<1x128x128xf32>
    %200 = vector.shape_cast %199 : vector<1x128x128xf32> to vector<128x128xf32>
    %cst_101 = arith.constant dense<0.000000e+00> : vector<2x128xf32>
    %201 = tpu.matmul %198, %200, %cst_101 {dimension_numbers = #tpu.dot_dimension_numbers<[1], [0], [0], [1], [0, 0, 1, 1], [], []>} : vector<2x128xf32>, vector<128x128xf32>, vector<2x128xf32> -> vector<2x128xf32>
    %202 = arith.addf %196, %201 : vector<2x128xf32>
    %203 = vector.extract_strided_slice %183 {offsets = [3, 0, 0], sizes = [1, 2, 128], strides = [1, 1, 1]} : vector<4x2x128xf32> to vector<1x2x128xf32>
    %204 = vector.shape_cast %203 : vector<1x2x128xf32> to vector<2x128xf32>
    %c3 = arith.constant 3 : index
    %c0_102 = arith.constant 0 : index
    %c0_103 = arith.constant 0 : index
    %205 = vector.load %arg14[%c3, %c0_102, %c0_103] : memref<4x128x128xf32, #tpu.memory_space<vmem>>, vector<1x128x128xf32>
    %206 = vector.shape_cast %205 : vector<1x128x128xf32> to vector<128x128xf32>
    %cst_104 = arith.constant dense<0.000000e+00> : vector<2x128xf32>
    %207 = tpu.matmul %204, %206, %cst_104 {dimension_numbers = #tpu.dot_dimension_numbers<[1], [0], [0], [1], [0, 0, 1, 1], [], []>} : vector<2x128xf32>, vector<128x128xf32>, vector<2x128xf32> -> vector<2x128xf32>
    %208 = arith.addf %202, %207 : vector<2x128xf32>
    %c0_105 = arith.constant 0 : index
    %c0_106 = arith.constant 0 : index
    %209 = vector.load %arg15[%c0_105, %c0_106] : memref<1x128xf32, #tpu.memory_space<vmem>>, vector<1x128xf32>
    %210 = vector.broadcast %209 : vector<1x128xf32> to vector<2x128xf32>
    %211 = arith.addf %208, %210 : vector<2x128xf32>
    %cst_107 = arith.constant 0.000000e+00 : f32
    %212 = vector.broadcast %cst_107 : f32 to vector<2x128xf32>
    %213 = arith.maximumf %211, %212 : vector<2x128xf32>
    %c0_108 = arith.constant 0 : index
    %c0_109 = arith.constant 0 : index
    %214 = vector.load %arg16[%c0_108, %c0_109] : memref<128x128xf32, #tpu.memory_space<vmem>>, vector<128x128xf32>
    %cst_110 = arith.constant dense<0.000000e+00> : vector<2x128xf32>
    %215 = tpu.matmul %213, %214, %cst_110 {dimension_numbers = #tpu.dot_dimension_numbers<[1], [0], [0], [1], [0, 0, 1, 1], [], []>} : vector<2x128xf32>, vector<128x128xf32>, vector<2x128xf32> -> vector<2x128xf32>
    %c0_111 = arith.constant 0 : index
    %c0_112 = arith.constant 0 : index
    %216 = vector.load %arg17[%c0_111, %c0_112] : memref<1x128xf32, #tpu.memory_space<vmem>>, vector<1x128xf32>
    %217 = vector.broadcast %216 : vector<1x128xf32> to vector<2x128xf32>
    %218 = arith.addf %215, %217 : vector<2x128xf32>
    %cst_113 = arith.constant 0.000000e+00 : f32
    %219 = vector.broadcast %cst_113 : f32 to vector<2x128xf32>
    %220 = arith.maximumf %218, %219 : vector<2x128xf32>
    %c0_114 = arith.constant 0 : index
    %c0_115 = arith.constant 0 : index
    %221 = vector.load %arg18[%c0_114, %c0_115] : memref<128x128xf32, #tpu.memory_space<vmem>>, vector<128x128xf32>
    %cst_116 = arith.constant dense<0.000000e+00> : vector<2x128xf32>
    %222 = tpu.matmul %220, %221, %cst_116 {dimension_numbers = #tpu.dot_dimension_numbers<[1], [0], [0], [1], [0, 0, 1, 1], [], []>} : vector<2x128xf32>, vector<128x128xf32>, vector<2x128xf32> -> vector<2x128xf32>
    %c0_117 = arith.constant 0 : index
    %c0_118 = arith.constant 0 : index
    %223 = vector.load %arg19[%c0_117, %c0_118] : memref<1x128xf32, #tpu.memory_space<vmem>>, vector<1x128xf32>
    %224 = vector.broadcast %223 : vector<1x128xf32> to vector<2x128xf32>
    %225 = arith.addf %222, %224 : vector<2x128xf32>
    %c0_119 = arith.constant 0 : index
    %c0_120 = arith.constant 0 : index
    %226 = vector.load %arg20[%c0_119, %c0_120] : memref<2x128xf32, #tpu.memory_space<vmem>>, vector<2x128xf32>
    tpu.vector_store %arg20[%c0_119, %c0_120], %225 {strides = array<i32>} : memref<2x128xf32, #tpu.memory_space<vmem>>, vector<2x128xf32>,
    return
  }
  func.func @transform_0(%arg0: i32) -> (i32, i32, i32) {
    %c0_i32 = arith.constant 0 : i32
    %c0_i32_0 = arith.constant 0 : i32
    %c0_i32_1 = arith.constant 0 : i32
    return %c0_i32, %arg0, %c0_i32_0 : i32, i32, i32
  }
  func.func @transform_1(%arg0: i32) -> (i32, i32, i32) {
    %c0_i32 = arith.constant 0 : i32
    %c0_i32_0 = arith.constant 0 : i32
    %c0_i32_1 = arith.constant 0 : i32
    %c0_i32_2 = arith.constant 0 : i32
    return %c0_i32, %c0_i32_0, %c0_i32_1 : i32, i32, i32
  }
  func.func @transform_2(%arg0: i32) -> (i32, i32, i32) {
    %c0_i32 = arith.constant 0 : i32
    %c0_i32_0 = arith.constant 0 : i32
    %c0_i32_1 = arith.constant 0 : i32
    %c0_i32_2 = arith.constant 0 : i32
    return %c0_i32, %c0_i32_0, %c0_i32_1 : i32, i32, i32
  }
  func.func @transform_3(%arg0: i32) -> (i32, i32, i32) {
    %c0_i32 = arith.constant 0 : i32
    %c0_i32_0 = arith.constant 0 : i32
    %c0_i32_1 = arith.constant 0 : i32
    %c0_i32_2 = arith.constant 0 : i32
    return %c0_i32, %c0_i32_0, %c0_i32_1 : i32, i32, i32
  }
  func.func @transform_4(%arg0: i32) -> (i32, i32, i32) {
    %c0_i32 = arith.constant 0 : i32
    %c0_i32_0 = arith.constant 0 : i32
    %c0_i32_1 = arith.constant 0 : i32
    %c0_i32_2 = arith.constant 0 : i32
    return %c0_i32, %c0_i32_0, %c0_i32_1 : i32, i32, i32
  }
  func.func @transform_5(%arg0: i32) -> (i32, i32, i32) {
    %c0_i32 = arith.constant 0 : i32
    %c0_i32_0 = arith.constant 0 : i32
    %c0_i32_1 = arith.constant 0 : i32
    %c0_i32_2 = arith.constant 0 : i32
    return %c0_i32, %c0_i32_0, %c0_i32_1 : i32, i32, i32
  }
  func.func @transform_6(%arg0: i32) -> (i32, i32, i32) {
    %c0_i32 = arith.constant 0 : i32
    %c0_i32_0 = arith.constant 0 : i32
    %c0_i32_1 = arith.constant 0 : i32
    %c0_i32_2 = arith.constant 0 : i32
    return %c0_i32, %c0_i32_0, %c0_i32_1 : i32, i32, i32
  }
  func.func @transform_7(%arg0: i32) -> (i32, i32) {
    %c0_i32 = arith.constant 0 : i32
    %c0_i32_0 = arith.constant 0 : i32
    %c0_i32_1 = arith.constant 0 : i32
    return %c0_i32, %c0_i32_0 : i32, i32
  }
  func.func @transform_8(%arg0: i32) -> (i32, i32) {
    %c0_i32 = arith.constant 0 : i32
    %c0_i32_0 = arith.constant 0 : i32
    %c0_i32_1 = arith.constant 0 : i32
    return %c0_i32, %c0_i32_0 : i32, i32
  }
  func.func @transform_9(%arg0: i32) -> (i32, i32) {
    %c0_i32 = arith.constant 0 : i32
    %c0_i32_0 = arith.constant 0 : i32
    %c0_i32_1 = arith.constant 0 : i32
    return %c0_i32, %c0_i32_0 : i32, i32
  }
  func.func @transform_10(%arg0: i32) -> (i32, i32) {
    %c0_i32 = arith.constant 0 : i32
    %c0_i32_0 = arith.constant 0 : i32
    %c0_i32_1 = arith.constant 0 : i32
    return %c0_i32, %c0_i32_0 : i32, i32
  }
  func.func @transform_11(%arg0: i32) -> (i32, i32) {
    %c0_i32 = arith.constant 0 : i32
    %c0_i32_0 = arith.constant 0 : i32
    %c0_i32_1 = arith.constant 0 : i32
    return %c0_i32, %c0_i32_0 : i32, i32
  }
  func.func @transform_12(%arg0: i32) -> (i32, i32) {
    %c0_i32 = arith.constant 0 : i32
    %c0_i32_0 = arith.constant 0 : i32
    %c0_i32_1 = arith.constant 0 : i32
    return %c0_i32, %c0_i32_0 : i32, i32
  }
  func.func @transform_13(%arg0: i32) -> (i32, i32, i32) {
    %c0_i32 = arith.constant 0 : i32
    %c0_i32_0 = arith.constant 0 : i32
    %c0_i32_1 = arith.constant 0 : i32
    %c0_i32_2 = arith.constant 0 : i32
    return %c0_i32, %c0_i32_0, %c0_i32_1 : i32, i32, i32
  }
  func.func @transform_14(%arg0: i32) -> (i32, i32) {
    %c0_i32 = arith.constant 0 : i32
    %c0_i32_0 = arith.constant 0 : i32
    %c0_i32_1 = arith.constant 0 : i32
    return %c0_i32, %c0_i32_0 : i32, i32
  }
  func.func @transform_15(%arg0: i32) -> (i32, i32) {
    %c0_i32 = arith.constant 0 : i32
    %c0_i32_0 = arith.constant 0 : i32
    %c0_i32_1 = arith.constant 0 : i32
    return %c0_i32, %c0_i32_0 : i32, i32
  }
  func.func @transform_16(%arg0: i32) -> (i32, i32) {
    %c0_i32 = arith.constant 0 : i32
    %c0_i32_0 = arith.constant 0 : i32
    %c0_i32_1 = arith.constant 0 : i32
    return %c0_i32, %c0_i32_0 : i32, i32
  }
  func.func @transform_17(%arg0: i32) -> (i32, i32) {
    %c0_i32 = arith.constant 0 : i32
    %c0_i32_0 = arith.constant 0 : i32
    %c0_i32_1 = arith.constant 0 : i32
    return %c0_i32, %c0_i32_0 : i32, i32
  }
  func.func @transform_18(%arg0: i32) -> (i32, i32) {
    %c0_i32 = arith.constant 0 : i32
    %c0_i32_0 = arith.constant 0 : i32
    %c0_i32_1 = arith.constant 0 : i32
    return %c0_i32, %c0_i32_0 : i32, i32
  }
  func.func @transform_19(%arg0: i32) -> (i32, i32) {
    %c0_i32 = arith.constant 0 : i32
    %c0_i32_0 = arith.constant 0 : i32
    return %arg0, %c0_i32 : i32, i32
  }
}

</mosaic_0001>

<llo_original>
// kernel: reference_net_forward.1
$region0: #{reference_net_forward.1}
  #allocation0 [shape = 'u32[]', space=smem, size = 0x4, offset = 0x4, fixed_abs, tag = 'smem constant byte address 0x4 - core index']
  #allocation1 [shape = 'u32[72,128]{1,0:T(1,128)}', space=vmem, size = 0x9000, scoped, tag = 'internal scratch']
  %s0 = inlined_call_operand.vmem [shape: f32[28,2,28], index: 0, kind: input, shape index: {}]
  %s1 = inlined_call_operand.vmem [shape: f32[3,28,112], index: 1, kind: input, shape index: {}]
  %s2 = inlined_call_operand.hbm [shape: f32[3,28,112], index: 2, kind: input, shape index: {}]
  %s3 = inlined_call_operand.hbm [shape: f32[3,112,112], index: 3, kind: input, shape index: {}]
  %s4 = inlined_call_operand.hbm [shape: f32[3,112,112], index: 4, kind: input, shape index: {}]
  %s5 = inlined_call_operand.hbm [shape: f32[3,112,128], index: 5, kind: input, shape index: {}]
  %s6 = inlined_call_operand.hbm [shape: f32[3,112,128], index: 6, kind: input, shape index: {}]
  %s7 = inlined_call_operand.vmem [shape: f32[1,112], index: 7, kind: input, shape index: {}]
  %s8 = inlined_call_operand.vmem [shape: f32[1,112], index: 8, kind: input, shape index: {}]
  %s9 = inlined_call_operand.vmem [shape: f32[1,112], index: 9, kind: input, shape index: {}]
  %s10 = inlined_call_operand.vmem [shape: f32[1,112], index: 10, kind: input, shape index: {}]
  %s11 = inlined_call_operand.vmem [shape: f32[1,128], index: 11, kind: input, shape index: {}]
  %s12 = inlined_call_operand.vmem [shape: f32[1,128], index: 12, kind: input, shape index: {}]
  %s13 = inlined_call_operand.hbm [shape: f32[4,128,128], index: 13, kind: input, shape index: {}]
  %s14 = inlined_call_operand.vmem [shape: f32[1,128], index: 14, kind: input, shape index: {}]
  %s15 = inlined_call_operand.hbm [shape: f32[128,128], index: 15, kind: input, shape index: {}]
  %s16 = inlined_call_operand.vmem [shape: f32[1,128], index: 16, kind: input, shape index: {}]
  %s17 = inlined_call_operand.hbm [shape: f32[128,128], index: 17, kind: input, shape index: {}]
  %s18 = inlined_call_operand.vmem [shape: f32[1,128], index: 18, kind: input, shape index: {}]
  %s19 = inlined_call_operand.hbm [shape: f32[2,128], index: 19, kind: output, shape index: {}]
  %s20 = sld [smem:[#allocation0]]
  $region118: #{reference_net_forward.1} parent=0
    _
  %s22 = ssub.s32 1, %s20
  %s23 = scalar_select 0, %s22, %s20
  $region1: #{reference_net_forward.1} parent=0
    #allocation2 [shape = 'u8[49152]{0}', space=vmem, size = 0xc000, scoped, tag = 'input window, operand 2, single buffered']
    #allocation3 [shape = 's32[1]{0}', space=sflag, size = 0x4, scoped, tag = 'scoped memory for reference_net_forward.1']
    #allocation4 [shape = 's32[1]{0}', space=sflag, size = 0x4, scoped, tag = 'scoped memory for reference_net_forward.1']
    #allocation5 [shape = 'u8[172032]{0}', space=vmem, size = 0x2a000, scoped, tag = 'input window, operand 3, single buffered']
    #allocation6 [shape = 's32[1]{0}', space=sflag, size = 0x4, scoped, tag = 'scoped memory for reference_net_forward.1']
    #allocation7 [shape = 'u8[172032]{0}', space=vmem, size = 0x2a000, scoped, tag = 'input window, operand 4, single buffered']
    #allocation8 [shape = 'u8[172032]{0}', space=vmem, size = 0x2a000, scoped, tag = 'input window, operand 5, single buffered']
    #allocation9 [shape = 's32[1]{0}', space=sflag, size = 0x4, scoped, tag = 'scoped memory for reference_net_forward.1']
    #allocation10 [shape = 'u8[172032]{0}', space=vmem, size = 0x2a000, scoped, tag = 'input window, operand 6, single buffered']
    #allocation11 [shape = 'u8[262144]{0}', space=vmem, size = 0x40000, scoped, tag = 'input window, operand 13, single buffered']
    #allocation12 [shape = 's32[1]{0}', space=sflag, size = 0x4, scoped, tag = 'scoped memory for reference_net_forward.1']
    #allocation13 [shape = 'u8[65536]{0}', space=vmem, size = 0x10000, scoped, tag = 'input window, operand 15, single buffered']
    #allocation14 [shape = 'u8[65536]{0}', space=vmem, size = 0x10000, scoped, tag = 'input window, operand 17, single buffered']
    #allocation15 [shape = 's32[1]{0}', space=sflag, size = 0x4, scoped, tag = 'scoped memory for reference_net_forward.1']
    #allocation16 [shape = 'u8[1024]{0}', space=vmem, size = 0x400, scoped, tag = 'output window, operand 0, single buffered']
    %24 = vsyncpa [#allocation3], 0
    %25 = vsyncpa [#allocation6], 0
    %26 = vsyncpa [#allocation9], 0
    %27 = vsyncpa [#allocation12], 0
    %28 = vsyncpa [#allocation15], 0
    %29 = vsyncpa [#allocation4], 0
    // Predicated region
    $region2: #{reference_net_forward.1} parent=1 // pred_check
      _
    $region3: #{reference_net_forward.1} parent=1 // pred_check_branch
      %31 = sbr.rel (0) target = $region5
    $region4: #{reference_net_forward.1} parent=1 // pred_region
      _
    $region5: #{reference_net_forward.1} parent=1 // pred_fallthru
      _
    // Predicated region
    $region6: #{reference_net_forward.1} parent=1 // pred_check
      _
    $region7: #{reference_net_forward.1} parent=1 // pred_check_branch
      %33 = sbr.rel (0) target = $region9
    $region8: #{reference_net_forward.1} parent=1 // pred_region
      _
    $region9: #{reference_net_forward.1} parent=1 // pred_fallthru
      _
    // Predicated region
    $region10: #{reference_net_forward.1} parent=1 // pred_check
      _
    $region11: #{reference_net_forward.1} parent=1 // pred_check_branch
      %35 = sbr.rel (0) target = $region13
    $region12: #{reference_net_forward.1} parent=1 // pred_region
      %37 = vsyncadd [#allocation3], 0
      %s38 = sshll.u32 %s2, 4
      %s39 = int_to_ptr.hbm [resolvable:$true] %s38
      %s40 = sshll.u32 [#allocation2], 4
      %s41 = int_to_ptr.vmem [resolvable:$true] %s40
      %46 = dma.hbm_to_vmem [thread:$0]  %s39, 1536, %s41, [#allocation3], 128, 128, 8
    $region13: #{reference_net_forward.1} parent=1 // pred_fallthru
      _
    // Predicated region
    $region14: #{reference_net_forward.1} parent=1 // pred_check
      _
    $region15: #{reference_net_forward.1} parent=1 // pred_check_branch
      %48 = sbr.rel (0) target = $region17
    $region16: #{reference_net_forward.1} parent=1 // pred_region
      %50 = vsyncadd [#allocation6], 0
      %s51 = sshll.u32 %s3, 4
      %s52 = int_to_ptr.hbm [resolvable:$true] %s51
      %s53 = sshll.u32 [#allocation5], 4
      %s54 = int_to_ptr.vmem [resolvable:$true] %s53
      %59 = dma.hbm_to_vmem [thread:$0]  %s52, 5376, %s54, [#allocation6], 128, 128, 8
    $region17: #{reference_net_forward.1} parent=1 // pred_fallthru
      _
    // Predicated region
    $region18: #{reference_net_forward.1} parent=1 // pred_check
      _
    $region19: #{reference_net_forward.1} parent=1 // pred_check_branch
      %61 = sbr.rel (0) target = $region21
    $region20: #{reference_net_forward.1} parent=1 // pred_region
      %63 = vsyncadd [#allocation6], 0
      %s64 = sshll.u32 %s4, 4
      %s65 = int_to_ptr.hbm [resolvable:$true] %s64
      %s66 = sshll.u32 [#allocation7], 4
      %s67 = int_to_ptr.vmem [resolvable:$true] %s66
      %72 = dma.hbm_to_vmem [thread:$0]  %s65, 5376, %s67, [#allocation6], 128, 128, 8
    $region21: #{reference_net_forward.1} parent=1 // pred_fallthru
      _
    // Predicated region
    $region22: #{reference_net_forward.1} parent=1 // pred_check
      _
    $region23: #{reference_net_forward.1} parent=1 // pred_check_branch
      %74 = sbr.rel (0) target = $region25
    $region24: #{reference_net_forward.1} parent=1 // pred_region
      %76 = vsyncadd [#allocation9], 0
      %s77 = sshll.u32 %s5, 4
      %s78 = int_to_ptr.hbm [resolvable:$true] %s77
      %s79 = sshll.u32 [#allocation8], 4
      %s80 = int_to_ptr.vmem [resolvable:$true] %s79
      %85 = dma.hbm_to_vmem [thread:$0]  %s78, 5376, %s80, [#allocation9], 128, 128, 8
    $region25: #{reference_net_forward.1} parent=1 // pred_fallthru
      _
    // Predicated region
    $region26: #{reference_net_forward.1} parent=1 // pred_check
      _
    $region27: #{reference_net_forward.1} parent=1 // pred_check_branch
      %87 = sbr.rel (0) target = $region29
    $region28: #{reference_net_forward.1} parent=1 // pred_region
      %89 = vsyncadd [#allocation9], 0
      %s90 = sshll.u32 %s6, 4
      %s91 = int_to_ptr.hbm [resolvable:$true] %s90
      %s92 = sshll.u32 [#allocation10], 4
      %s93 = int_to_ptr.vmem [resolvable:$true] %s92
      %98 = dma.hbm_to_vmem [thread:$0]  %s91, 5376, %s93, [#allocation9], 128, 128, 8
    $region29: #{reference_net_forward.1} parent=1 // pred_fallthru
      _
    // Predicated region
    $region30: #{reference_net_forward.1} parent=1 // pred_check
      _
    $region31: #{reference_net_forward.1} parent=1 // pred_check_branch
      %100 = sbr.rel (0) target = $region33
    $region32: #{reference_net_forward.1} parent=1 // pred_region
      _
    $region33: #{reference_net_forward.1} parent=1 // pred_fallthru
      _
    // Predicated region
    $region34: #{reference_net_forward.1} parent=1 // pred_check
      _
    $region35: #{reference_net_forward.1} parent=1 // pred_check_branch
      %102 = sbr.rel (0) target = $region37
    $region36: #{reference_net_forward.1} parent=1 // pred_region
      _
    $region37: #{reference_net_forward.1} parent=1 // pred_fallthru
      _
    // Predicated region
    $region38: #{reference_net_forward.1} parent=1 // pred_check
      _
    $region39: #{reference_net_forward.1} parent=1 // pred_check_branch
      %104 = sbr.rel (0) target = $region41
    $region40: #{reference_net_forward.1} parent=1 // pred_region
      _
    $region41: #{reference_net_forward.1} parent=1 // pred_fallthru
      _
    // Predicated region
    $region42: #{reference_net_forward.1} parent=1 // pred_check
      _
    $region43: #{reference_net_forward.1} parent=1 // pred_check_branch
      %106 = sbr.rel (0) target = $region45
    $region44: #{reference_net_forward.1} parent=1 // pred_region
      _
    $region45: #{reference_net_forward.1} parent=1 // pred_fallthru
      _
    // Predicated region
    $region46: #{reference_net_forward.1} parent=1 // pred_check
      _
    $region47: #{reference_net_forward.1} parent=1 // pred_check_branch
      %108 = sbr.rel (0) target = $region49
    $region48: #{reference_net_forward.1} parent=1 // pred_region
      _
    $region49: #{reference_net_forward.1} parent=1 // pred_fallthru
      _
    // Predicated region
    $region50: #{reference_net_forward.1} parent=1 // pred_check
      _
    $region51: #{reference_net_forward.1} parent=1 // pred_check_branch
      %110 = sbr.rel (0) target = $region53
    $region52: #{reference_net_forward.1} parent=1 // pred_region
      _
    $region53: #{reference_net_forward.1} parent=1 // pred_fallthru
      _
    // Predicated region
    $region54: #{reference_net_forward.1} parent=1 // pred_check
      _
    $region55: #{reference_net_forward.1} parent=1 // pred_check_branch
      %112 = sbr.rel (0) target = $region57
    $region56: #{reference_net_forward.1} parent=1 // pred_region
      %114 = vsyncadd [#allocation12], 0
      %s115 = sshll.u32 %s13, 4
      %s116 = int_to_ptr.hbm [resolvable:$true] %s115
      %s117 = sshll.u32 [#allocation11], 4
      %s118 = int_to_ptr.vmem [resolvable:$true] %s117
      %123 = dma.hbm_to_vmem [thread:$0]  %s116, 8192, %s118, [#allocation12], 128, 128, 8
    $region57: #{reference_net_forward.1} parent=1 // pred_fallthru
      _
    // Predicated region
    $region58: #{reference_net_forward.1} parent=1 // pred_check
      _
    $region59: #{reference_net_forward.1} parent=1 // pred_check_branch
      %125 = sbr.rel (0) target = $region61
    $region60: #{reference_net_forward.1} parent=1 // pred_region
      _
    $region61: #{reference_net_forward.1} parent=1 // pred_fallthru
      _
    // Predicated region
    $region62: #{reference_net_forward.1} parent=1 // pred_check
      _
    $region63: #{reference_net_forward.1} parent=1 // pred_check_branch
      %127 = sbr.rel (0) target = $region65
    $region64: #{reference_net_forward.1} parent=1 // pred_region
      %129 = vsyncadd [#allocation12], 0
      %s130 = sshll.u32 %s15, 4
      %s131 = int_to_ptr.hbm [resolvable:$true] %s130
      %s132 = sshll.u32 [#allocation13], 4
      %s133 = int_to_ptr.vmem [resolvable:$true] %s132
      %138 = dma.hbm_to_vmem [thread:$0]  %s131, 2048, %s133, [#allocation12], 128, 128, 8
    $region65: #{reference_net_forward.1} parent=1 // pred_fallthru
      _
    // Predicated region
    $region66: #{reference_net_forward.1} parent=1 // pred_check
      _
    $region67: #{reference_net_forward.1} parent=1 // pred_check_branch
      %140 = sbr.rel (0) target = $region69
    $region68: #{reference_net_forward.1} parent=1 // pred_region
      _
    $region69: #{reference_net_forward.1} parent=1 // pred_fallthru
      _
    // Predicated region
    $region70: #{reference_net_forward.1} parent=1 // pred_check
      _
    $region71: #{reference_net_forward.1} parent=1 // pred_check_branch
      %142 = sbr.rel (0) target = $region73
    $region72: #{reference_net_forward.1} parent=1 // pred_region
      %144 = vsyncadd [#allocation15], 0
      %s145 = sshll.u32 %s17, 4
      %s146 = int_to_ptr.hbm [resolvable:$true] %s145
      %s147 = sshll.u32 [#allocation14], 4
      %s148 = int_to_ptr.vmem [resolvable:$true] %s147
      %153 = dma.hbm_to_vmem [thread:$0]  %s146, 2048, %s148, [#allocation15], 128, 128, 8
    $region73: #{reference_net_forward.1} parent=1 // pred_fallthru
      _
    // Predicated region
    $region74: #{reference_net_forward.1} parent=1 // pred_check
      _
    $region75: #{reference_net_forward.1} parent=1 // pred_check_branch
      %155 = sbr.rel (0) target = $region77
    $region76: #{reference_net_forward.1} parent=1 // pred_region
      _
    $region77: #{reference_net_forward.1} parent=1 // pred_fallthru
      _
    // Predicated region
    $region78: #{reference_net_forward.1} parent=1 // pred_check
      _
    $region79: #{reference_net_forward.1} parent=1 // pred_check_branch
      %157 = sbr.rel (0) target = $region81
    $region80: #{reference_net_forward.1} parent=1 // pred_region
      %159 = dma.done [#allocation3], 1536
    $region81: #{reference_net_forward.1} parent=1 // pred_fallthru
      _
    // Predicated region
    $region82: #{reference_net_forward.1} parent=1 // pred_check
      _
    $region83: #{reference_net_forward.1} parent=1 // pred_check_branch
      %161 = sbr.rel (0) target = $region85
    $region84: #{reference_net_forward.1} parent=1 // pred_region
      %163 = dma.done [#allocation6], 5376
    $region85: #{reference_net_forward.1} parent=1 // pred_fallthru
      _
    // Predicated region
    $region86: #{reference_net_forward.1} parent=1 // pred_check
      _
    $region87: #{reference_net_forward.1} parent=1 // pred_check_branch
      %165 = sbr.rel (0) target = $region89
    $region88: #{reference_net_forward.1} parent=1 // pred_region
      %167 = dma.done [#allocation6], 5376
    $region89: #{reference_net_forward.1} parent=1 // pred_fallthru
      _
    // Predicated region
    $region90: #{reference_net_forward.1} parent=1 // pred_check
      _
    $region91: #{reference_net_forward.1} parent=1 // pred_check_branch
      %169 = sbr.rel (0) target = $region93
    $region92: #{reference_net_forward.1} parent=1 // pred_region
      %171 = dma.done [#allocation9], 5376
    $region93: #{reference_net_forward.1} parent=1 // pred_fallthru
      _
    // Predicated region
    $region94: #{reference_net_forward.1} parent=1 // pred_check
      _
    $region95: #{reference_net_forward.1} parent=1 // pred_check_branch
      %173 = sbr.rel (0) target = $region97
    $region96: #{reference_net_forward.1} parent=1 // pred_region
      %175 = dma.done [#allocation9], 5376
    $region97: #{reference_net_forward.1} parent=1 // pred_fallthru
      _
    // Predicated region
    $region98: #{reference_net_forward.1} parent=1 // pred_check
      _
    $region99: #{reference_net_forward.1} parent=1 // pred_check_branch
      %177 = sbr.rel (0) target = $region101
    $region100: #{reference_net_forward.1} parent=1 // pred_region
      %179 = dma.done [#allocation12], 8192
    $region101: #{reference_net_forward.1} parent=1 // pred_fallthru
      _
    // Predicated region
    $region102: #{reference_net_forward.1} parent=1 // pred_check
      _
    $region103: #{reference_net_forward.1} parent=1 // pred_check_branch
      %181 = sbr.rel (0) target = $region105
    $region104: #{reference_net_forward.1} parent=1 // pred_region
      %183 = dma.done [#allocation12], 2048
    $region105: #{reference_net_forward.1} parent=1 // pred_fallthru
      _
    // Predicated region
    $region106: #{reference_net_forward.1} parent=1 // pred_check
      _
    $region107: #{reference_net_forward.1} parent=1 // pred_check_branch
      %185 = sbr.rel (0) target = $region109
    $region108: #{reference_net_forward.1} parent=1 // pred_region
      %187 = dma.done [#allocation15], 2048
    $region109: #{reference_net_forward.1} parent=1 // pred_fallthru
      _
    %v188 = vld [vmem:[%s0] sm:$0x3]
    %v189 = vld [vmem:[%s0 + $0x2] sm:$0x3]
    %v190 = vld [vmem:[%s0 + $0x4] sm:$0x3]
    %v191 = vld [vmem:[%s0 + $0x6] sm:$0x3]
    %v192 = vld [vmem:[%s0 + $0x8] sm:$0x3]
    %v193 = vld [vmem:[%s0 + $0xa] sm:$0x3]
    %v194 = vld [vmem:[%s0 + $0xc] sm:$0x3]
    %v195 = vld [vmem:[%s0 + $0xe] sm:$0x3]
    %v196 = vld [vmem:[%s0 + $0x10] sm:$0x3]
    %v197 = vld [vmem:[%s0 + $0x12] sm:$0x3]
    %v198 = vld [vmem:[%s0 + $0x14] sm:$0x3]
    %v199 = vld [vmem:[%s0 + $0x16] sm:$0x3]
    %v200 = vld [vmem:[%s0 + $0x18] sm:$0x3]
    %v201 = vld [vmem:[%s0 + $0x1a] sm:$0x3]
    %v202 = vld [vmem:[%s0 + $0x1c] sm:$0x3]
    %v203 = vld [vmem:[%s0 + $0x1e] sm:$0x3]
    %v204 = vld [vmem:[%s0 + $0x20] sm:$0x3]
    %v205 = vld [vmem:[%s0 + $0x22] sm:$0x3]
    %v206 = vld [vmem:[%s0 + $0x24] sm:$0x3]
    %v207 = vld [vmem:[%s0 + $0x26] sm:$0x3]
    %v208 = vld [vmem:[%s0 + $0x28] sm:$0x3]
    %v209 = vld [vmem:[%s0 + $0x2a] sm:$0x3]
    %v210 = vld [vmem:[%s0 + $0x2c] sm:$0x3]
    %v211 = vld [vmem:[%s0 + $0x2e] sm:$0x3]
    %v212 = vld [vmem:[%s0 + $0x30] sm:$0x3]
    %v213 = vld [vmem:[%s0 + $0x32] sm:$0x3]
    %v214 = vld [vmem:[%s0 + $0x34] sm:$0x3]
    %v215 = vld [vmem:[%s0 + $0x36] sm:$0x3]
    %v216 = vld [vmem:[%s1] sm:$0xff]
    %v217 = vld [vmem:[%s1 + $0x8] sm:$0xff]
    %v218 = vld [vmem:[%s1 + $0x10] sm:$0xff]
    %v219 = vld [vmem:[%s1 + $0x18] sm:$0xf]
    %247 = vst [vmem:[#allocation1] ss:$4 sm:$0xff] %v188
    %s248 = scalar_lea.vmem [#allocation1], 1
    %249 = vst [vmem:[%s248] ss:$4 sm:$0xff] %v189
    %s250 = scalar_lea.vmem [#allocation1], 2
    %251 = vst [vmem:[%s250] ss:$4 sm:$0xff] %v190
    %s252 = scalar_lea.vmem [#allocation1], 3
    %253 = vst [vmem:[%s252] ss:$4 sm:$0xff] %v191
    %s254 = scalar_lea.vmem [#allocation1], 32
    %255 = vst [vmem:[%s254] ss:$4 sm:$0xff] %v192
    %s256 = scalar_lea.vmem [#allocation1], 33
    %257 = vst [vmem:[%s256] ss:$4 sm:$0xff] %v193
    %s258 = scalar_lea.vmem [#allocation1], 34
    %259 = vst [vmem:[%s258] ss:$4 sm:$0xff] %v194
    %s260 = scalar_lea.vmem [#allocation1], 35
    %261 = vst [vmem:[%s260] ss:$4 sm:$0xff] %v195
    %v262 = vld.sshfl [vmem:[#allocation1] sm:$0xff pattern:$0x73625140]
    %v263 = vld.sshfl [vmem:[#allocation1 + $0x20] sm:$0xff pattern:$0x73625140]
    %264 = vst [vmem:[#allocation1] ss:$4 sm:$0xff] %v196
    %265 = vst [vmem:[%s248] ss:$4 sm:$0xff] %v197
    %266 = vst [vmem:[%s250] ss:$4 sm:$0xff] %v198
    %267 = vst [vmem:[%s252] ss:$4 sm:$0xff] %v199
    %268 = vst [vmem:[%s254] ss:$4 sm:$0xff] %v200
    %269 = vst [vmem:[%s256] ss:$4 sm:$0xff] %v201
    %270 = vst [vmem:[%s258] ss:$4 sm:$0xff] %v202
    %271 = vst [vmem:[%s260] ss:$4 sm:$0xff] %v203
    %v272 = vld.sshfl [vmem:[#allocation1] sm:$0xff pattern:$0x73625140]
    %v273 = vld.sshfl [vmem:[#allocation1 + $0x20] sm:$0xff pattern:$0x73625140]
    %274 = vst [vmem:[#allocation1] ss:$4 sm:$0xff] %v204
    %275 = vst [vmem:[%s248] ss:$4 sm:$0xff] %v205
    %276 = vst [vmem:[%s250] ss:$4 sm:$0xff] %v206
    %277 = vst [vmem:[%s252] ss:$4 sm:$0xff] %v207
    %278 = vst [vmem:[%s254] ss:$4 sm:$0xff] %v208
    %279 = vst [vmem:[%s256] ss:$4 sm:$0xff] %v209
    %280 = vst [vmem:[%s258] ss:$4 sm:$0xff] %v210
    %281 = vst [vmem:[%s260] ss:$4 sm:$0xff] %v211
    %v282 = vld.sshfl [vmem:[#allocation1] sm:$0xff pattern:$0x73625140]
    %v283 = vld.sshfl [vmem:[#allocation1 + $0x20] sm:$0xff pattern:$0x73625140]
    %284 = vst [vmem:[#allocation1] ss:$4 sm:$0xff] %v212
    %285 = vst [vmem:[%s248] ss:$4 sm:$0xff] %v213
    %286 = vst [vmem:[%s250] ss:$4 sm:$0xff] %v214
    %v287 = vld.sshfl [vmem:[#allocation1] sm:$0xff pattern:$0x73625140]
    %vm288 = vcmask 228352
    %v289 = vsel %vm288, %v262, 0
    %v291 = vsel %vm288, %v263, 0
    %v293 = vsel %vm288, %v272, 0
    %v295 = vsel %vm288, %v273, 0
    %v297 = vsel %vm288, %v282, 0
    %v299 = vsel %vm288, %v283, 0
    %v301 = vsel %vm288, %v287, 0
    %vm303 = vcmask 1043456
    %v305 = vsel %vm303, %v219, 0
    %307 = vmatpush.msra.mxu0 0.0
    %308 = vmatpush.msra.mxu0 0.0
    %309 = vmatpush.msra.mxu0 0.0
    %310 = vmatpush.msra.mxu0 0.0
    %311 = vmatpush.msra.mxu0 0.0
    %312 = vmatpush.msra.mxu0 0.0
    %313 = vmatpush.msra.mxu0 0.0
    %314 = vmatpush.msra.mxu0 0.0
    %315 = vmatpush.msra.mxu0 0.0
    %316 = vmatpush.msra.mxu0 0.0
    %317 = vmatpush.msra.mxu0 0.0
    %318 = vmatpush.msra.mxu0 0.0
    %319 = vmatpush.msra.mxu0 %v305
    %320 = vmatpush.msra.mxu0 %v218
    %321 = vmatpush.msra.mxu0 %v217
    %322 = vmatpush.msra.mxu0 %v216
    %323 = vmatmul.f32.gmra.mxu0 %v289
    %v324 = vpop.f32.mrf.mxu0
    %v325 = vadd.f32 0.0, %v324
    %326 = vmatmul.f32.gmra.mxu0 %v291
    %v327 = vpop.f32.mrf.mxu0
    %v328 = vadd.f32 0.0, %v327
    %329 = vmatmul.f32.gmra.mxu0 %v293
    %v330 = vpop.f32.mrf.mxu0
    %v331 = vadd.f32 0.0, %v330
    %332 = vmatmul.f32.gmra.mxu0 %v295
    %v333 = vpop.f32.mrf.mxu0
    %v334 = vadd.f32 0.0, %v333
    %335 = vmatmul.f32.gmra.mxu0 %v297
    %v336 = vpop.f32.mrf.mxu0
    %v337 = vadd.f32 0.0, %v336
    %338 = vmatmul.f32.gmra.mxu0 %v299
    %v339 = vpop.f32.mrf.mxu0
    %v340 = vadd.f32 0.0, %v339
    %341 = vmatmul.f32.gmra.mxu0 %v301
    %v342 = vpop.f32.mrf.mxu0
    %v343 = vadd.f32 0.0, %v342
    %344 = vdwg.mxu0
    %v352 = vrot.slane %v325, 2
    %v353 = vrot.slane %v325, 4
    %v354 = vrot.slane %v325, 6
    %v355 = vrot.slane %v328, 2
    %v356 = vrot.slane %v328, 4
    %v357 = vrot.slane %v328, 6
    %v358 = vrot.slane %v331, 2
    %v359 = vrot.slane %v331, 4
    %v360 = vrot.slane %v331, 6
    %v361 = vrot.slane %v334, 2
    %v362 = vrot.slane %v334, 4
    %v363 = vrot.slane %v334, 6
    %v364 = vrot.slane %v337, 2
    %v365 = vrot.slane %v337, 4
    %v366 = vrot.slane %v337, 6
    %v367 = vrot.slane %v340, 2
    %v368 = vrot.slane %v340, 4
    %v369 = vrot.slane %v340, 6
    %v370 = vrot.slane %v343, 2
    %v371 = vrot.slane %v343, 4
    %s392 = scalar_lea.vmem %s1, 32
    %v393 = vld [vmem:[%s392] sm:$0xff]
    %v394 = vld [vmem:[%s392 + $0x8] sm:$0xff]
    %v395 = vld [vmem:[%s392 + $0x10] sm:$0xff]
    %v396 = vld [vmem:[%s392 + $0x18] sm:$0xf]
    %398 = vst [vmem:[#allocation1] ss:$4 sm:$0xff] %v188
    %s399 = scalar_lea.vmem [#allocation1], 1
    %400 = vst [vmem:[%s399] ss:$4 sm:$0xff] %v189
    %s401 = scalar_lea.vmem [#allocation1], 2
    %402 = vst [vmem:[%s401] ss:$4 sm:$0xff] %v190
    %s403 = scalar_lea.vmem [#allocation1], 3
    %404 = vst [vmem:[%s403] ss:$4 sm:$0xff] %v191
    %s405 = scalar_lea.vmem [#allocation1], 32
    %406 = vst [vmem:[%s405] ss:$4 sm:$0xff] %v192
    %s407 = scalar_lea.vmem [#allocation1], 33
    %408 = vst [vmem:[%s407] ss:$4 sm:$0xff] %v193
    %s409 = scalar_lea.vmem [#allocation1], 34
    %410 = vst [vmem:[%s409] ss:$4 sm:$0xff] %v194
    %s411 = scalar_lea.vmem [#allocation1], 35
    %412 = vst [vmem:[%s411] ss:$4 sm:$0xff] %v195
    %v413 = vld.sshfl [vmem:[#allocation1] sm:$0xff pattern:$0x73625140]
    %v414 = vld.sshfl [vmem:[#allocation1 + $0x20] sm:$0xff pattern:$0x73625140]
    %415 = vst [vmem:[#allocation1] ss:$4 sm:$0xff] %v196
    %416 = vst [vmem:[%s399] ss:$4 sm:$0xff] %v197
    %417 = vst [vmem:[%s401] ss:$4 sm:$0xff] %v198
    %418 = vst [vmem:[%s403] ss:$4 sm:$0xff] %v199
    %419 = vst [vmem:[%s405] ss:$4 sm:$0xff] %v200
    %420 = vst [vmem:[%s407] ss:$4 sm:$0xff] %v201
    %421 = vst [vmem:[%s409] ss:$4 sm:$0xff] %v202
    %422 = vst [vmem:[%s411] ss:$4 sm:$0xff] %v203
    %v423 = vld.sshfl [vmem:[#allocation1] sm:$0xff pattern:$0x73625140]
    %v424 = vld.sshfl [vmem:[#allocation1 + $0x20] sm:$0xff pattern:$0x73625140]
    %425 = vst [vmem:[#allocation1] ss:$4 sm:$0xff] %v204
    %426 = vst [vmem:[%s399] ss:$4 sm:$0xff] %v205
    %427 = vst [vmem:[%s401] ss:$4 sm:$0xff] %v206
    %428 = vst [vmem:[%s403] ss:$4 sm:$0xff] %v207
    %429 = vst [vmem:[%s405] ss:$4 sm:$0xff] %v208
    %430 = vst [vmem:[%s407] ss:$4 sm:$0xff] %v209
    %431 = vst [vmem:[%s409] ss:$4 sm:$0xff] %v210
    %432 = vst [vmem:[%s411] ss:$4 sm:$0xff] %v211
    %v433 = vld.sshfl [vmem:[#allocation1] sm:$0xff pattern:$0x73625140]
    %v434 = vld.sshfl [vmem:[#allocation1 + $0x20] sm:$0xff pattern:$0x73625140]
    %435 = vst [vmem:[#allocation1] ss:$4 sm:$0xff] %v212
    %436 = vst [vmem:[%s399] ss:$4 sm:$0xff] %v213
    %437 = vst [vmem:[%s401] ss:$4 sm:$0xff] %v214
    %438 = vst [vmem:[%s403] ss:$4 sm:$0xff] %v215
    %v439 = vld.sshfl [vmem:[#allocation1] sm:$0xff pattern:$0x73625140]
    %v440 = vsel %vm288, %v413, 0
    %v442 = vsel %vm288, %v414, 0
    %v444 = vsel %vm288, %v423, 0
    %v446 = vsel %vm288, %v424, 0
    %v448 = vsel %vm288, %v433, 0
    %v450 = vsel %vm288, %v434, 0
    %v452 = vsel %vm288, %v439, 0
    %v455 = vsel %vm303, %v396, 0
    %457 = vmatpush.msra.mxu0 0.0
    %458 = vmatpush.msra.mxu0 0.0
    %459 = vmatpush.msra.mxu0 0.0
    %460 = vmatpush.msra.mxu0 0.0
    %461 = vmatpush.msra.mxu0 0.0
    %462 = vmatpush.msra.mxu0 0.0
    %463 = vmatpush.msra.mxu0 0.0
    %464 = vmatpush.msra.mxu0 0.0
    %465 = vmatpush.msra.mxu0 0.0
    %466 = vmatpush.msra.mxu0 0.0
    %467 = vmatpush.msra.mxu0 0.0
    %468 = vmatpush.msra.mxu0 0.0
    %469 = vmatpush.msra.mxu0 %v455
    %470 = vmatpush.msra.mxu0 %v395
    %471 = vmatpush.msra.mxu0 %v394
    %472 = vmatpush.msra.mxu0 %v393
    %473 = vmatmul.f32.gmra.mxu0 %v440
    %v474 = vpop.f32.mrf.mxu0
    %v475 = vadd.f32 0.0, %v474
    %476 = vmatmul.f32.gmra.mxu0 %v442
    %v477 = vpop.f32.mrf.mxu0
    %v478 = vadd.f32 0.0, %v477
    %479 = vmatmul.f32.gmra.mxu0 %v444
    %v480 = vpop.f32.mrf.mxu0
    %v481 = vadd.f32 0.0, %v480
    %482 = vmatmul.f32.gmra.mxu0 %v446
    %v483 = vpop.f32.mrf.mxu0
    %v484 = vadd.f32 0.0, %v483
    %485 = vmatmul.f32.gmra.mxu0 %v448
    %v486 = vpop.f32.mrf.mxu0
    %v487 = vadd.f32 0.0, %v486
    %488 = vmatmul.f32.gmra.mxu0 %v450
    %v489 = vpop.f32.mrf.mxu0
    %v490 = vadd.f32 0.0, %v489
    %491 = vmatmul.f32.gmra.mxu0 %v452
    %v492 = vpop.f32.mrf.mxu0
    %v493 = vadd.f32 0.0, %v492
    %494 = vdwg.mxu0
    %v502 = vrot.slane %v475, 2
    %v503 = vrot.slane %v475, 4
    %v504 = vrot.slane %v475, 6
    %v505 = vrot.slane %v478, 2
    %v506 = vrot.slane %v478, 4
    %v507 = vrot.slane %v478, 6
    %v508 = vrot.slane %v481, 2
    %v509 = vrot.slane %v481, 4
    %v510 = vrot.slane %v481, 6
    %v511 = vrot.slane %v484, 2
    %v512 = vrot.slane %v484, 4
    %v513 = vrot.slane %v484, 6
    %v514 = vrot.slane %v487, 2
    %v515 = vrot.slane %v487, 4
    %v516 = vrot.slane %v487, 6
    %v517 = vrot.slane %v490, 2
    %v518 = vrot.slane %v490, 4
    %v519 = vrot.slane %v490, 6
    %v520 = vrot.slane %v493, 2
    %v521 = vrot.slane %v493, 4
    %v522 = vrot.slane %v493, 6
    %s544 = scalar_lea.vmem %s1, 64
    %v545 = vld [vmem:[%s544] sm:$0xff]
    %v546 = vld [vmem:[%s544 + $0x8] sm:$0xff]
    %v547 = vld [vmem:[%s544 + $0x10] sm:$0xff]
    %v548 = vld [vmem:[%s544 + $0x18] sm:$0xf]
    %549 = vst [vmem:[#allocation1] ss:$4 sm:$0xff] %v189
    %s550 = scalar_lea.vmem [#allocation1], 1
    %551 = vst [vmem:[%s550] ss:$4 sm:$0xff] %v190
    %s552 = scalar_lea.vmem [#allocation1], 2
    %553 = vst [vmem:[%s552] ss:$4 sm:$0xff] %v191
    %s554 = scalar_lea.vmem [#allocation1], 3
    %555 = vst [vmem:[%s554] ss:$4 sm:$0xff] %v192
    %s556 = scalar_lea.vmem [#allocation1], 32
    %557 = vst [vmem:[%s556] ss:$4 sm:$0xff] %v193
    %s558 = scalar_lea.vmem [#allocation1], 33
    %559 = vst [vmem:[%s558] ss:$4 sm:$0xff] %v194
    %s560 = scalar_lea.vmem [#allocation1], 34
    %561 = vst [vmem:[%s560] ss:$4 sm:$0xff] %v195
    %s562 = scalar_lea.vmem [#allocation1], 35
    %563 = vst [vmem:[%s562] ss:$4 sm:$0xff] %v196
    %v564 = vld.sshfl [vmem:[#allocation1] sm:$0xff pattern:$0x73625140]
    %v565 = vld.sshfl [vmem:[#allocation1 + $0x20] sm:$0xff pattern:$0x73625140]
    %566 = vst [vmem:[#allocation1] ss:$4 sm:$0xff] %v197
    %567 = vst [vmem:[%s550] ss:$4 sm:$0xff] %v198
    %568 = vst [vmem:[%s552] ss:$4 sm:$0xff] %v199
    %569 = vst [vmem:[%s554] ss:$4 sm:$0xff] %v200
    %570 = vst [vmem:[%s556] ss:$4 sm:$0xff] %v201
    %571 = vst [vmem:[%s558] ss:$4 sm:$0xff] %v202
    %572 = vst [vmem:[%s560] ss:$4 sm:$0xff] %v203
    %573 = vst [vmem:[%s562] ss:$4 sm:$0xff] %v204
    %v574 = vld.sshfl [vmem:[#allocation1] sm:$0xff pattern:$0x73625140]
    %v575 = vld.sshfl [vmem:[#allocation1 + $0x20] sm:$0xff pattern:$0x73625140]
    %576 = vst [vmem:[#allocation1] ss:$4 sm:$0xff] %v205
    %577 = vst [vmem:[%s550] ss:$4 sm:$0xff] %v206
    %578 = vst [vmem:[%s552] ss:$4 sm:$0xff] %v207
    %579 = vst [vmem:[%s554] ss:$4 sm:$0xff] %v208
    %580 = vst [vmem:[%s556] ss:$4 sm:$0xff] %v209
    %581 = vst [vmem:[%s558] ss:$4 sm:$0xff] %v210
    %582 = vst [vmem:[%s560] ss:$4 sm:$0xff] %v211
    %583 = vst [vmem:[%s562] ss:$4 sm:$0xff] %v212
    %v584 = vld.sshfl [vmem:[#allocation1] sm:$0xff pattern:$0x73625140]
    %v585 = vld.sshfl [vmem:[#allocation1 + $0x20] sm:$0xff pattern:$0x73625140]
    %586 = vst [vmem:[#allocation1] ss:$4 sm:$0xff] %v213
    %587 = vst [vmem:[%s550] ss:$4 sm:$0xff] %v214
    %588 = vst [vmem:[%s552] ss:$4 sm:$0xff] %v215
    %v589 = vld.sshfl [vmem:[#allocation1] sm:$0xff pattern:$0x73625140]
    %v590 = vsel %vm288, %v564, 0
    %v592 = vsel %vm288, %v565, 0
    %v594 = vsel %vm288, %v574, 0
    %v596 = vsel %vm288, %v575, 0
    %v598 = vsel %vm288, %v584, 0
    %v600 = vsel %vm288, %v585, 0
    %v602 = vsel %vm288, %v589, 0
    %v605 = vsel %vm303, %v548, 0
    %607 = vmatpush.msra.mxu0 0.0
    %608 = vmatpush.msra.mxu0 0.0
    %609 = vmatpush.msra.mxu0 0.0
    %610 = vmatpush.msra.mxu0 0.0
    %611 = vmatpush.msra.mxu0 0.0
    %612 = vmatpush.msra.mxu0 0.0
    %613 = vmatpush.msra.mxu0 0.0
    %614 = vmatpush.msra.mxu0 0.0
    %615 = vmatpush.msra.mxu0 0.0
    %616 = vmatpush.msra.mxu0 0.0
    %617 = vmatpush.msra.mxu0 0.0
    %618 = vmatpush.msra.mxu0 0.0
    %619 = vmatpush.msra.mxu0 %v605
    %620 = vmatpush.msra.mxu0 %v547
    %621 = vmatpush.msra.mxu0 %v546
    %622 = vmatpush.msra.mxu0 %v545
    %623 = vmatmul.f32.gmra.mxu0 %v590
    %v624 = vpop.f32.mrf.mxu0
    %v625 = vadd.f32 0.0, %v624
    %626 = vmatmul.f32.gmra.mxu0 %v592
    %v627 = vpop.f32.mrf.mxu0
    %v628 = vadd.f32 0.0, %v627
    %629 = vmatmul.f32.gmra.mxu0 %v594
    %v630 = vpop.f32.mrf.mxu0
    %v631 = vadd.f32 0.0, %v630
    %632 = vmatmul.f32.gmra.mxu0 %v596
    %v633 = vpop.f32.mrf.mxu0
    %v634 = vadd.f32 0.0, %v633
    %635 = vmatmul.f32.gmra.mxu0 %v598
    %v636 = vpop.f32.mrf.mxu0
    %v637 = vadd.f32 0.0, %v636
    %638 = vmatmul.f32.gmra.mxu0 %v600
    %v639 = vpop.f32.mrf.mxu0
    %v640 = vadd.f32 0.0, %v639
    %641 = vmatmul.f32.gmra.mxu0 %v602
    %v642 = vpop.f32.mrf.mxu0
    %v643 = vadd.f32 0.0, %v642
    %644 = vdwg.mxu0
    %v652 = vrot.slane %v625, 2
    %v653 = vrot.slane %v625, 4
    %v654 = vrot.slane %v625, 6
    %v655 = vrot.slane %v628, 2
    %v656 = vrot.slane %v628, 4
    %v657 = vrot.slane %v628, 6
    %v658 = vrot.slane %v631, 2
    %v659 = vrot.slane %v631, 4
    %v660 = vrot.slane %v631, 6
    %v661 = vrot.slane %v634, 2
    %v662 = vrot.slane %v634, 4
    %v663 = vrot.slane %v634, 6
    %v664 = vrot.slane %v637, 2
    %v665 = vrot.slane %v637, 4
    %v666 = vrot.slane %v637, 6
    %v667 = vrot.slane %v640, 2
    %v668 = vrot.slane %v640, 4
    %v669 = vrot.slane %v640, 6
    %v670 = vrot.slane %v643, 2
    %v671 = vrot.slane %v643, 4
    %v692 = vadd.f32 %v475, 0.0
    %v693 = vadd.f32 %v325, %v502
    %v694 = vadd.f32 %v352, %v503
    %v695 = vadd.f32 %v353, %v504
    %v696 = vadd.f32 %v354, %v478
    %v697 = vadd.f32 %v328, %v505
    %v698 = vadd.f32 %v355, %v506
    %v699 = vadd.f32 %v356, %v507
    %v700 = vadd.f32 %v357, %v481
    %v701 = vadd.f32 %v331, %v508
    %v702 = vadd.f32 %v358, %v509
    %v703 = vadd.f32 %v359, %v510
    %v704 = vadd.f32 %v360, %v484
    %v705 = vadd.f32 %v334, %v511
    %v706 = vadd.f32 %v361, %v512
    %v707 = vadd.f32 %v362, %v513
    %v708 = vadd.f32 %v363, %v487
    %v709 = vadd.f32 %v337, %v514
    %v710 = vadd.f32 %v364, %v515
    %v711 = vadd.f32 %v365, %v516
    %v712 = vadd.f32 %v366, %v490
    %v713 = vadd.f32 %v340, %v517
    %v714 = vadd.f32 %v367, %v518
    %v715 = vadd.f32 %v368, %v519
    %v716 = vadd.f32 %v369, %v493
    %v717 = vadd.f32 %v343, %v520
    %v718 = vadd.f32 %v370, %v521
    %v719 = vadd.f32 %v371, %v522
    %v720 = vadd.f32 %v692, %v625
    %v721 = vadd.f32 %v693, %v652
    %v722 = vadd.f32 %v694, %v653
    %v723 = vadd.f32 %v695, %v654
    %v724 = vadd.f32 %v696, %v628
    %v725 = vadd.f32 %v697, %v655
    %v726 = vadd.f32 %v698, %v656
    %v727 = vadd.f32 %v699, %v657
    %v728 = vadd.f32 %v700, %v631
    %v729 = vadd.f32 %v701, %v658
    %v730 = vadd.f32 %v702, %v659
    %v731 = vadd.f32 %v703, %v660
    %v732 = vadd.f32 %v704, %v634
    %v733 = vadd.f32 %v705, %v661
    %v734 = vadd.f32 %v706, %v662
    %v735 = vadd.f32 %v707, %v663
    %v736 = vadd.f32 %v708, %v637
    %v737 = vadd.f32 %v709, %v664
    %v738 = vadd.f32 %v710, %v665
    %v739 = vadd.f32 %v711, %v666
    %v740 = vadd.f32 %v712, %v640
    %v741 = vadd.f32 %v713, %v667
    %v742 = vadd.f32 %v714, %v668
    %v743 = vadd.f32 %v715, %v669
    %v744 = vadd.f32 %v716, %v643
    %v745 = vadd.f32 %v717, %v670
    %v746 = vadd.f32 %v718, %v671
    %v747 = vadd.f32 %v719, 0.0
    %v748 = vld [vmem:[#allocation2] sm:$0xff]
    %v749 = vld [vmem:[#allocation2 + $0x8] sm:$0xff]
    %v750 = vld [vmem:[#allocation2 + $0x10] sm:$0xff]
    %v751 = vld [vmem:[#allocation2 + $0x18] sm:$0xf]
    %752 = vst [vmem:[#allocation1] ss:$4 sm:$0xff] %v188
    %s753 = scalar_lea.vmem [#allocation1], 1
    %754 = vst [vmem:[%s753] ss:$4 sm:$0xff] %v189
    %s755 = scalar_lea.vmem [#allocation1], 2
    %756 = vst [vmem:[%s755] ss:$4 sm:$0xff] %v190
    %s757 = scalar_lea.vmem [#allocation1], 3
    %758 = vst [vmem:[%s757] ss:$4 sm:$0xff] %v191
    %s759 = scalar_lea.vmem [#allocation1], 32
    %760 = vst [vmem:[%s759] ss:$4 sm:$0xff] %v192
    %s761 = scalar_lea.vmem [#allocation1], 33
    %762 = vst [vmem:[%s761] ss:$4 sm:$0xff] %v193
    %s763 = scalar_lea.vmem [#allocation1], 34
    %764 = vst [vmem:[%s763] ss:$4 sm:$0xff] %v194
    %s765 = scalar_lea.vmem [#allocation1], 35
    %766 = vst [vmem:[%s765] ss:$4 sm:$0xff] %v195
    %v767 = vld.sshfl [vmem:[#allocation1] sm:$0xff pattern:$0x73625140]
    %v768 = vld.sshfl [vmem:[#allocation1 + $0x20] sm:$0xff pattern:$0x73625140]
    %769 = vst [vmem:[#allocation1] ss:$4 sm:$0xff] %v196
    %770 = vst [vmem:[%s753] ss:$4 sm:$0xff] %v197
    %771 = vst [vmem:[%s755] ss:$4 sm:$0xff] %v198
    %772 = vst [vmem:[%s757] ss:$4 sm:$0xff] %v199
    %773 = vst [vmem:[%s759] ss:$4 sm:$0xff] %v200
    %774 = vst [vmem:[%s761] ss:$4 sm:$0xff] %v201
    %775 = vst [vmem:[%s763] ss:$4 sm:$0xff] %v202
    %776 = vst [vmem:[%s765] ss:$4 sm:$0xff] %v203
    %v777 = vld.sshfl [vmem:[#allocation1] sm:$0xff pattern:$0x73625140]
    %v778 = vld.sshfl [vmem:[#allocation1 + $0x20] sm:$0xff pattern:$0x73625140]
    %779 = vst [vmem:[#allocation1] ss:$4 sm:$0xff] %v204
    %780 = vst [vmem:[%s753] ss:$4 sm:$0xff] %v205
    %781 = vst [vmem:[%s755] ss:$4 sm:$0xff] %v206
    %782 = vst [vmem:[%s757] ss:$4 sm:$0xff] %v207
    %783 = vst [vmem:[%s759] ss:$4 sm:$0xff] %v208
    %784 = vst [vmem:[%s761] ss:$4 sm:$0xff] %v209
    %785 = vst [vmem:[%s763] ss:$4 sm:$0xff] %v210
    %786 = vst [vmem:[%s765] ss:$4 sm:$0xff] %v211
    %v787 = vld.sshfl [vmem:[#allocation1] sm:$0xff pattern:$0x73625140]
    %v788 = vld.sshfl [vmem:[#allocation1 + $0x20] sm:$0xff pattern:$0x73625140]
    %789 = vst [vmem:[#allocation1] ss:$4 sm:$0xff] %v212
    %790 = vst [vmem:[%s753] ss:$4 sm:$0xff] %v213
    %791 = vst [vmem:[%s755] ss:$4 sm:$0xff] %v214
    %v792 = vld.sshfl [vmem:[#allocation1] sm:$0xff pattern:$0x73625140]
    %v793 = vsel %vm288, %v767, 0
    %v795 = vsel %vm288, %v768, 0
    %v797 = vsel %vm288, %v777, 0
    %v799 = vsel %vm288, %v778, 0
    %v801 = vsel %vm288, %v787, 0
    %v803 = vsel %vm288, %v788, 0
    %v805 = vsel %vm288, %v792, 0
    %v808 = vsel %vm303, %v751, 0
    %810 = vmatpush.msra.mxu0 0.0
    %811 = vmatpush.msra.mxu0 0.0
    %812 = vmatpush.msra.mxu0 0.0
    %813 = vmatpush.msra.mxu0 0.0
    %814 = vmatpush.msra.mxu0 0.0
    %815 = vmatpush.msra.mxu0 0.0
    %816 = vmatpush.msra.mxu0 0.0
    %817 = vmatpush.msra.mxu0 0.0
    %818 = vmatpush.msra.mxu0 0.0
    %819 = vmatpush.msra.mxu0 0.0
    %820 = vmatpush.msra.mxu0 0.0
    %821 = vmatpush.msra.mxu0 0.0
    %822 = vmatpush.msra.mxu0 %v808
    %823 = vmatpush.msra.mxu0 %v750
    %824 = vmatpush.msra.mxu0 %v749
    %825 = vmatpush.msra.mxu0 %v748
    %826 = vmatmul.f32.gmra.mxu0 %v793
    %v827 = vpop.f32.mrf.mxu0
    %v828 = vadd.f32 0.0, %v827
    %829 = vmatmul.f32.gmra.mxu0 %v795
    %v830 = vpop.f32.mrf.mxu0
    %v831 = vadd.f32 0.0, %v830
    %832 = vmatmul.f32.gmra.mxu0 %v797
    %v833 = vpop.f32.mrf.mxu0
    %v834 = vadd.f32 0.0, %v833
    %835 = vmatmul.f32.gmra.mxu0 %v799
    %v836 = vpop.f32.mrf.mxu0
    %v837 = vadd.f32 0.0, %v836
    %838 = vmatmul.f32.gmra.mxu0 %v801
    %v839 = vpop.f32.mrf.mxu0
    %v840 = vadd.f32 0.0, %v839
    %841 = vmatmul.f32.gmra.mxu0 %v803
    %v842 = vpop.f32.mrf.mxu0
    %v843 = vadd.f32 0.0, %v842
    %844 = vmatmul.f32.gmra.mxu0 %v805
    %v845 = vpop.f32.mrf.mxu0
    %v846 = vadd.f32 0.0, %v845
    %847 = vdwg.mxu0
    %v855 = vrot.slane %v828, 2
    %v856 = vrot.slane %v828, 4
    %v857 = vrot.slane %v828, 6
    %v858 = vrot.slane %v831, 2
    %v859 = vrot.slane %v831, 4
    %v860 = vrot.slane %v831, 6
    %v861 = vrot.slane %v834, 2
    %v862 = vrot.slane %v834, 4
    %v863 = vrot.slane %v834, 6
    %v864 = vrot.slane %v837, 2
    %v865 = vrot.slane %v837, 4
    %v866 = vrot.slane %v837, 6
    %v867 = vrot.slane %v840, 2
    %v868 = vrot.slane %v840, 4
    %v869 = vrot.slane %v840, 6
    %v870 = vrot.slane %v843, 2
    %v871 = vrot.slane %v843, 4
    %v872 = vrot.slane %v843, 6
    %v873 = vrot.slane %v846, 2
    %v874 = vrot.slane %v846, 4
    %s895 = scalar_lea.vmem [#allocation2], 32
    %v896 = vld [vmem:[%s895] sm:$0xff]
    %v897 = vld [vmem:[%s895 + $0x8] sm:$0xff]
    %v898 = vld [vmem:[%s895 + $0x10] sm:$0xff]
    %v899 = vld [vmem:[%s895 + $0x18] sm:$0xf]
    %900 = vst [vmem:[#allocation1] ss:$4 sm:$0xff] %v188
    %s901 = scalar_lea.vmem [#allocation1], 1
    %902 = vst [vmem:[%s901] ss:$4 sm:$0xff] %v189
    %s903 = scalar_lea.vmem [#allocation1], 2
    %904 = vst [vmem:[%s903] ss:$4 sm:$0xff] %v190
    %s905 = scalar_lea.vmem [#allocation1], 3
    %906 = vst [vmem:[%s905] ss:$4 sm:$0xff] %v191
    %s907 = scalar_lea.vmem [#allocation1], 32
    %908 = vst [vmem:[%s907] ss:$4 sm:$0xff] %v192
    %s909 = scalar_lea.vmem [#allocation1], 33
    %910 = vst [vmem:[%s909] ss:$4 sm:$0xff] %v193
    %s911 = scalar_lea.vmem [#allocation1], 34
    %912 = vst [vmem:[%s911] ss:$4 sm:$0xff] %v194
    %s913 = scalar_lea.vmem [#allocation1], 35
    %914 = vst [vmem:[%s913] ss:$4 sm:$0xff] %v195
    %v915 = vld.sshfl [vmem:[#allocation1] sm:$0xff pattern:$0x73625140]
    %v916 = vld.sshfl [vmem:[#allocation1 + $0x20] sm:$0xff pattern:$0x73625140]
    %917 = vst [vmem:[#allocation1] ss:$4 sm:$0xff] %v196
    %918 = vst [vmem:[%s901] ss:$4 sm:$0xff] %v197
    %919 = vst [vmem:[%s903] ss:$4 sm:$0xff] %v198
    %920 = vst [vmem:[%s905] ss:$4 sm:$0xff] %v199
    %921 = vst [vmem:[%s907] ss:$4 sm:$0xff] %v200
    %922 = vst [vmem:[%s909] ss:$4 sm:$0xff] %v201
    %923 = vst [vmem:[%s911] ss:$4 sm:$0xff] %v202
    %924 = vst [vmem:[%s913] ss:$4 sm:$0xff] %v203
    %v925 = vld.sshfl [vmem:[#allocation1] sm:$0xff pattern:$0x73625140]
    %v926 = vld.sshfl [vmem:[#allocation1 + $0x20] sm:$0xff pattern:$0x73625140]
    %927 = vst [vmem:[#allocation1] ss:$4 sm:$0xff] %v204
    %928 = vst [vmem:[%s901] ss:$4 sm:$0xff] %v205
    %929 = vst [vmem:[%s903] ss:$4 sm:$0xff] %v206
    %930 = vst [vmem:[%s905] ss:$4 sm:$0xff] %v207
    %931 = vst [vmem:[%s907] ss:$4 sm:$0xff] %v208
    %932 = vst [vmem:[%s909] ss:$4 sm:$0xff] %v209
    %933 = vst [vmem:[%s911] ss:$4 sm:$0xff] %v210
    %934 = vst [vmem:[%s913] ss:$4 sm:$0xff] %v211
    %v935 = vld.sshfl [vmem:[#allocation1] sm:$0xff pattern:$0x73625140]
    %v936 = vld.sshfl [vmem:[#allocation1 + $0x20] sm:$0xff pattern:$0x73625140]
    %937 = vst [vmem:[#allocation1] ss:$4 sm:$0xff] %v212
    %938 = vst [vmem:[%s901] ss:$4 sm:$0xff] %v213
    %939 = vst [vmem:[%s903] ss:$4 sm:$0xff] %v214
    %940 = vst [vmem:[%s905] ss:$4 sm:$0xff] %v215
    %v941 = vld.sshfl [vmem:[#allocation1] sm:$0xff pattern:$0x73625140]
    %v942 = vsel %vm288, %v915, 0
    %v944 = vsel %vm288, %v916, 0
    %v946 = vsel %vm288, %v925, 0
    %v948 = vsel %vm288, %v926, 0
    %v950 = vsel %vm288, %v935, 0
    %v952 = vsel %vm288, %v936, 0
    %v954 = vsel %vm288, %v941, 0
    %v957 = vsel %vm303, %v899, 0
    %959 = vmatpush.msra.mxu0 0.0
    %960 = vmatpush.msra.mxu0 0.0
    %961 = vmatpush.msra.mxu0 0.0
    %962 = vmatpush.msra.mxu0 0.0
    %963 = vmatpush.msra.mxu0 0.0
    %964 = vmatpush.msra.mxu0 0.0
    %965 = vmatpush.msra.mxu0 0.0
    %966 = vmatpush.msra.mxu0 0.0
    %967 = vmatpush.msra.mxu0 0.0
    %968 = vmatpush.msra.mxu0 0.0
    %969 = vmatpush.msra.mxu0 0.0
    %970 = vmatpush.msra.mxu0 0.0
    %971 = vmatpush.msra.mxu0 %v957
    %972 = vmatpush.msra.mxu0 %v898
    %973 = vmatpush.msra.mxu0 %v897
    %974 = vmatpush.msra.mxu0 %v896
    %975 = vmatmul.f32.gmra.mxu0 %v942
    %v976 = vpop.f32.mrf.mxu0
    %v977 = vadd.f32 0.0, %v976
    %978 = vmatmul.f32.gmra.mxu0 %v944
    %v979 = vpop.f32.mrf.mxu0
    %v980 = vadd.f32 0.0, %v979
    %981 = vmatmul.f32.gmra.mxu0 %v946
    %v982 = vpop.f32.mrf.mxu0
    %v983 = vadd.f32 0.0, %v982
    %984 = vmatmul.f32.gmra.mxu0 %v948
    %v985 = vpop.f32.mrf.mxu0
    %v986 = vadd.f32 0.0, %v985
    %987 = vmatmul.f32.gmra.mxu0 %v950
    %v988 = vpop.f32.mrf.mxu0
    %v989 = vadd.f32 0.0, %v988
    %990 = vmatmul.f32.gmra.mxu0 %v952
    %v991 = vpop.f32.mrf.mxu0
    %v992 = vadd.f32 0.0, %v991
    %993 = vmatmul.f32.gmra.mxu0 %v954
    %v994 = vpop.f32.mrf.mxu0
    %v995 = vadd.f32 0.0, %v994
    %996 = vdwg.mxu0
    %v1004 = vrot.slane %v977, 2
    %v1005 = vrot.slane %v977, 4
    %v1006 = vrot.slane %v977, 6
    %v1007 = vrot.slane %v980, 2
    %v1008 = vrot.slane %v980, 4
    %v1009 = vrot.slane %v980, 6
    %v1010 = vrot.slane %v983, 2
    %v1011 = vrot.slane %v983, 4
    %v1012 = vrot.slane %v983, 6
    %v1013 = vrot.slane %v986, 2
    %v1014 = vrot.slane %v986, 4
    %v1015 = vrot.slane %v986, 6
    %v1016 = vrot.slane %v989, 2
    %v1017 = vrot.slane %v989, 4
    %v1018 = vrot.slane %v989, 6
    %v1019 = vrot.slane %v992, 2
    %v1020 = vrot.slane %v992, 4
    %v1021 = vrot.slane %v992, 6
    %v1022 = vrot.slane %v995, 2
    %v1023 = vrot.slane %v995, 4
    %v1024 = vrot.slane %v995, 6
    %s1046 = scalar_lea.vmem [#allocation2], 64
    %v1047 = vld [vmem:[%s1046] sm:$0xff]
    %v1048 = vld [vmem:[%s1046 + $0x8] sm:$0xff]
    %v1049 = vld [vmem:[%s1046 + $0x10] sm:$0xff]
    %v1050 = vld [vmem:[%s1046 + $0x18] sm:$0xf]
    %1051 = vst [vmem:[#allocation1] ss:$4 sm:$0xff] %v189
    %s1052 = scalar_lea.vmem [#allocation1], 1
    %1053 = vst [vmem:[%s1052] ss:$4 sm:$0xff] %v190
    %s1054 = scalar_lea.vmem [#allocation1], 2
    %1055 = vst [vmem:[%s1054] ss:$4 sm:$0xff] %v191
    %s1056 = scalar_lea.vmem [#allocation1], 3
    %1057 = vst [vmem:[%s1056] ss:$4 sm:$0xff] %v192
    %s1058 = scalar_lea.vmem [#allocation1], 32
    %1059 = vst [vmem:[%s1058] ss:$4 sm:$0xff] %v193
    %s1060 = scalar_lea.vmem [#allocation1], 33
    %1061 = vst [vmem:[%s1060] ss:$4 sm:$0xff] %v194
    %s1062 = scalar_lea.vmem [#allocation1], 34
    %1063 = vst [vmem:[%s1062] ss:$4 sm:$0xff] %v195
    %s1064 = scalar_lea.vmem [#allocation1], 35
    %1065 = vst [vmem:[%s1064] ss:$4 sm:$0xff] %v196
    %v1066 = vld.sshfl [vmem:[#allocation1] sm:$0xff pattern:$0x73625140]
    %v1067 = vld.sshfl [vmem:[#allocation1 + $0x20] sm:$0xff pattern:$0x73625140]
    %1068 = vst [vmem:[#allocation1] ss:$4 sm:$0xff] %v197
    %1069 = vst [vmem:[%s1052] ss:$4 sm:$0xff] %v198
    %1070 = vst [vmem:[%s1054] ss:$4 sm:$0xff] %v199
    %1071 = vst [vmem:[%s1056] ss:$4 sm:$0xff] %v200
    %1072 = vst [vmem:[%s1058] ss:$4 sm:$0xff] %v201
    %1073 = vst [vmem:[%s1060] ss:$4 sm:$0xff] %v202
    %1074 = vst [vmem:[%s1062] ss:$4 sm:$0xff] %v203
    %1075 = vst [vmem:[%s1064] ss:$4 sm:$0xff] %v204
    %v1076 = vld.sshfl [vmem:[#allocation1] sm:$0xff pattern:$0x73625140]
    %v1077 = vld.sshfl [vmem:[#allocation1 + $0x20] sm:$0xff pattern:$0x73625140]
    %1078 = vst [vmem:[#allocation1] ss:$4 sm:$0xff] %v205
    %1079 = vst [vmem:[%s1052] ss:$4 sm:$0xff] %v206
    %1080 = vst [vmem:[%s1054] ss:$4 sm:$0xff] %v207
    %1081 = vst [vmem:[%s1056] ss:$4 sm:$0xff] %v208
    %1082 = vst [vmem:[%s1058] ss:$4 sm:$0xff] %v209
    %1083 = vst [vmem:[%s1060] ss:$4 sm:$0xff] %v210
    %1084 = vst [vmem:[%s1062] ss:$4 sm:$0xff] %v211
    %1085 = vst [vmem:[%s1064] ss:$4 sm:$0xff] %v212
    %v1086 = vld.sshfl [vmem:[#allocation1] sm:$0xff pattern:$0x73625140]
    %v1087 = vld.sshfl [vmem:[#allocation1 + $0x20] sm:$0xff pattern:$0x73625140]
    %1088 = vst [vmem:[#allocation1] ss:$4 sm:$0xff] %v213
    %1089 = vst [vmem:[%s1052] ss:$4 sm:$0xff] %v214
    %1090 = vst [vmem:[%s1054] ss:$4 sm:$0xff] %v215
    %v1091 = vld.sshfl [vmem:[#allocation1] sm:$0xff pattern:$0x73625140]
    %v1092 = vsel %vm288, %v1066, 0
    %v1094 = vsel %vm288, %v1067, 0
    %v1096 = vsel %vm288, %v1076, 0
    %v1098 = vsel %vm288, %v1077, 0
    %v1100 = vsel %vm288, %v1086, 0
    %v1102 = vsel %vm288, %v1087, 0
    %v1104 = vsel %vm288, %v1091, 0
    %v1107 = vsel %vm303, %v1050, 0
    %1109 = vmatpush.msra.mxu0 0.0
    %1110 = vmatpush.msra.mxu0 0.0
    %1111 = vmatpush.msra.mxu0 0.0
    %1112 = vmatpush.msra.mxu0 0.0
    %1113 = vmatpush.msra.mxu0 0.0
    %1114 = vmatpush.msra.mxu0 0.0
    %1115 = vmatpush.msra.mxu0 0.0
    %1116 = vmatpush.msra.mxu0 0.0
    %1117 = vmatpush.msra.mxu0 0.0
    %1118 = vmatpush.msra.mxu0 0.0
    %1119 = vmatpush.msra.mxu0 0.0
    %1120 = vmatpush.msra.mxu0 0.0
    %1121 = vmatpush.msra.mxu0 %v1107
    %1122 = vmatpush.msra.mxu0 %v1049
    %1123 = vmatpush.msra.mxu0 %v1048
    %1124 = vmatpush.msra.mxu0 %v1047
    %1125 = vmatmul.f32.gmra.mxu0 %v1092
    %v1126 = vpop.f32.mrf.mxu0
    %v1127 = vadd.f32 0.0, %v1126
    %1128 = vmatmul.f32.gmra.mxu0 %v1094
    %v1129 = vpop.f32.mrf.mxu0
    %v1130 = vadd.f32 0.0, %v1129
    %1131 = vmatmul.f32.gmra.mxu0 %v1096
    %v1132 = vpop.f32.mrf.mxu0
    %v1133 = vadd.f32 0.0, %v1132
    %1134 = vmatmul.f32.gmra.mxu0 %v1098
    %v1135 = vpop.f32.mrf.mxu0
    %v1136 = vadd.f32 0.0, %v1135
    %1137 = vmatmul.f32.gmra.mxu0 %v1100
    %v1138 = vpop.f32.mrf.mxu0
    %v1139 = vadd.f32 0.0, %v1138
    %1140 = vmatmul.f32.gmra.mxu0 %v1102
    %v1141 = vpop.f32.mrf.mxu0
    %v1142 = vadd.f32 0.0, %v1141
    %1143 = vmatmul.f32.gmra.mxu0 %v1104
    %v1144 = vpop.f32.mrf.mxu0
    %v1145 = vadd.f32 0.0, %v1144
    %1146 = vdwg.mxu0
    %v1154 = vrot.slane %v1127, 2
    %v1155 = vrot.slane %v1127, 4
    %v1156 = vrot.slane %v1127, 6
    %v1157 = vrot.slane %v1130, 2
    %v1158 = vrot.slane %v1130, 4
    %v1159 = vrot.slane %v1130, 6
    %v1160 = vrot.slane %v1133, 2
    %v1161 = vrot.slane %v1133, 4
    %v1162 = vrot.slane %v1133, 6
    %v1163 = vrot.slane %v1136, 2
    %v1164 = vrot.slane %v1136, 4
    %v1165 = vrot.slane %v1136, 6
    %v1166 = vrot.slane %v1139, 2
    %v1167 = vrot.slane %v1139, 4
    %v1168 = vrot.slane %v1139, 6
    %v1169 = vrot.slane %v1142, 2
    %v1170 = vrot.slane %v1142, 4
    %v1171 = vrot.slane %v1142, 6
    %v1172 = vrot.slane %v1145, 2
    %v1173 = vrot.slane %v1145, 4
    %v1194 = vadd.f32 %v977, 0.0
    %v1195 = vadd.f32 %v828, %v1004
    %v1196 = vadd.f32 %v855, %v1005
    %v1197 = vadd.f32 %v856, %v1006
    %v1198 = vadd.f32 %v857, %v980
    %v1199 = vadd.f32 %v831, %v1007
    %v1200 = vadd.f32 %v858, %v1008
    %v1201 = vadd.f32 %v859, %v1009
    %v1202 = vadd.f32 %v860, %v983
    %v1203 = vadd.f32 %v834, %v1010
    %v1204 = vadd.f32 %v861, %v1011
    %v1205 = vadd.f32 %v862, %v1012
    %v1206 = vadd.f32 %v863, %v986
    %v1207 = vadd.f32 %v837, %v1013
    %v1208 = vadd.f32 %v864, %v1014
    %v1209 = vadd.f32 %v865, %v1015
    %v1210 = vadd.f32 %v866, %v989
    %v1211 = vadd.f32 %v840, %v1016
    %v1212 = vadd.f32 %v867, %v1017
    %v1213 = vadd.f32 %v868, %v1018
    %v1214 = vadd.f32 %v869, %v992
    %v1215 = vadd.f32 %v843, %v1019
    %v1216 = vadd.f32 %v870, %v1020
    %v1217 = vadd.f32 %v871, %v1021
    %v1218 = vadd.f32 %v872, %v995
    %v1219 = vadd.f32 %v846, %v1022
    %v1220 = vadd.f32 %v873, %v1023
    %v1221 = vadd.f32 %v874, %v1024
    %v1222 = vadd.f32 %v1194, %v1127
    %v1223 = vadd.f32 %v1195, %v1154
    %v1224 = vadd.f32 %v1196, %v1155
    %v1225 = vadd.f32 %v1197, %v1156
    %v1226 = vadd.f32 %v1198, %v1130
    %v1227 = vadd.f32 %v1199, %v1157
    %v1228 = vadd.f32 %v1200, %v1158
    %v1229 = vadd.f32 %v1201, %v1159
    %v1230 = vadd.f32 %v1202, %v1133
    %v1231 = vadd.f32 %v1203, %v1160
    %v1232 = vadd.f32 %v1204, %v1161
    %v1233 = vadd.f32 %v1205, %v1162
    %v1234 = vadd.f32 %v1206, %v1136
    %v1235 = vadd.f32 %v1207, %v1163
    %v1236 = vadd.f32 %v1208, %v1164
    %v1237 = vadd.f32 %v1209, %v1165
    %v1238 = vadd.f32 %v1210, %v1139
    %v1239 = vadd.f32 %v1211, %v1166
    %v1240 = vadd.f32 %v1212, %v1167
    %v1241 = vadd.f32 %v1213, %v1168
    %v1242 = vadd.f32 %v1214, %v1142
    %v1243 = vadd.f32 %v1215, %v1169
    %v1244 = vadd.f32 %v1216, %v1170
    %v1245 = vadd.f32 %v1217, %v1171
    %v1246 = vadd.f32 %v1218, %v1145
    %v1247 = vadd.f32 %v1219, %v1172
    %v1248 = vadd.f32 %v1220, %v1173
    %v1249 = vadd.f32 %v1221, 0.0
    %v1250 = vmax.f32 %v720, %v1222
    %v1251 = vmax.f32 %v721, %v1223
    %v1252 = vmax.f32 %v722, %v1224
    %v1253 = vmax.f32 %v723, %v1225
    %v1254 = vmax.f32 %v724, %v1226
    %v1255 = vmax.f32 %v725, %v1227
    %v1256 = vmax.f32 %v726, %v1228
    %v1257 = vmax.f32 %v727, %v1229
    %v1258 = vmax.f32 %v728, %v1230
    %v1259 = vmax.f32 %v729, %v1231
    %v1260 = vmax.f32 %v730, %v1232
    %v1261 = vmax.f32 %v731, %v1233
    %v1262 = vmax.f32 %v732, %v1234
    %v1263 = vmax.f32 %v733, %v1235
    %v1264 = vmax.f32 %v734, %v1236
    %v1265 = vmax.f32 %v735, %v1237
    %v1266 = vmax.f32 %v736, %v1238
    %v1267 = vmax.f32 %v737, %v1239
    %v1268 = vmax.f32 %v738, %v1240
    %v1269 = vmax.f32 %v739, %v1241
    %v1270 = vmax.f32 %v740, %v1242
    %v1271 = vmax.f32 %v741, %v1243
    %v1272 = vmax.f32 %v742, %v1244
    %v1273 = vmax.f32 %v743, %v1245
    %v1274 = vmax.f32 %v744, %v1246
    %v1275 = vmax.f32 %v745, %v1247
    %v1276 = vmax.f32 %v746, %v1248
    %v1277 = vmax.f32 %v747, %v1249
    %v1278 = vmax.f32 %v1250, %v1251
    %v1279 = vmax.f32 %v1252, %v1253
    %v1280 = vmax.f32 %v1254, %v1255
    %v1281 = vmax.f32 %v1256, %v1257
    %v1282 = vmax.f32 %v1258, %v1259
    %v1283 = vmax.f32 %v1260, %v1261
    %v1284 = vmax.f32 %v1262, %v1263
    %v1285 = vmax.f32 %v1264, %v1265
    %v1286 = vmax.f32 %v1266, %v1267
    %v1287 = vmax.f32 %v1268, %v1269
    %v1288 = vmax.f32 %v1270, %v1271
    %v1289 = vmax.f32 %v1272, %v1273
    %v1290 = vmax.f32 %v1274, %v1275
    %v1291 = vmax.f32 %v1276, %v1277
    %v1292 = vld [vmem:[%s7] sm:$0x1]
    %v1294 = vperm.slane %v1292, 0
    %v1296 = vmul.f32 %v1278, %v1294
    %v1297 = vmul.f32 %v1279, %v1294
    %v1298 = vmul.f32 %v1280, %v1294
    %v1299 = vmul.f32 %v1281, %v1294
    %v1300 = vmul.f32 %v1282, %v1294
    %v1301 = vmul.f32 %v1283, %v1294
    %v1302 = vmul.f32 %v1284, %v1294
    %v1303 = vmul.f32 %v1285, %v1294
    %v1304 = vmul.f32 %v1286, %v1294
    %v1305 = vmul.f32 %v1287, %v1294
    %v1306 = vmul.f32 %v1288, %v1294
    %v1307 = vmul.f32 %v1289, %v1294
    %v1308 = vmul.f32 %v1290, %v1294
    %v1309 = vmul.f32 %v1291, %v1294
    %v1310 = vld [vmem:[%s8] sm:$0x1]
    %v1312 = vperm.slane %v1310, 0
    %v1314 = vadd.f32 %v1296, %v1312
    %v1315 = vadd.f32 %v1297, %v1312
    %v1316 = vadd.f32 %v1298, %v1312
    %v1317 = vadd.f32 %v1299, %v1312
    %v1318 = vadd.f32 %v1300, %v1312
    %v1319 = vadd.f32 %v1301, %v1312
    %v1320 = vadd.f32 %v1302, %v1312
    %v1321 = vadd.f32 %v1303, %v1312
    %v1322 = vadd.f32 %v1304, %v1312
    %v1323 = vadd.f32 %v1305, %v1312
    %v1324 = vadd.f32 %v1306, %v1312
    %v1325 = vadd.f32 %v1307, %v1312
    %v1326 = vadd.f32 %v1308, %v1312
    %v1327 = vadd.f32 %v1309, %v1312
    %v1328 = vmax.f32 %v1314, 0.0
    %v1329 = vmax.f32 %v1315, 0.0
    %v1330 = vmax.f32 %v1316, 0.0
    %v1331 = vmax.f32 %v1317, 0.0
    %v1332 = vmax.f32 %v1318, 0.0
    %v1333 = vmax.f32 %v1319, 0.0
    %v1334 = vmax.f32 %v1320, 0.0
    %v1335 = vmax.f32 %v1321, 0.0
    %v1336 = vmax.f32 %v1322, 0.0
    %v1337 = vmax.f32 %v1323, 0.0
    %v1338 = vmax.f32 %v1324, 0.0
    %v1339 = vmax.f32 %v1325, 0.0
    %v1340 = vmax.f32 %v1326, 0.0
    %v1341 = vmax.f32 %v1327, 0.0
    %v1342 = vld [vmem:[#allocation5] sm:$0xff]
    %v1343 = vld [vmem:[#allocation5 + $0x8] sm:$0xff]
    %v1344 = vld [vmem:[#allocation5 + $0x10] sm:$0xff]
    %v1345 = vld [vmem:[#allocation5 + $0x18] sm:$0xff]
    %v1346 = vld [vmem:[#allocation5 + $0x20] sm:$0xff]
    %v1347 = vld [vmem:[#allocation5 + $0x28] sm:$0xff]
    %v1348 = vld [vmem:[#allocation5 + $0x30] sm:$0xff]
    %v1349 = vld [vmem:[#allocation5 + $0x38] sm:$0xff]
    %v1350 = vld [vmem:[#allocation5 + $0x40] sm:$0xff]
    %v1351 = vld [vmem:[#allocation5 + $0x48] sm:$0xff]
    %v1352 = vld [vmem:[#allocation5 + $0x50] sm:$0xff]
    %v1353 = vld [vmem:[#allocation5 + $0x58] sm:$0xff]
    %v1354 = vld [vmem:[#allocation5 + $0x60] sm:$0xff]
    %v1355 = vld [vmem:[#allocation5 + $0x68] sm:$0xff]
    %1369 = vst [vmem:[#allocation1] ss:$4 sm:$0xff] %v1328
    %s1370 = scalar_lea.vmem [#allocation1], 1
    %1371 = vst [vmem:[%s1370] ss:$4 sm:$0xff] %v1329
    %s1372 = scalar_lea.vmem [#allocation1], 2
    %1373 = vst [vmem:[%s1372] ss:$4 sm:$0xff] %v1330
    %s1374 = scalar_lea.vmem [#allocation1], 3
    %1375 = vst [vmem:[%s1374] ss:$4 sm:$0xff] %v1331
    %s1376 = scalar_lea.vmem [#allocation1], 32
    %1377 = vst [vmem:[%s1376] ss:$4 sm:$0xff] %v1332
    %s1378 = scalar_lea.vmem [#allocation1], 33
    %1379 = vst [vmem:[%s1378] ss:$4 sm:$0xff] %v1333
    %s1380 = scalar_lea.vmem [#allocation1], 34
    %1381 = vst [vmem:[%s1380] ss:$4 sm:$0xff] %v1334
    %s1382 = scalar_lea.vmem [#allocation1], 35
    %1383 = vst [vmem:[%s1382] ss:$4 sm:$0xff] %v1335
    %v1384 = vld.sshfl [vmem:[#allocation1] sm:$0xff pattern:$0x73625140]
    %v1385 = vld.sshfl [vmem:[#allocation1 + $0x20] sm:$0xff pattern:$0x73625140]
    %1386 = vst [vmem:[#allocation1] ss:$4 sm:$0xff] %v1336
    %1387 = vst [vmem:[%s1370] ss:$4 sm:$0xff] %v1337
    %1388 = vst [vmem:[%s1372] ss:$4 sm:$0xff] %v1338
    %1389 = vst [vmem:[%s1374] ss:$4 sm:$0xff] %v1339
    %1390 = vst [vmem:[%s1376] ss:$4 sm:$0xff] %v1340
    %v1391 = vld.sshfl [vmem:[#allocation1] sm:$0xff pattern:$0x73625140]
    %v1392 = vld.sshfl [vmem:[#allocation1 + $0x20] sm:$0xff pattern:$0x73625140]
    %vm1393 = vcmask 916480
    %v1394 = vsel %vm1393, %v1384, 0
    %v1396 = vsel %vm1393, %v1385, 0
    %v1398 = vsel %vm1393, %v1391, 0
    %v1400 = vsel %vm1393, %v1392, 0
    %1402 = vmatpush.msra.mxu0 0.0
    %1403 = vmatpush.msra.mxu0 0.0
    %1404 = vmatpush.msra.mxu0 %v1355
    %1405 = vmatpush.msra.mxu0 %v1354
    %1406 = vmatpush.msra.mxu0 %v1353
    %1407 = vmatpush.msra.mxu0 %v1352
    %1408 = vmatpush.msra.mxu0 %v1351
    %1409 = vmatpush.msra.mxu0 %v1350
    %1410 = vmatpush.msra.mxu0 %v1349
    %1411 = vmatpush.msra.mxu0 %v1348
    %1412 = vmatpush.msra.mxu0 %v1347
    %1413 = vmatpush.msra.mxu0 %v1346
    %1414 = vmatpush.msra.mxu0 %v1345
    %1415 = vmatpush.msra.mxu0 %v1344
    %1416 = vmatpush.msra.mxu0 %v1343
    %1417 = vmatpush.msra.mxu0 %v1342
    %1418 = vmatmul.f32.gmra.mxu0 %v1394
    %v1419 = vpop.f32.mrf.mxu0
    %v1420 = vadd.f32 0.0, %v1419
    %1421 = vmatmul.f32.gmra.mxu0 %v1396
    %v1422 = vpop.f32.mrf.mxu0
    %v1423 = vadd.f32 0.0, %v1422
    %1424 = vmatmul.f32.gmra.mxu0 %v1398
    %v1425 = vpop.f32.mrf.mxu0
    %v1426 = vadd.f32 0.0, %v1425
    %1427 = vmatmul.f32.gmra.mxu0 %v1400
    %v1428 = vpop.f32.mrf.mxu0
    %v1429 = vadd.f32 0.0, %v1428
    %1430 = vdwg.mxu0
    %v1434 = vrot.slane %v1420, 2
    %v1435 = vrot.slane %v1420, 4
    %v1436 = vrot.slane %v1420, 6
    %v1437 = vrot.slane %v1423, 2
    %v1438 = vrot.slane %v1423, 4
    %v1439 = vrot.slane %v1423, 6
    %v1440 = vrot.slane %v1426, 2
    %v1441 = vrot.slane %v1426, 4
    %v1442 = vrot.slane %v1426, 6
    %s1452 = scalar_lea.vmem [#allocation5], 112
    %v1453 = vld [vmem:[%s1452] sm:$0xff]
    %v1454 = vld [vmem:[%s1452 + $0x8] sm:$0xff]
    %v1455 = vld [vmem:[%s1452 + $0x10] sm:$0xff]
    %v1456 = vld [vmem:[%s1452 + $0x18] sm:$0xff]
    %v1457 = vld [vmem:[%s1452 + $0x20] sm:$0xff]
    %v1458 = vld [vmem:[%s1452 + $0x28] sm:$0xff]
    %v1459 = vld [vmem:[%s1452 + $0x30] sm:$0xff]
    %v1460 = vld [vmem:[%s1452 + $0x38] sm:$0xff]
    %v1461 = vld [vmem:[%s1452 + $0x40] sm:$0xff]
    %v1462 = vld [vmem:[%s1452 + $0x48] sm:$0xff]
    %v1463 = vld [vmem:[%s1452 + $0x50] sm:$0xff]
    %v1464 = vld [vmem:[%s1452 + $0x58] sm:$0xff]
    %v1465 = vld [vmem:[%s1452 + $0x60] sm:$0xff]
    %v1466 = vld [vmem:[%s1452 + $0x68] sm:$0xff]
    %1468 = vst [vmem:[#allocation1] ss:$4 sm:$0xff] %v1328
    %s1469 = scalar_lea.vmem [#allocation1], 1
    %1470 = vst [vmem:[%s1469] ss:$4 sm:$0xff] %v1329
    %s1471 = scalar_lea.vmem [#allocation1], 2
    %1472 = vst [vmem:[%s1471] ss:$4 sm:$0xff] %v1330
    %s1473 = scalar_lea.vmem [#allocation1], 3
    %1474 = vst [vmem:[%s1473] ss:$4 sm:$0xff] %v1331
    %s1475 = scalar_lea.vmem [#allocation1], 32
    %1476 = vst [vmem:[%s1475] ss:$4 sm:$0xff] %v1332
    %s1477 = scalar_lea.vmem [#allocation1], 33
    %1478 = vst [vmem:[%s1477] ss:$4 sm:$0xff] %v1333
    %s1479 = scalar_lea.vmem [#allocation1], 34
    %1480 = vst [vmem:[%s1479] ss:$4 sm:$0xff] %v1334
    %s1481 = scalar_lea.vmem [#allocation1], 35
    %1482 = vst [vmem:[%s1481] ss:$4 sm:$0xff] %v1335
    %v1483 = vld.sshfl [vmem:[#allocation1] sm:$0xff pattern:$0x73625140]
    %v1484 = vld.sshfl [vmem:[#allocation1 + $0x20] sm:$0xff pattern:$0x73625140]
    %1485 = vst [vmem:[#allocation1] ss:$4 sm:$0xff] %v1336
    %1486 = vst [vmem:[%s1469] ss:$4 sm:$0xff] %v1337
    %1487 = vst [vmem:[%s1471] ss:$4 sm:$0xff] %v1338
    %1488 = vst [vmem:[%s1473] ss:$4 sm:$0xff] %v1339
    %1489 = vst [vmem:[%s1475] ss:$4 sm:$0xff] %v1340
    %1490 = vst [vmem:[%s1477] ss:$4 sm:$0xff] %v1341
    %v1491 = vld.sshfl [vmem:[#allocation1] sm:$0xff pattern:$0x73625140]
    %v1492 = vld.sshfl [vmem:[#allocation1 + $0x20] sm:$0xff pattern:$0x73625140]
    %v1493 = vsel %vm1393, %v1483, 0
    %v1495 = vsel %vm1393, %v1484, 0
    %v1497 = vsel %vm1393, %v1491, 0
    %v1499 = vsel %vm1393, %v1492, 0
    %1501 = vmatpush.msra.mxu0 0.0
    %1502 = vmatpush.msra.mxu0 0.0
    %1503 = vmatpush.msra.mxu0 %v1466
    %1504 = vmatpush.msra.mxu0 %v1465
    %1505 = vmatpush.msra.mxu0 %v1464
    %1506 = vmatpush.msra.mxu0 %v1463
    %1507 = vmatpush.msra.mxu0 %v1462
    %1508 = vmatpush.msra.mxu0 %v1461
    %1509 = vmatpush.msra.mxu0 %v1460
    %1510 = vmatpush.msra.mxu0 %v1459
    %1511 = vmatpush.msra.mxu0 %v1458
    %1512 = vmatpush.msra.mxu0 %v1457
    %1513 = vmatpush.msra.mxu0 %v1456
    %1514 = vmatpush.msra.mxu0 %v1455
    %1515 = vmatpush.msra.mxu0 %v1454
    %1516 = vmatpush.msra.mxu0 %v1453
    %1517 = vmatmul.f32.gmra.mxu0 %v1493
    %v1518 = vpop.f32.mrf.mxu0
    %v1519 = vadd.f32 0.0, %v1518
    %1520 = vmatmul.f32.gmra.mxu0 %v1495
    %v1521 = vpop.f32.mrf.mxu0
    %v1522 = vadd.f32 0.0, %v1521
    %1523 = vmatmul.f32.gmra.mxu0 %v1497
    %v1524 = vpop.f32.mrf.mxu0
    %v1525 = vadd.f32 0.0, %v1524
    %1526 = vmatmul.f32.gmra.mxu0 %v1499
    %v1527 = vpop.f32.mrf.mxu0
    %v1528 = vadd.f32 0.0, %v1527
    %1529 = vdwg.mxu0
    %v1534 = vrot.slane %v1519, 2
    %v1535 = vrot.slane %v1519, 4
    %v1536 = vrot.slane %v1519, 6
    %v1537 = vrot.slane %v1522, 2
    %v1538 = vrot.slane %v1522, 4
    %v1539 = vrot.slane %v1522, 6
    %v1540 = vrot.slane %v1525, 2
    %v1541 = vrot.slane %v1525, 4
    %v1542 = vrot.slane %v1525, 6
    %v1543 = vrot.slane %v1528, 2
    %s1554 = scalar_lea.vmem [#allocation5], 224
    %v1555 = vld [vmem:[%s1554] sm:$0xff]
    %v1556 = vld [vmem:[%s1554 + $0x8] sm:$0xff]
    %v1557 = vld [vmem:[%s1554 + $0x10] sm:$0xff]
    %v1558 = vld [vmem:[%s1554 + $0x18] sm:$0xff]
    %v1559 = vld [vmem:[%s1554 + $0x20] sm:$0xff]
    %v1560 = vld [vmem:[%s1554 + $0x28] sm:$0xff]
    %v1561 = vld [vmem:[%s1554 + $0x30] sm:$0xff]
    %v1562 = vld [vmem:[%s1554 + $0x38] sm:$0xff]
    %v1563 = vld [vmem:[%s1554 + $0x40] sm:$0xff]
    %v1564 = vld [vmem:[%s1554 + $0x48] sm:$0xff]
    %v1565 = vld [vmem:[%s1554 + $0x50] sm:$0xff]
    %v1566 = vld [vmem:[%s1554 + $0x58] sm:$0xff]
    %v1567 = vld [vmem:[%s1554 + $0x60] sm:$0xff]
    %v1568 = vld [vmem:[%s1554 + $0x68] sm:$0xff]
    %1569 = vst [vmem:[#allocation1] ss:$4 sm:$0xff] %v1329
    %s1570 = scalar_lea.vmem [#allocation1], 1
    %1571 = vst [vmem:[%s1570] ss:$4 sm:$0xff] %v1330
    %s1572 = scalar_lea.vmem [#allocation1], 2
    %1573 = vst [vmem:[%s1572] ss:$4 sm:$0xff] %v1331
    %s1574 = scalar_lea.vmem [#allocation1], 3
    %1575 = vst [vmem:[%s1574] ss:$4 sm:$0xff] %v1332
    %s1576 = scalar_lea.vmem [#allocation1], 32
    %1577 = vst [vmem:[%s1576] ss:$4 sm:$0xff] %v1333
    %s1578 = scalar_lea.vmem [#allocation1], 33
    %1579 = vst [vmem:[%s1578] ss:$4 sm:$0xff] %v1334
    %s1580 = scalar_lea.vmem [#allocation1], 34
    %1581 = vst [vmem:[%s1580] ss:$4 sm:$0xff] %v1335
    %s1582 = scalar_lea.vmem [#allocation1], 35
    %1583 = vst [vmem:[%s1582] ss:$4 sm:$0xff] %v1336
    %v1584 = vld.sshfl [vmem:[#allocation1] sm:$0xff pattern:$0x73625140]
    %v1585 = vld.sshfl [vmem:[#allocation1 + $0x20] sm:$0xff pattern:$0x73625140]
    %1586 = vst [vmem:[#allocation1] ss:$4 sm:$0xff] %v1337
    %1587 = vst [vmem:[%s1570] ss:$4 sm:$0xff] %v1338
    %1588 = vst [vmem:[%s1572] ss:$4 sm:$0xff] %v1339
    %1589 = vst [vmem:[%s1574] ss:$4 sm:$0xff] %v1340
    %1590 = vst [vmem:[%s1576] ss:$4 sm:$0xff] %v1341
    %v1591 = vld.sshfl [vmem:[#allocation1] sm:$0xff pattern:$0x73625140]
    %v1592 = vld.sshfl [vmem:[#allocation1 + $0x20] sm:$0xff pattern:$0x73625140]
    %v1593 = vsel %vm1393, %v1584, 0
    %v1595 = vsel %vm1393, %v1585, 0
    %v1597 = vsel %vm1393, %v1591, 0
    %v1599 = vsel %vm1393, %v1592, 0
    %1601 = vmatpush.msra.mxu0 0.0
    %1602 = vmatpush.msra.mxu0 0.0
    %1603 = vmatpush.msra.mxu0 %v1568
    %1604 = vmatpush.msra.mxu0 %v1567
    %1605 = vmatpush.msra.mxu0 %v1566
    %1606 = vmatpush.msra.mxu0 %v1565
    %1607 = vmatpush.msra.mxu0 %v1564
    %1608 = vmatpush.msra.mxu0 %v1563
    %1609 = vmatpush.msra.mxu0 %v1562
    %1610 = vmatpush.msra.mxu0 %v1561
    %1611 = vmatpush.msra.mxu0 %v1560
    %1612 = vmatpush.msra.mxu0 %v1559
    %1613 = vmatpush.msra.mxu0 %v1558
    %1614 = vmatpush.msra.mxu0 %v1557
    %1615 = vmatpush.msra.mxu0 %v1556
    %1616 = vmatpush.msra.mxu0 %v1555
    %1617 = vmatmul.f32.gmra.mxu0 %v1593
    %v1618 = vpop.f32.mrf.mxu0
    %v1619 = vadd.f32 0.0, %v1618
    %1620 = vmatmul.f32.gmra.mxu0 %v1595
    %v1621 = vpop.f32.mrf.mxu0
    %v1622 = vadd.f32 0.0, %v1621
    %1623 = vmatmul.f32.gmra.mxu0 %v1597
    %v1624 = vpop.f32.mrf.mxu0
    %v1625 = vadd.f32 0.0, %v1624
    %1626 = vmatmul.f32.gmra.mxu0 %v1599
    %v1627 = vpop.f32.mrf.mxu0
    %v1628 = vadd.f32 0.0, %v1627
    %1629 = vdwg.mxu0
    %v1633 = vrot.slane %v1619, 2
    %v1634 = vrot.slane %v1619, 4
    %v1635 = vrot.slane %v1619, 6
    %v1636 = vrot.slane %v1622, 2
    %v1637 = vrot.slane %v1622, 4
    %v1638 = vrot.slane %v1622, 6
    %v1639 = vrot.slane %v1625, 2
    %v1640 = vrot.slane %v1625, 4
    %v1641 = vrot.slane %v1625, 6
    %v1651 = vadd.f32 %v1519, 0.0
    %v1652 = vadd.f32 %v1420, %v1534
    %v1653 = vadd.f32 %v1434, %v1535
    %v1654 = vadd.f32 %v1435, %v1536
    %v1655 = vadd.f32 %v1436, %v1522
    %v1656 = vadd.f32 %v1423, %v1537
    %v1657 = vadd.f32 %v1437, %v1538
    %v1658 = vadd.f32 %v1438, %v1539
    %v1659 = vadd.f32 %v1439, %v1525
    %v1660 = vadd.f32 %v1426, %v1540
    %v1661 = vadd.f32 %v1440, %v1541
    %v1662 = vadd.f32 %v1441, %v1542
    %v1663 = vadd.f32 %v1442, %v1528
    %v1664 = vadd.f32 %v1429, %v1543
    %v1665 = vadd.f32 %v1651, %v1619
    %v1666 = vadd.f32 %v1652, %v1633
    %v1667 = vadd.f32 %v1653, %v1634
    %v1668 = vadd.f32 %v1654, %v1635
    %v1669 = vadd.f32 %v1655, %v1622
    %v1670 = vadd.f32 %v1656, %v1636
    %v1671 = vadd.f32 %v1657, %v1637
    %v1672 = vadd.f32 %v1658, %v1638
    %v1673 = vadd.f32 %v1659, %v1625
    %v1674 = vadd.f32 %v1660, %v1639
    %v1675 = vadd.f32 %v1661, %v1640
    %v1676 = vadd.f32 %v1662, %v1641
    %v1677 = vadd.f32 %v1663, %v1628
    %v1678 = vadd.f32 %v1664, 0.0
    %v1679 = vld [vmem:[#allocation7] sm:$0xff]
    %v1680 = vld [vmem:[#allocation7 + $0x8] sm:$0xff]
    %v1681 = vld [vmem:[#allocation7 + $0x10] sm:$0xff]
    %v1682 = vld [vmem:[#allocation7 + $0x18] sm:$0xff]
    %v1683 = vld [vmem:[#allocation7 + $0x20] sm:$0xff]
    %v1684 = vld [vmem:[#allocation7 + $0x28] sm:$0xff]
    %v1685 = vld [vmem:[#allocation7 + $0x30] sm:$0xff]
    %v1686 = vld [vmem:[#allocation7 + $0x38] sm:$0xff]
    %v1687 = vld [vmem:[#allocation7 + $0x40] sm:$0xff]
    %v1688 = vld [vmem:[#allocation7 + $0x48] sm:$0xff]
    %v1689 = vld [vmem:[#allocation7 + $0x50] sm:$0xff]
    %v1690 = vld [vmem:[#allocation7 + $0x58] sm:$0xff]
    %v1691 = vld [vmem:[#allocation7 + $0x60] sm:$0xff]
    %v1692 = vld [vmem:[#allocation7 + $0x68] sm:$0xff]
    %1693 = vst [vmem:[#allocation1] ss:$4 sm:$0xff] %v1328
    %s1694 = scalar_lea.vmem [#allocation1], 1
    %1695 = vst [vmem:[%s1694] ss:$4 sm:$0xff] %v1329
    %s1696 = scalar_lea.vmem [#allocation1], 2
    %1697 = vst [vmem:[%s1696] ss:$4 sm:$0xff] %v1330
    %s1698 = scalar_lea.vmem [#allocation1], 3
    %1699 = vst [vmem:[%s1698] ss:$4 sm:$0xff] %v1331
    %s1700 = scalar_lea.vmem [#allocation1], 32
    %1701 = vst [vmem:[%s1700] ss:$4 sm:$0xff] %v1332
    %s1702 = scalar_lea.vmem [#allocation1], 33
    %1703 = vst [vmem:[%s1702] ss:$4 sm:$0xff] %v1333
    %s1704 = scalar_lea.vmem [#allocation1], 34
    %1705 = vst [vmem:[%s1704] ss:$4 sm:$0xff] %v1334
    %s1706 = scalar_lea.vmem [#allocation1], 35
    %1707 = vst [vmem:[%s1706] ss:$4 sm:$0xff] %v1335
    %v1708 = vld.sshfl [vmem:[#allocation1] sm:$0xff pattern:$0x73625140]
    %v1709 = vld.sshfl [vmem:[#allocation1 + $0x20] sm:$0xff pattern:$0x73625140]
    %1710 = vst [vmem:[#allocation1] ss:$4 sm:$0xff] %v1336
    %1711 = vst [vmem:[%s1694] ss:$4 sm:$0xff] %v1337
    %1712 = vst [vmem:[%s1696] ss:$4 sm:$0xff] %v1338
    %1713 = vst [vmem:[%s1698] ss:$4 sm:$0xff] %v1339
    %1714 = vst [vmem:[%s1700] ss:$4 sm:$0xff] %v1340
    %v1715 = vld.sshfl [vmem:[#allocation1] sm:$0xff pattern:$0x73625140]
    %v1716 = vld.sshfl [vmem:[#allocation1 + $0x20] sm:$0xff pattern:$0x73625140]
    %v1717 = vsel %vm1393, %v1708, 0
    %v1719 = vsel %vm1393, %v1709, 0
    %v1721 = vsel %vm1393, %v1715, 0
    %v1723 = vsel %vm1393, %v1716, 0
    %1725 = vmatpush.msra.mxu0 0.0
    %1726 = vmatpush.msra.mxu0 0.0
    %1727 = vmatpush.msra.mxu0 %v1692
    %1728 = vmatpush.msra.mxu0 %v1691
    %1729 = vmatpush.msra.mxu0 %v1690
    %1730 = vmatpush.msra.mxu0 %v1689
    %1731 = vmatpush.msra.mxu0 %v1688
    %1732 = vmatpush.msra.mxu0 %v1687
    %1733 = vmatpush.msra.mxu0 %v1686
    %1734 = vmatpush.msra.mxu0 %v1685
    %1735 = vmatpush.msra.mxu0 %v1684
    %1736 = vmatpush.msra.mxu0 %v1683
    %1737 = vmatpush.msra.mxu0 %v1682
    %1738 = vmatpush.msra.mxu0 %v1681
    %1739 = vmatpush.msra.mxu0 %v1680
    %1740 = vmatpush.msra.mxu0 %v1679
    %1741 = vmatmul.f32.gmra.mxu0 %v1717
    %v1742 = vpop.f32.mrf.mxu0
    %v1743 = vadd.f32 0.0, %v1742
    %1744 = vmatmul.f32.gmra.mxu0 %v1719
    %v1745 = vpop.f32.mrf.mxu0
    %v1746 = vadd.f32 0.0, %v1745
    %1747 = vmatmul.f32.gmra.mxu0 %v1721
    %v1748 = vpop.f32.mrf.mxu0
    %v1749 = vadd.f32 0.0, %v1748
    %1750 = vmatmul.f32.gmra.mxu0 %v1723
    %v1751 = vpop.f32.mrf.mxu0
    %v1752 = vadd.f32 0.0, %v1751
    %1753 = vdwg.mxu0
    %v1757 = vrot.slane %v1743, 2
    %v1758 = vrot.slane %v1743, 4
    %v1759 = vrot.slane %v1743, 6
    %v1760 = vrot.slane %v1746, 2
    %v1761 = vrot.slane %v1746, 4
    %v1762 = vrot.slane %v1746, 6
    %v1763 = vrot.slane %v1749, 2
    %v1764 = vrot.slane %v1749, 4
    %v1765 = vrot.slane %v1749, 6
    %s1775 = scalar_lea.vmem [#allocation7], 112
    %v1776 = vld [vmem:[%s1775] sm:$0xff]
    %v1777 = vld [vmem:[%s1775 + $0x8] sm:$0xff]
    %v1778 = vld [vmem:[%s1775 + $0x10] sm:$0xff]
    %v1779 = vld [vmem:[%s1775 + $0x18] sm:$0xff]
    %v1780 = vld [vmem:[%s1775 + $0x20] sm:$0xff]
    %v1781 = vld [vmem:[%s1775 + $0x28] sm:$0xff]
    %v1782 = vld [vmem:[%s1775 + $0x30] sm:$0xff]
    %v1783 = vld [vmem:[%s1775 + $0x38] sm:$0xff]
    %v1784 = vld [vmem:[%s1775 + $0x40] sm:$0xff]
    %v1785 = vld [vmem:[%s1775 + $0x48] sm:$0xff]
    %v1786 = vld [vmem:[%s1775 + $0x50] sm:$0xff]
    %v1787 = vld [vmem:[%s1775 + $0x58] sm:$0xff]
    %v1788 = vld [vmem:[%s1775 + $0x60] sm:$0xff]
    %v1789 = vld [vmem:[%s1775 + $0x68] sm:$0xff]
    %1790 = vst [vmem:[#allocation1] ss:$4 sm:$0xff] %v1328
    %s1791 = scalar_lea.vmem [#allocation1], 1
    %1792 = vst [vmem:[%s1791] ss:$4 sm:$0xff] %v1329
    %s1793 = scalar_lea.vmem [#allocation1], 2
    %1794 = vst [vmem:[%s1793] ss:$4 sm:$0xff] %v1330
    %s1795 = scalar_lea.vmem [#allocation1], 3
    %1796 = vst [vmem:[%s1795] ss:$4 sm:$0xff] %v1331
    %s1797 = scalar_lea.vmem [#allocation1], 32
    %1798 = vst [vmem:[%s1797] ss:$4 sm:$0xff] %v1332
    %s1799 = scalar_lea.vmem [#allocation1], 33
    %1800 = vst [vmem:[%s1799] ss:$4 sm:$0xff] %v1333
    %s1801 = scalar_lea.vmem [#allocation1], 34
    %1802 = vst [vmem:[%s1801] ss:$4 sm:$0xff] %v1334
    %s1803 = scalar_lea.vmem [#allocation1], 35
    %1804 = vst [vmem:[%s1803] ss:$4 sm:$0xff] %v1335
    %v1805 = vld.sshfl [vmem:[#allocation1] sm:$0xff pattern:$0x73625140]
    %v1806 = vld.sshfl [vmem:[#allocation1 + $0x20] sm:$0xff pattern:$0x73625140]
    %1807 = vst [vmem:[#allocation1] ss:$4 sm:$0xff] %v1336
    %1808 = vst [vmem:[%s1791] ss:$4 sm:$0xff] %v1337
    %1809 = vst [vmem:[%s1793] ss:$4 sm:$0xff] %v1338
    %1810 = vst [vmem:[%s1795] ss:$4 sm:$0xff] %v1339
    %1811 = vst [vmem:[%s1797] ss:$4 sm:$0xff] %v1340
    %1812 = vst [vmem:[%s1799] ss:$4 sm:$0xff] %v1341
    %v1813 = vld.sshfl [vmem:[#allocation1] sm:$0xff pattern:$0x73625140]
    %v1814 = vld.sshfl [vmem:[#allocation1 + $0x20] sm:$0xff pattern:$0x73625140]
    %v1815 = vsel %vm1393, %v1805, 0
    %v1817 = vsel %vm1393, %v1806, 0
    %v1819 = vsel %vm1393, %v1813, 0
    %v1821 = vsel %vm1393, %v1814, 0
    %1823 = vmatpush.msra.mxu0 0.0
    %1824 = vmatpush.msra.mxu0 0.0
    %1825 = vmatpush.msra.mxu0 %v1789
    %1826 = vmatpush.msra.mxu0 %v1788
    %1827 = vmatpush.msra.mxu0 %v1787
    %1828 = vmatpush.msra.mxu0 %v1786
    %1829 = vmatpush.msra.mxu0 %v1785
    %1830 = vmatpush.msra.mxu0 %v1784
    %1831 = vmatpush.msra.mxu0 %v1783
    %1832 = vmatpush.msra.mxu0 %v1782
    %1833 = vmatpush.msra.mxu0 %v1781
    %1834 = vmatpush.msra.mxu0 %v1780
    %1835 = vmatpush.msra.mxu0 %v1779
    %1836 = vmatpush.msra.mxu0 %v1778
    %1837 = vmatpush.msra.mxu0 %v1777
    %1838 = vmatpush.msra.mxu0 %v1776
    %1839 = vmatmul.f32.gmra.mxu0 %v1815
    %v1840 = vpop.f32.mrf.mxu0
    %v1841 = vadd.f32 0.0, %v1840
    %1842 = vmatmul.f32.gmra.mxu0 %v1817
    %v1843 = vpop.f32.mrf.mxu0
    %v1844 = vadd.f32 0.0, %v1843
    %1845 = vmatmul.f32.gmra.mxu0 %v1819
    %v1846 = vpop.f32.mrf.mxu0
    %v1847 = vadd.f32 0.0, %v1846
    %1848 = vmatmul.f32.gmra.mxu0 %v1821
    %v1849 = vpop.f32.mrf.mxu0
    %v1850 = vadd.f32 0.0, %v1849
    %1851 = vdwg.mxu0
    %v1856 = vrot.slane %v1841, 2
    %v1857 = vrot.slane %v1841, 4
    %v1858 = vrot.slane %v1841, 6
    %v1859 = vrot.slane %v1844, 2
    %v1860 = vrot.slane %v1844, 4
    %v1861 = vrot.slane %v1844, 6
    %v1862 = vrot.slane %v1847, 2
    %v1863 = vrot.slane %v1847, 4
    %v1864 = vrot.slane %v1847, 6
    %v1865 = vrot.slane %v1850, 2
    %s1876 = scalar_lea.vmem [#allocation7], 224
    %v1877 = vld [vmem:[%s1876] sm:$0xff]
    %v1878 = vld [vmem:[%s1876 + $0x8] sm:$0xff]
    %v1879 = vld [vmem:[%s1876 + $0x10] sm:$0xff]
    %v1880 = vld [vmem:[%s1876 + $0x18] sm:$0xff]
    %v1881 = vld [vmem:[%s1876 + $0x20] sm:$0xff]
    %v1882 = vld [vmem:[%s1876 + $0x28] sm:$0xff]
    %v1883 = vld [vmem:[%s1876 + $0x30] sm:$0xff]
    %v1884 = vld [vmem:[%s1876 + $0x38] sm:$0xff]
    %v1885 = vld [vmem:[%s1876 + $0x40] sm:$0xff]
    %v1886 = vld [vmem:[%s1876 + $0x48] sm:$0xff]
    %v1887 = vld [vmem:[%s1876 + $0x50] sm:$0xff]
    %v1888 = vld [vmem:[%s1876 + $0x58] sm:$0xff]
    %v1889 = vld [vmem:[%s1876 + $0x60] sm:$0xff]
    %v1890 = vld [vmem:[%s1876 + $0x68] sm:$0xff]
    %1891 = vst [vmem:[#allocation1] ss:$4 sm:$0xff] %v1329
    %s1892 = scalar_lea.vmem [#allocation1], 1
    %1893 = vst [vmem:[%s1892] ss:$4 sm:$0xff] %v1330
    %s1894 = scalar_lea.vmem [#allocation1], 2
    %1895 = vst [vmem:[%s1894] ss:$4 sm:$0xff] %v1331
    %s1896 = scalar_lea.vmem [#allocation1], 3
    %1897 = vst [vmem:[%s1896] ss:$4 sm:$0xff] %v1332
    %s1898 = scalar_lea.vmem [#allocation1], 32
    %1899 = vst [vmem:[%s1898] ss:$4 sm:$0xff] %v1333
    %s1900 = scalar_lea.vmem [#allocation1], 33
    %1901 = vst [vmem:[%s1900] ss:$4 sm:$0xff] %v1334
    %s1902 = scalar_lea.vmem [#allocation1], 34
    %1903 = vst [vmem:[%s1902] ss:$4 sm:$0xff] %v1335
    %s1904 = scalar_lea.vmem [#allocation1], 35
    %1905 = vst [vmem:[%s1904] ss:$4 sm:$0xff] %v1336
    %v1906 = vld.sshfl [vmem:[#allocation1] sm:$0xff pattern:$0x73625140]
    %v1907 = vld.sshfl [vmem:[#allocation1 + $0x20] sm:$0xff pattern:$0x73625140]
    %1908 = vst [vmem:[#allocation1] ss:$4 sm:$0xff] %v1337
    %1909 = vst [vmem:[%s1892] ss:$4 sm:$0xff] %v1338
    %1910 = vst [vmem:[%s1894] ss:$4 sm:$0xff] %v1339
    %1911 = vst [vmem:[%s1896] ss:$4 sm:$0xff] %v1340
    %1912 = vst [vmem:[%s1898] ss:$4 sm:$0xff] %v1341
    %v1913 = vld.sshfl [vmem:[#allocation1] sm:$0xff pattern:$0x73625140]
    %v1914 = vld.sshfl [vmem:[#allocation1 + $0x20] sm:$0xff pattern:$0x73625140]
    %v1915 = vsel %vm1393, %v1906, 0
    %v1917 = vsel %vm1393, %v1907, 0
    %v1919 = vsel %vm1393, %v1913, 0
    %v1921 = vsel %vm1393, %v1914, 0
    %1923 = vmatpush.msra.mxu0 0.0
    %1924 = vmatpush.msra.mxu0 0.0
    %1925 = vmatpush.msra.mxu0 %v1890
    %1926 = vmatpush.msra.mxu0 %v1889
    %1927 = vmatpush.msra.mxu0 %v1888
    %1928 = vmatpush.msra.mxu0 %v1887
    %1929 = vmatpush.msra.mxu0 %v1886
    %1930 = vmatpush.msra.mxu0 %v1885
    %1931 = vmatpush.msra.mxu0 %v1884
    %1932 = vmatpush.msra.mxu0 %v1883
    %1933 = vmatpush.msra.mxu0 %v1882
    %1934 = vmatpush.msra.mxu0 %v1881
    %1935 = vmatpush.msra.mxu0 %v1880
    %1936 = vmatpush.msra.mxu0 %v1879
    %1937 = vmatpush.msra.mxu0 %v1878
    %1938 = vmatpush.msra.mxu0 %v1877
    %1939 = vmatmul.f32.gmra.mxu0 %v1915
    %v1940 = vpop.f32.mrf.mxu0
    %v1941 = vadd.f32 0.0, %v1940
    %1942 = vmatmul.f32.gmra.mxu0 %v1917
    %v1943 = vpop.f32.mrf.mxu0
    %v1944 = vadd.f32 0.0, %v1943
    %1945 = vmatmul.f32.gmra.mxu0 %v1919
    %v1946 = vpop.f32.mrf.mxu0
    %v1947 = vadd.f32 0.0, %v1946
    %1948 = vmatmul.f32.gmra.mxu0 %v1921
    %v1949 = vpop.f32.mrf.mxu0
    %v1950 = vadd.f32 0.0, %v1949
    %1951 = vdwg.mxu0
    %v1955 = vrot.slane %v1941, 2
    %v1956 = vrot.slane %v1941, 4
    %v1957 = vrot.slane %v1941, 6
    %v1958 = vrot.slane %v1944, 2
    %v1959 = vrot.slane %v1944, 4
    %v1960 = vrot.slane %v1944, 6
    %v1961 = vrot.slane %v1947, 2
    %v1962 = vrot.slane %v1947, 4
    %v1963 = vrot.slane %v1947, 6
    %v1973 = vadd.f32 %v1841, 0.0
    %v1974 = vadd.f32 %v1743, %v1856
    %v1975 = vadd.f32 %v1757, %v1857
    %v1976 = vadd.f32 %v1758, %v1858
    %v1977 = vadd.f32 %v1759, %v1844
    %v1978 = vadd.f32 %v1746, %v1859
    %v1979 = vadd.f32 %v1760, %v1860
    %v1980 = vadd.f32 %v1761, %v1861
    %v1981 = vadd.f32 %v1762, %v1847
    %v1982 = vadd.f32 %v1749, %v1862
    %v1983 = vadd.f32 %v1763, %v1863
    %v1984 = vadd.f32 %v1764, %v1864
    %v1985 = vadd.f32 %v1765, %v1850
    %v1986 = vadd.f32 %v1752, %v1865
    %v1987 = vadd.f32 %v1973, %v1941
    %v1988 = vadd.f32 %v1974, %v1955
    %v1989 = vadd.f32 %v1975, %v1956
    %v1990 = vadd.f32 %v1976, %v1957
    %v1991 = vadd.f32 %v1977, %v1944
    %v1992 = vadd.f32 %v1978, %v1958
    %v1993 = vadd.f32 %v1979, %v1959
    %v1994 = vadd.f32 %v1980, %v1960
    %v1995 = vadd.f32 %v1981, %v1947
    %v1996 = vadd.f32 %v1982, %v1961
    %v1997 = vadd.f32 %v1983, %v1962
    %v1998 = vadd.f32 %v1984, %v1963
    %v1999 = vadd.f32 %v1985, %v1950
    %v2000 = vadd.f32 %v1986, 0.0
    %v2001 = vmax.f32 %v1665, %v1987
    %v2002 = vmax.f32 %v1666, %v1988
    %v2003 = vmax.f32 %v1667, %v1989
    %v2004 = vmax.f32 %v1668, %v1990
    %v2005 = vmax.f32 %v1669, %v1991
    %v2006 = vmax.f32 %v1670, %v1992
    %v2007 = vmax.f32 %v1671, %v1993
    %v2008 = vmax.f32 %v1672, %v1994
    %v2009 = vmax.f32 %v1673, %v1995
    %v2010 = vmax.f32 %v1674, %v1996
    %v2011 = vmax.f32 %v1675, %v1997
    %v2012 = vmax.f32 %v1676, %v1998
    %v2013 = vmax.f32 %v1677, %v1999
    %v2014 = vmax.f32 %v1678, %v2000
    %v2015 = vmax.f32 %v2001, %v2002
    %v2016 = vmax.f32 %v2003, %v2004
    %v2017 = vmax.f32 %v2005, %v2006
    %v2018 = vmax.f32 %v2007, %v2008
    %v2019 = vmax.f32 %v2009, %v2010
    %v2020 = vmax.f32 %v2011, %v2012
    %v2021 = vmax.f32 %v2013, %v2014
    %v2022 = vld [vmem:[%s9] sm:$0x1]
    %v2024 = vperm.slane %v2022, 0
    %v2026 = vmul.f32 %v2015, %v2024
    %v2027 = vmul.f32 %v2016, %v2024
    %v2028 = vmul.f32 %v2017, %v2024
    %v2029 = vmul.f32 %v2018, %v2024
    %v2030 = vmul.f32 %v2019, %v2024
    %v2031 = vmul.f32 %v2020, %v2024
    %v2032 = vmul.f32 %v2021, %v2024
    %v2033 = vld [vmem:[%s10] sm:$0x1]
    %v2035 = vperm.slane %v2033, 0
    %v2037 = vadd.f32 %v2026, %v2035
    %v2038 = vadd.f32 %v2027, %v2035
    %v2039 = vadd.f32 %v2028, %v2035
    %v2040 = vadd.f32 %v2029, %v2035
    %v2041 = vadd.f32 %v2030, %v2035
    %v2042 = vadd.f32 %v2031, %v2035
    %v2043 = vadd.f32 %v2032, %v2035
    %v2044 = vmax.f32 %v2037, 0.0
    %v2045 = vmax.f32 %v2038, 0.0
    %v2046 = vmax.f32 %v2039, 0.0
    %v2047 = vmax.f32 %v2040, 0.0
    %v2048 = vmax.f32 %v2041, 0.0
    %v2049 = vmax.f32 %v2042, 0.0
    %v2050 = vmax.f32 %v2043, 0.0
    %v2051 = vld [vmem:[#allocation8] sm:$0xff]
    %v2052 = vld [vmem:[#allocation8 + $0x8] sm:$0xff]
    %v2053 = vld [vmem:[#allocation8 + $0x10] sm:$0xff]
    %v2054 = vld [vmem:[#allocation8 + $0x18] sm:$0xff]
    %v2055 = vld [vmem:[#allocation8 + $0x20] sm:$0xff]
    %v2056 = vld [vmem:[#allocation8 + $0x28] sm:$0xff]
    %v2057 = vld [vmem:[#allocation8 + $0x30] sm:$0xff]
    %v2058 = vld [vmem:[#allocation8 + $0x38] sm:$0xff]
    %v2059 = vld [vmem:[#allocation8 + $0x40] sm:$0xff]
    %v2060 = vld [vmem:[#allocation8 + $0x48] sm:$0xff]
    %v2061 = vld [vmem:[#allocation8 + $0x50] sm:$0xff]
    %v2062 = vld [vmem:[#allocation8 + $0x58] sm:$0xff]
    %v2063 = vld [vmem:[#allocation8 + $0x60] sm:$0xff]
    %v2064 = vld [vmem:[#allocation8 + $0x68] sm:$0xff]
    %2071 = vst [vmem:[#allocation1] ss:$4 sm:$0xff] %v2044
    %s2072 = scalar_lea.vmem [#allocation1], 1
    %2073 = vst [vmem:[%s2072] ss:$4 sm:$0xff] %v2045
    %s2074 = scalar_lea.vmem [#allocation1], 2
    %2075 = vst [vmem:[%s2074] ss:$4 sm:$0xff] %v2046
    %s2076 = scalar_lea.vmem [#allocation1], 3
    %2077 = vst [vmem:[%s2076] ss:$4 sm:$0xff] %v2047
    %s2078 = scalar_lea.vmem [#allocation1], 32
    %2079 = vst [vmem:[%s2078] ss:$4 sm:$0xff] %v2048
    %s2080 = scalar_lea.vmem [#allocation1], 33
    %2081 = vst [vmem:[%s2080] ss:$4 sm:$0xff] %v2049
    %v2082 = vld.sshfl [vmem:[#allocation1] sm:$0xff pattern:$0x73625140]
    %v2083 = vld.sshfl [vmem:[#allocation1 + $0x20] sm:$0xff pattern:$0x73625140]
    %v2084 = vsel %vm1393, %v2082, 0
    %v2086 = vsel %vm1393, %v2083, 0
    %2088 = vmatpush.msra.mxu0 0.0
    %2089 = vmatpush.msra.mxu0 0.0
    %2090 = vmatpush.msra.mxu0 %v2064
    %2091 = vmatpush.msra.mxu0 %v2063
    %2092 = vmatpush.msra.mxu0 %v2062
    %2093 = vmatpush.msra.mxu0 %v2061
    %2094 = vmatpush.msra.mxu0 %v2060
    %2095 = vmatpush.msra.mxu0 %v2059
    %2096 = vmatpush.msra.mxu0 %v2058
    %2097 = vmatpush.msra.mxu0 %v2057
    %2098 = vmatpush.msra.mxu0 %v2056
    %2099 = vmatpush.msra.mxu0 %v2055
    %2100 = vmatpush.msra.mxu0 %v2054
    %2101 = vmatpush.msra.mxu0 %v2053
    %2102 = vmatpush.msra.mxu0 %v2052
    %2103 = vmatpush.msra.mxu0 %v2051
    %2104 = vmatmul.f32.gmra.mxu0 %v2084
    %v2105 = vpop.f32.mrf.mxu0
    %v2106 = vadd.f32 0.0, %v2105
    %2107 = vmatmul.f32.gmra.mxu0 %v2086
    %v2108 = vpop.f32.mrf.mxu0
    %v2109 = vadd.f32 0.0, %v2108
    %2110 = vdwg.mxu0
    %v2113 = vrot.slane %v2106, 2
    %v2114 = vrot.slane %v2106, 4
    %v2115 = vrot.slane %v2106, 6
    %v2116 = vrot.slane %v2109, 2
    %s2121 = scalar_lea.vmem [#allocation8], 112
    %v2122 = vld [vmem:[%s2121] sm:$0xff]
    %v2123 = vld [vmem:[%s2121 + $0x8] sm:$0xff]
    %v2124 = vld [vmem:[%s2121 + $0x10] sm:$0xff]
    %v2125 = vld [vmem:[%s2121 + $0x18] sm:$0xff]
    %v2126 = vld [vmem:[%s2121 + $0x20] sm:$0xff]
    %v2127 = vld [vmem:[%s2121 + $0x28] sm:$0xff]
    %v2128 = vld [vmem:[%s2121 + $0x30] sm:$0xff]
    %v2129 = vld [vmem:[%s2121 + $0x38] sm:$0xff]
    %v2130 = vld [vmem:[%s2121 + $0x40] sm:$0xff]
    %v2131 = vld [vmem:[%s2121 + $0x48] sm:$0xff]
    %v2132 = vld [vmem:[%s2121 + $0x50] sm:$0xff]
    %v2133 = vld [vmem:[%s2121 + $0x58] sm:$0xff]
    %v2134 = vld [vmem:[%s2121 + $0x60] sm:$0xff]
    %v2135 = vld [vmem:[%s2121 + $0x68] sm:$0xff]
    %2137 = vst [vmem:[#allocation1] ss:$4 sm:$0xff] %v2044
    %s2138 = scalar_lea.vmem [#allocation1], 1
    %2139 = vst [vmem:[%s2138] ss:$4 sm:$0xff] %v2045
    %s2140 = scalar_lea.vmem [#allocation1], 2
    %2141 = vst [vmem:[%s2140] ss:$4 sm:$0xff] %v2046
    %s2142 = scalar_lea.vmem [#allocation1], 3
    %2143 = vst [vmem:[%s2142] ss:$4 sm:$0xff] %v2047
    %s2144 = scalar_lea.vmem [#allocation1], 32
    %2145 = vst [vmem:[%s2144] ss:$4 sm:$0xff] %v2048
    %s2146 = scalar_lea.vmem [#allocation1], 33
    %2147 = vst [vmem:[%s2146] ss:$4 sm:$0xff] %v2049
    %s2148 = scalar_lea.vmem [#allocation1], 34
    %2149 = vst [vmem:[%s2148] ss:$4 sm:$0xff] %v2050
    %v2150 = vld.sshfl [vmem:[#allocation1] sm:$0xff pattern:$0x73625140]
    %v2151 = vld.sshfl [vmem:[#allocation1 + $0x20] sm:$0xff pattern:$0x73625140]
    %v2152 = vsel %vm1393, %v2150, 0
    %v2154 = vsel %vm1393, %v2151, 0
    %2156 = vmatpush.msra.mxu0 0.0
    %2157 = vmatpush.msra.mxu0 0.0
    %2158 = vmatpush.msra.mxu0 %v2135
    %2159 = vmatpush.msra.mxu0 %v2134
    %2160 = vmatpush.msra.mxu0 %v2133
    %2161 = vmatpush.msra.mxu0 %v2132
    %2162 = vmatpush.msra.mxu0 %v2131
    %2163 = vmatpush.msra.mxu0 %v2130
    %2164 = vmatpush.msra.mxu0 %v2129
    %2165 = vmatpush.msra.mxu0 %v2128
    %2166 = vmatpush.msra.mxu0 %v2127
    %2167 = vmatpush.msra.mxu0 %v2126
    %2168 = vmatpush.msra.mxu0 %v2125
    %2169 = vmatpush.msra.mxu0 %v2124
    %2170 = vmatpush.msra.mxu0 %v2123
    %2171 = vmatpush.msra.mxu0 %v2122
    %2172 = vmatmul.f32.gmra.mxu0 %v2152
    %v2173 = vpop.f32.mrf.mxu0
    %v2174 = vadd.f32 0.0, %v2173
    %2175 = vmatmul.f32.gmra.mxu0 %v2154
    %v2176 = vpop.f32.mrf.mxu0
    %v2177 = vadd.f32 0.0, %v2176
    %2178 = vdwg.mxu0
    %v2181 = vrot.slane %v2174, 2
    %v2182 = vrot.slane %v2174, 4
    %v2183 = vrot.slane %v2174, 6
    %v2184 = vrot.slane %v2177, 2
    %v2185 = vrot.slane %v2177, 4
    %s2191 = scalar_lea.vmem [#allocation8], 224
    %v2192 = vld [vmem:[%s2191] sm:$0xff]
    %v2193 = vld [vmem:[%s2191 + $0x8] sm:$0xff]
    %v2194 = vld [vmem:[%s2191 + $0x10] sm:$0xff]
    %v2195 = vld [vmem:[%s2191 + $0x18] sm:$0xff]
    %v2196 = vld [vmem:[%s2191 + $0x20] sm:$0xff]
    %v2197 = vld [vmem:[%s2191 + $0x28] sm:$0xff]
    %v2198 = vld [vmem:[%s2191 + $0x30] sm:$0xff]
    %v2199 = vld [vmem:[%s2191 + $0x38] sm:$0xff]
    %v2200 = vld [vmem:[%s2191 + $0x40] sm:$0xff]
    %v2201 = vld [vmem:[%s2191 + $0x48] sm:$0xff]
    %v2202 = vld [vmem:[%s2191 + $0x50] sm:$0xff]
    %v2203 = vld [vmem:[%s2191 + $0x58] sm:$0xff]
    %v2204 = vld [vmem:[%s2191 + $0x60] sm:$0xff]
    %v2205 = vld [vmem:[%s2191 + $0x68] sm:$0xff]
    %2206 = vst [vmem:[#allocation1] ss:$4 sm:$0xff] %v2045
    %s2207 = scalar_lea.vmem [#allocation1], 1
    %2208 = vst [vmem:[%s2207] ss:$4 sm:$0xff] %v2046
    %s2209 = scalar_lea.vmem [#allocation1], 2
    %2210 = vst [vmem:[%s2209] ss:$4 sm:$0xff] %v2047
    %s2211 = scalar_lea.vmem [#allocation1], 3
    %2212 = vst [vmem:[%s2211] ss:$4 sm:$0xff] %v2048
    %s2213 = scalar_lea.vmem [#allocation1], 32
    %2214 = vst [vmem:[%s2213] ss:$4 sm:$0xff] %v2049
    %s2215 = scalar_lea.vmem [#allocation1], 33
    %2216 = vst [vmem:[%s2215] ss:$4 sm:$0xff] %v2050
    %v2217 = vld.sshfl [vmem:[#allocation1] sm:$0xff pattern:$0x73625140]
    %v2218 = vld.sshfl [vmem:[#allocation1 + $0x20] sm:$0xff pattern:$0x73625140]
    %v2219 = vsel %vm1393, %v2217, 0
    %v2221 = vsel %vm1393, %v2218, 0
    %2223 = vmatpush.msra.mxu0 0.0
    %2224 = vmatpush.msra.mxu0 0.0
    %2225 = vmatpush.msra.mxu0 %v2205
    %2226 = vmatpush.msra.mxu0 %v2204
    %2227 = vmatpush.msra.mxu0 %v2203
    %2228 = vmatpush.msra.mxu0 %v2202
    %2229 = vmatpush.msra.mxu0 %v2201
    %2230 = vmatpush.msra.mxu0 %v2200
    %2231 = vmatpush.msra.mxu0 %v2199
    %2232 = vmatpush.msra.mxu0 %v2198
    %2233 = vmatpush.msra.mxu0 %v2197
    %2234 = vmatpush.msra.mxu0 %v2196
    %2235 = vmatpush.msra.mxu0 %v2195
    %2236 = vmatpush.msra.mxu0 %v2194
    %2237 = vmatpush.msra.mxu0 %v2193
    %2238 = vmatpush.msra.mxu0 %v2192
    %2239 = vmatmul.f32.gmra.mxu0 %v2219
    %v2240 = vpop.f32.mrf.mxu0
    %v2241 = vadd.f32 0.0, %v2240
    %2242 = vmatmul.f32.gmra.mxu0 %v2221
    %v2243 = vpop.f32.mrf.mxu0
    %v2244 = vadd.f32 0.0, %v2243
    %2245 = vdwg.mxu0
    %v2248 = vrot.slane %v2241, 2
    %v2249 = vrot.slane %v2241, 4
    %v2250 = vrot.slane %v2241, 6
    %v2251 = vrot.slane %v2244, 2
    %v2256 = vadd.f32 %v2174, 0.0
    %v2257 = vadd.f32 %v2106, %v2181
    %v2258 = vadd.f32 %v2113, %v2182
    %v2259 = vadd.f32 %v2114, %v2183
    %v2260 = vadd.f32 %v2115, %v2177
    %v2261 = vadd.f32 %v2109, %v2184
    %v2262 = vadd.f32 %v2116, %v2185
    %v2263 = vadd.f32 %v2256, %v2241
    %v2264 = vadd.f32 %v2257, %v2248
    %v2265 = vadd.f32 %v2258, %v2249
    %v2266 = vadd.f32 %v2259, %v2250
    %v2267 = vadd.f32 %v2260, %v2244
    %v2268 = vadd.f32 %v2261, %v2251
    %v2269 = vadd.f32 %v2262, 0.0
    %v2270 = vld [vmem:[#allocation10] sm:$0xff]
    %v2271 = vld [vmem:[#allocation10 + $0x8] sm:$0xff]
    %v2272 = vld [vmem:[#allocation10 + $0x10] sm:$0xff]
    %v2273 = vld [vmem:[#allocation10 + $0x18] sm:$0xff]
    %v2274 = vld [vmem:[#allocation10 + $0x20] sm:$0xff]
    %v2275 = vld [vmem:[#allocation10 + $0x28] sm:$0xff]
    %v2276 = vld [vmem:[#allocation10 + $0x30] sm:$0xff]
    %v2277 = vld [vmem:[#allocation10 + $0x38] sm:$0xff]
    %v2278 = vld [vmem:[#allocation10 + $0x40] sm:$0xff]
    %v2279 = vld [vmem:[#allocation10 + $0x48] sm:$0xff]
    %v2280 = vld [vmem:[#allocation10 + $0x50] sm:$0xff]
    %v2281 = vld [vmem:[#allocation10 + $0x58] sm:$0xff]
    %v2282 = vld [vmem:[#allocation10 + $0x60] sm:$0xff]
    %v2283 = vld [vmem:[#allocation10 + $0x68] sm:$0xff]
    %2284 = vst [vmem:[#allocation1] ss:$4 sm:$0xff] %v2044
    %s2285 = scalar_lea.vmem [#allocation1], 1
    %2286 = vst [vmem:[%s2285] ss:$4 sm:$0xff] %v2045
    %s2287 = scalar_lea.vmem [#allocation1], 2
    %2288 = vst [vmem:[%s2287] ss:$4 sm:$0xff] %v2046
    %s2289 = scalar_lea.vmem [#allocation1], 3
    %2290 = vst [vmem:[%s2289] ss:$4 sm:$0xff] %v2047
    %s2291 = scalar_lea.vmem [#allocation1], 32
    %2292 = vst [vmem:[%s2291] ss:$4 sm:$0xff] %v2048
    %s2293 = scalar_lea.vmem [#allocation1], 33
    %2294 = vst [vmem:[%s2293] ss:$4 sm:$0xff] %v2049
    %v2295 = vld.sshfl [vmem:[#allocation1] sm:$0xff pattern:$0x73625140]
    %v2296 = vld.sshfl [vmem:[#allocation1 + $0x20] sm:$0xff pattern:$0x73625140]
    %v2297 = vsel %vm1393, %v2295, 0
    %v2299 = vsel %vm1393, %v2296, 0
    %2301 = vmatpush.msra.mxu0 0.0
    %2302 = vmatpush.msra.mxu0 0.0
    %2303 = vmatpush.msra.mxu0 %v2283
    %2304 = vmatpush.msra.mxu0 %v2282
    %2305 = vmatpush.msra.mxu0 %v2281
    %2306 = vmatpush.msra.mxu0 %v2280
    %2307 = vmatpush.msra.mxu0 %v2279
    %2308 = vmatpush.msra.mxu0 %v2278
    %2309 = vmatpush.msra.mxu0 %v2277
    %2310 = vmatpush.msra.mxu0 %v2276
    %2311 = vmatpush.msra.mxu0 %v2275
    %2312 = vmatpush.msra.mxu0 %v2274
    %2313 = vmatpush.msra.mxu0 %v2273
    %2314 = vmatpush.msra.mxu0 %v2272
    %2315 = vmatpush.msra.mxu0 %v2271
    %2316 = vmatpush.msra.mxu0 %v2270
    %2317 = vmatmul.f32.gmra.mxu0 %v2297
    %v2318 = vpop.f32.mrf.mxu0
    %v2319 = vadd.f32 0.0, %v2318
    %2320 = vmatmul.f32.gmra.mxu0 %v2299
    %v2321 = vpop.f32.mrf.mxu0
    %v2322 = vadd.f32 0.0, %v2321
    %2323 = vdwg.mxu0
    %v2326 = vrot.slane %v2319, 2
    %v2327 = vrot.slane %v2319, 4
    %v2328 = vrot.slane %v2319, 6
    %v2329 = vrot.slane %v2322, 2
    %s2334 = scalar_lea.vmem [#allocation10], 112
    %v2335 = vld [vmem:[%s2334] sm:$0xff]
    %v2336 = vld [vmem:[%s2334 + $0x8] sm:$0xff]
    %v2337 = vld [vmem:[%s2334 + $0x10] sm:$0xff]
    %v2338 = vld [vmem:[%s2334 + $0x18] sm:$0xff]
    %v2339 = vld [vmem:[%s2334 + $0x20] sm:$0xff]
    %v2340 = vld [vmem:[%s2334 + $0x28] sm:$0xff]
    %v2341 = vld [vmem:[%s2334 + $0x30] sm:$0xff]
    %v2342 = vld [vmem:[%s2334 + $0x38] sm:$0xff]
    %v2343 = vld [vmem:[%s2334 + $0x40] sm:$0xff]
    %v2344 = vld [vmem:[%s2334 + $0x48] sm:$0xff]
    %v2345 = vld [vmem:[%s2334 + $0x50] sm:$0xff]
    %v2346 = vld [vmem:[%s2334 + $0x58] sm:$0xff]
    %v2347 = vld [vmem:[%s2334 + $0x60] sm:$0xff]
    %v2348 = vld [vmem:[%s2334 + $0x68] sm:$0xff]
    %2349 = vst [vmem:[#allocation1] ss:$4 sm:$0xff] %v2044
    %s2350 = scalar_lea.vmem [#allocation1], 1
    %2351 = vst [vmem:[%s2350] ss:$4 sm:$0xff] %v2045
    %s2352 = scalar_lea.vmem [#allocation1], 2
    %2353 = vst [vmem:[%s2352] ss:$4 sm:$0xff] %v2046
    %s2354 = scalar_lea.vmem [#allocation1], 3
    %2355 = vst [vmem:[%s2354] ss:$4 sm:$0xff] %v2047
    %s2356 = scalar_lea.vmem [#allocation1], 32
    %2357 = vst [vmem:[%s2356] ss:$4 sm:$0xff] %v2048
    %s2358 = scalar_lea.vmem [#allocation1], 33
    %2359 = vst [vmem:[%s2358] ss:$4 sm:$0xff] %v2049
    %s2360 = scalar_lea.vmem [#allocation1], 34
    %2361 = vst [vmem:[%s2360] ss:$4 sm:$0xff] %v2050
    %v2362 = vld.sshfl [vmem:[#allocation1] sm:$0xff pattern:$0x73625140]
    %v2363 = vld.sshfl [vmem:[#allocation1 + $0x20] sm:$0xff pattern:$0x73625140]
    %v2364 = vsel %vm1393, %v2362, 0
    %v2366 = vsel %vm1393, %v2363, 0
    %2368 = vmatpush.msra.mxu0 0.0
    %2369 = vmatpush.msra.mxu0 0.0
    %2370 = vmatpush.msra.mxu0 %v2348
    %2371 = vmatpush.msra.mxu0 %v2347
    %2372 = vmatpush.msra.mxu0 %v2346
    %2373 = vmatpush.msra.mxu0 %v2345
    %2374 = vmatpush.msra.mxu0 %v2344
    %2375 = vmatpush.msra.mxu0 %v2343
    %2376 = vmatpush.msra.mxu0 %v2342
    %2377 = vmatpush.msra.mxu0 %v2341
    %2378 = vmatpush.msra.mxu0 %v2340
    %2379 = vmatpush.msra.mxu0 %v2339
    %2380 = vmatpush.msra.mxu0 %v2338
    %2381 = vmatpush.msra.mxu0 %v2337
    %2382 = vmatpush.msra.mxu0 %v2336
    %2383 = vmatpush.msra.mxu0 %v2335
    %2384 = vmatmul.f32.gmra.mxu0 %v2364
    %v2385 = vpop.f32.mrf.mxu0
    %v2386 = vadd.f32 0.0, %v2385
    %2387 = vmatmul.f32.gmra.mxu0 %v2366
    %v2388 = vpop.f32.mrf.mxu0
    %v2389 = vadd.f32 0.0, %v2388
    %2390 = vdwg.mxu0
    %v2393 = vrot.slane %v2386, 2
    %v2394 = vrot.slane %v2386, 4
    %v2395 = vrot.slane %v2386, 6
    %v2396 = vrot.slane %v2389, 2
    %v2397 = vrot.slane %v2389, 4
    %s2403 = scalar_lea.vmem [#allocation10], 224
    %v2404 = vld [vmem:[%s2403] sm:$0xff]
    %v2405 = vld [vmem:[%s2403 + $0x8] sm:$0xff]
    %v2406 = vld [vmem:[%s2403 + $0x10] sm:$0xff]
    %v2407 = vld [vmem:[%s2403 + $0x18] sm:$0xff]
    %v2408 = vld [vmem:[%s2403 + $0x20] sm:$0xff]
    %v2409 = vld [vmem:[%s2403 + $0x28] sm:$0xff]
    %v2410 = vld [vmem:[%s2403 + $0x30] sm:$0xff]
    %v2411 = vld [vmem:[%s2403 + $0x38] sm:$0xff]
    %v2412 = vld [vmem:[%s2403 + $0x40] sm:$0xff]
    %v2413 = vld [vmem:[%s2403 + $0x48] sm:$0xff]
    %v2414 = vld [vmem:[%s2403 + $0x50] sm:$0xff]
    %v2415 = vld [vmem:[%s2403 + $0x58] sm:$0xff]
    %v2416 = vld [vmem:[%s2403 + $0x60] sm:$0xff]
    %v2417 = vld [vmem:[%s2403 + $0x68] sm:$0xff]
    %2418 = vst [vmem:[#allocation1] ss:$4 sm:$0xff] %v2045
    %s2419 = scalar_lea.vmem [#allocation1], 1
    %2420 = vst [vmem:[%s2419] ss:$4 sm:$0xff] %v2046
    %s2421 = scalar_lea.vmem [#allocation1], 2
    %2422 = vst [vmem:[%s2421] ss:$4 sm:$0xff] %v2047
    %s2423 = scalar_lea.vmem [#allocation1], 3
    %2424 = vst [vmem:[%s2423] ss:$4 sm:$0xff] %v2048
    %s2425 = scalar_lea.vmem [#allocation1], 32
    %2426 = vst [vmem:[%s2425] ss:$4 sm:$0xff] %v2049
    %s2427 = scalar_lea.vmem [#allocation1], 33
    %2428 = vst [vmem:[%s2427] ss:$4 sm:$0xff] %v2050
    %v2429 = vld.sshfl [vmem:[#allocation1] sm:$0xff pattern:$0x73625140]
    %v2430 = vld.sshfl [vmem:[#allocation1 + $0x20] sm:$0xff pattern:$0x73625140]
    %v2431 = vsel %vm1393, %v2429, 0
    %v2433 = vsel %vm1393, %v2430, 0
    %2435 = vmatpush.msra.mxu0 0.0
    %2436 = vmatpush.msra.mxu0 0.0
    %2437 = vmatpush.msra.mxu0 %v2417
    %2438 = vmatpush.msra.mxu0 %v2416
    %2439 = vmatpush.msra.mxu0 %v2415
    %2440 = vmatpush.msra.mxu0 %v2414
    %2441 = vmatpush.msra.mxu0 %v2413
    %2442 = vmatpush.msra.mxu0 %v2412
    %2443 = vmatpush.msra.mxu0 %v2411
    %2444 = vmatpush.msra.mxu0 %v2410
    %2445 = vmatpush.msra.mxu0 %v2409
    %2446 = vmatpush.msra.mxu0 %v2408
    %2447 = vmatpush.msra.mxu0 %v2407
    %2448 = vmatpush.msra.mxu0 %v2406
    %2449 = vmatpush.msra.mxu0 %v2405
    %2450 = vmatpush.msra.mxu0 %v2404
    %2451 = vmatmul.f32.gmra.mxu0 %v2431
    %v2452 = vpop.f32.mrf.mxu0
    %v2453 = vadd.f32 0.0, %v2452
    %2454 = vmatmul.f32.gmra.mxu0 %v2433
    %v2455 = vpop.f32.mrf.mxu0
    %v2456 = vadd.f32 0.0, %v2455
    %2457 = vdwg.mxu0
    %v2460 = vrot.slane %v2453, 2
    %v2461 = vrot.slane %v2453, 4
    %v2462 = vrot.slane %v2453, 6
    %v2463 = vrot.slane %v2456, 2
    %v2468 = vadd.f32 %v2386, 0.0
    %v2469 = vadd.f32 %v2319, %v2393
    %v2470 = vadd.f32 %v2326, %v2394
    %v2471 = vadd.f32 %v2327, %v2395
    %v2472 = vadd.f32 %v2328, %v2389
    %v2473 = vadd.f32 %v2322, %v2396
    %v2474 = vadd.f32 %v2329, %v2397
    %v2475 = vadd.f32 %v2468, %v2453
    %v2476 = vadd.f32 %v2469, %v2460
    %v2477 = vadd.f32 %v2470, %v2461
    %v2478 = vadd.f32 %v2471, %v2462
    %v2479 = vadd.f32 %v2472, %v2456
    %v2480 = vadd.f32 %v2473, %v2463
    %v2481 = vadd.f32 %v2474, 0.0
    %v2482 = vmax.f32 %v2263, %v2475
    %v2483 = vmax.f32 %v2264, %v2476
    %v2484 = vmax.f32 %v2265, %v2477
    %v2485 = vmax.f32 %v2266, %v2478
    %v2486 = vmax.f32 %v2267, %v2479
    %v2487 = vmax.f32 %v2268, %v2480
    %v2488 = vmax.f32 %v2269, %v2481
    %v2489 = vmax.f32 %v2483, %v2484
    %v2490 = vmax.f32 %v2485, %v2486
    %v2491 = vmax.f32 %v2487, %v2488
    %v2492 = vld [vmem:[%s11] sm:$0x1]
    %v2494 = vperm.slane %v2492, 0
    %v2496 = vmul.f32 %v2482, %v2494
    %v2497 = vmul.f32 %v2489, %v2494
    %v2498 = vmul.f32 %v2490, %v2494
    %v2499 = vmul.f32 %v2491, %v2494
    %v2500 = vld [vmem:[%s12] sm:$0x1]
    %v2502 = vperm.slane %v2500, 0
    %v2504 = vadd.f32 %v2496, %v2502
    %v2505 = vadd.f32 %v2497, %v2502
    %v2506 = vadd.f32 %v2498, %v2502
    %v2507 = vadd.f32 %v2499, %v2502
    %v2508 = vmax.f32 %v2504, 0.0
    %v2509 = vmax.f32 %v2505, 0.0
    %v2510 = vmax.f32 %v2506, 0.0
    %v2511 = vmax.f32 %v2507, 0.0
    %v2512 = vld [vmem:[#allocation11] sm:$0xff]
    %v2513 = vld [vmem:[#allocation11 + $0x8] sm:$0xff]
    %v2514 = vld [vmem:[#allocation11 + $0x10] sm:$0xff]
    %v2515 = vld [vmem:[#allocation11 + $0x18] sm:$0xff]
    %v2516 = vld [vmem:[#allocation11 + $0x20] sm:$0xff]
    %v2517 = vld [vmem:[#allocation11 + $0x28] sm:$0xff]
    %v2518 = vld [vmem:[#allocation11 + $0x30] sm:$0xff]
    %v2519 = vld [vmem:[#allocation11 + $0x38] sm:$0xff]
    %v2520 = vld [vmem:[#allocation11 + $0x40] sm:$0xff]
    %v2521 = vld [vmem:[#allocation11 + $0x48] sm:$0xff]
    %v2522 = vld [vmem:[#allocation11 + $0x50] sm:$0xff]
    %v2523 = vld [vmem:[#allocation11 + $0x58] sm:$0xff]
    %v2524 = vld [vmem:[#allocation11 + $0x60] sm:$0xff]
    %v2525 = vld [vmem:[#allocation11 + $0x68] sm:$0xff]
    %v2526 = vld [vmem:[#allocation11 + $0x70] sm:$0xff]
    %v2527 = vld [vmem:[#allocation11 + $0x78] sm:$0xff]
    %s2528 = scalar_lea.vmem [#allocation11], 128
    %v2529 = vld [vmem:[%s2528] sm:$0xff]
    %v2530 = vld [vmem:[%s2528 + $0x8] sm:$0xff]
    %v2531 = vld [vmem:[%s2528 + $0x10] sm:$0xff]
    %v2532 = vld [vmem:[%s2528 + $0x18] sm:$0xff]
    %v2533 = vld [vmem:[%s2528 + $0x20] sm:$0xff]
    %v2534 = vld [vmem:[%s2528 + $0x28] sm:$0xff]
    %v2535 = vld [vmem:[%s2528 + $0x30] sm:$0xff]
    %v2536 = vld [vmem:[%s2528 + $0x38] sm:$0xff]
    %v2537 = vld [vmem:[%s2528 + $0x40] sm:$0xff]
    %v2538 = vld [vmem:[%s2528 + $0x48] sm:$0xff]
    %v2539 = vld [vmem:[%s2528 + $0x50] sm:$0xff]
    %v2540 = vld [vmem:[%s2528 + $0x58] sm:$0xff]
    %v2541 = vld [vmem:[%s2528 + $0x60] sm:$0xff]
    %v2542 = vld [vmem:[%s2528 + $0x68] sm:$0xff]
    %v2543 = vld [vmem:[%s2528 + $0x70] sm:$0xff]
    %v2544 = vld [vmem:[%s2528 + $0x78] sm:$0xff]
    %2545 = vmatpush.msra.mxu0 %v2544
    %2546 = vmatpush.msra.mxu0 %v2543
    %2547 = vmatpush.msra.mxu0 %v2542
    %2548 = vmatpush.msra.mxu0 %v2541
    %2549 = vmatpush.msra.mxu0 %v2540
    %2550 = vmatpush.msra.mxu0 %v2539
    %2551 = vmatpush.msra.mxu0 %v2538
    %2552 = vmatpush.msra.mxu0 %v2537
    %2553 = vmatpush.msra.mxu0 %v2536
    %2554 = vmatpush.msra.mxu0 %v2535
    %2555 = vmatpush.msra.mxu0 %v2534
    %2556 = vmatpush.msra.mxu0 %v2533
    %2557 = vmatpush.msra.mxu0 %v2532
    %2558 = vmatpush.msra.mxu0 %v2531
    %2559 = vmatpush.msra.mxu0 %v2530
    %2560 = vmatpush.msra.mxu0 %v2529
    %2561 = vmatmul.f32.gmra.mxu0 %v2509
    %v2562 = vpop.f32.mrf.mxu0
    %v2563 = vadd.f32 0.0, %v2562
    %2564 = vdwg.mxu0
    %2565 = vmatpush.msra.mxu0 %v2527
    %2566 = vmatpush.msra.mxu0 %v2526
    %2567 = vmatpush.msra.mxu0 %v2525
    %2568 = vmatpush.msra.mxu0 %v2524
    %2569 = vmatpush.msra.mxu0 %v2523
    %2570 = vmatpush.msra.mxu0 %v2522
    %2571 = vmatpush.msra.mxu0 %v2521
    %2572 = vmatpush.msra.mxu0 %v2520
    %2573 = vmatpush.msra.mxu0 %v2519
    %2574 = vmatpush.msra.mxu0 %v2518
    %2575 = vmatpush.msra.mxu0 %v2517
    %2576 = vmatpush.msra.mxu0 %v2516
    %2577 = vmatpush.msra.mxu0 %v2515
    %2578 = vmatpush.msra.mxu0 %v2514
    %2579 = vmatpush.msra.mxu0 %v2513
    %2580 = vmatpush.msra.mxu0 %v2512
    %2581 = vmatmul.f32.gmra.mxu0 %v2508
    %v2582 = vpop.f32.mrf.mxu0
    %v2583 = vadd.f32 %v2563, %v2582
    %2584 = vdwg.mxu0
    %s2585 = scalar_lea.vmem [#allocation11], 256
    %v2586 = vld [vmem:[%s2585] sm:$0xff]
    %v2587 = vld [vmem:[%s2585 + $0x8] sm:$0xff]
    %v2588 = vld [vmem:[%s2585 + $0x10] sm:$0xff]
    %v2589 = vld [vmem:[%s2585 + $0x18] sm:$0xff]
    %v2590 = vld [vmem:[%s2585 + $0x20] sm:$0xff]
    %v2591 = vld [vmem:[%s2585 + $0x28] sm:$0xff]
    %v2592 = vld [vmem:[%s2585 + $0x30] sm:$0xff]
    %v2593 = vld [vmem:[%s2585 + $0x38] sm:$0xff]
    %v2594 = vld [vmem:[%s2585 + $0x40] sm:$0xff]
    %v2595 = vld [vmem:[%s2585 + $0x48] sm:$0xff]
    %v2596 = vld [vmem:[%s2585 + $0x50] sm:$0xff]
    %v2597 = vld [vmem:[%s2585 + $0x58] sm:$0xff]
    %v2598 = vld [vmem:[%s2585 + $0x60] sm:$0xff]
    %v2599 = vld [vmem:[%s2585 + $0x68] sm:$0xff]
    %v2600 = vld [vmem:[%s2585 + $0x70] sm:$0xff]
    %v2601 = vld [vmem:[%s2585 + $0x78] sm:$0xff]
    %2602 = vmatpush.msra.mxu0 %v2601
    %2603 = vmatpush.msra.mxu0 %v2600
    %2604 = vmatpush.msra.mxu0 %v2599
    %2605 = vmatpush.msra.mxu0 %v2598
    %2606 = vmatpush.msra.mxu0 %v2597
    %2607 = vmatpush.msra.mxu0 %v2596
    %2608 = vmatpush.msra.mxu0 %v2595
    %2609 = vmatpush.msra.mxu0 %v2594
    %2610 = vmatpush.msra.mxu0 %v2593
    %2611 = vmatpush.msra.mxu0 %v2592
    %2612 = vmatpush.msra.mxu0 %v2591
    %2613 = vmatpush.msra.mxu0 %v2590
    %2614 = vmatpush.msra.mxu0 %v2589
    %2615 = vmatpush.msra.mxu0 %v2588
    %2616 = vmatpush.msra.mxu0 %v2587
    %2617 = vmatpush.msra.mxu0 %v2586
    %2618 = vmatmul.f32.gmra.mxu0 %v2510
    %v2619 = vpop.f32.mrf.mxu0
    %v2620 = vadd.f32 0.0, %v2619
    %2621 = vdwg.mxu0
    %v2622 = vadd.f32 %v2583, %v2620
    %s2623 = scalar_lea.vmem [#allocation11], 384
    %v2624 = vld [vmem:[%s2623] sm:$0xff]
    %v2625 = vld [vmem:[%s2623 + $0x8] sm:$0xff]
    %v2626 = vld [vmem:[%s2623 + $0x10] sm:$0xff]
    %v2627 = vld [vmem:[%s2623 + $0x18] sm:$0xff]
    %v2628 = vld [vmem:[%s2623 + $0x20] sm:$0xff]
    %v2629 = vld [vmem:[%s2623 + $0x28] sm:$0xff]
    %v2630 = vld [vmem:[%s2623 + $0x30] sm:$0xff]
    %v2631 = vld [vmem:[%s2623 + $0x38] sm:$0xff]
    %v2632 = vld [vmem:[%s2623 + $0x40] sm:$0xff]
    %v2633 = vld [vmem:[%s2623 + $0x48] sm:$0xff]
    %v2634 = vld [vmem:[%s2623 + $0x50] sm:$0xff]
    %v2635 = vld [vmem:[%s2623 + $0x58] sm:$0xff]
    %v2636 = vld [vmem:[%s2623 + $0x60] sm:$0xff]
    %v2637 = vld [vmem:[%s2623 + $0x68] sm:$0xff]
    %v2638 = vld [vmem:[%s2623 + $0x70] sm:$0xff]
    %v2639 = vld [vmem:[%s2623 + $0x78] sm:$0xff]
    %2640 = vmatpush.msra.mxu0 %v2639
    %2641 = vmatpush.msra.mxu0 %v2638
    %2642 = vmatpush.msra.mxu0 %v2637
    %2643 = vmatpush.msra.mxu0 %v2636
    %2644 = vmatpush.msra.mxu0 %v2635
    %2645 = vmatpush.msra.mxu0 %v2634
    %2646 = vmatpush.msra.mxu0 %v2633
    %2647 = vmatpush.msra.mxu0 %v2632
    %2648 = vmatpush.msra.mxu0 %v2631
    %2649 = vmatpush.msra.mxu0 %v2630
    %2650 = vmatpush.msra.mxu0 %v2629
    %2651 = vmatpush.msra.mxu0 %v2628
    %2652 = vmatpush.msra.mxu0 %v2627
    %2653 = vmatpush.msra.mxu0 %v2626
    %2654 = vmatpush.msra.mxu0 %v2625
    %2655 = vmatpush.msra.mxu0 %v2624
    %2656 = vmatmul.f32.gmra.mxu0 %v2511
    %v2657 = vpop.f32.mrf.mxu0
    %v2658 = vadd.f32 0.0, %v2657
    %2659 = vdwg.mxu0
    %v2660 = vadd.f32 %v2622, %v2658
    %v2661 = vld [vmem:[%s14] sm:$0x1]
    %v2663 = vperm.slane %v2661, 0
    %v2665 = vadd.f32 %v2660, %v2663
    %v2666 = vmax.f32 %v2665, 0.0
    %v2667 = vld [vmem:[#allocation13] sm:$0xff]
    %v2668 = vld [vmem:[#allocation13 + $0x8] sm:$0xff]
    %v2669 = vld [vmem:[#allocation13 + $0x10] sm:$0xff]
    %v2670 = vld [vmem:[#allocation13 + $0x18] sm:$0xff]
    %v2671 = vld [vmem:[#allocation13 + $0x20] sm:$0xff]
    %v2672 = vld [vmem:[#allocation13 + $0x28] sm:$0xff]
    %v2673 = vld [vmem:[#allocation13 + $0x30] sm:$0xff]
    %v2674 = vld [vmem:[#allocation13 + $0x38] sm:$0xff]
    %v2675 = vld [vmem:[#allocation13 + $0x40] sm:$0xff]
    %v2676 = vld [vmem:[#allocation13 + $0x48] sm:$0xff]
    %v2677 = vld [vmem:[#allocation13 + $0x50] sm:$0xff]
    %v2678 = vld [vmem:[#allocation13 + $0x58] sm:$0xff]
    %v2679 = vld [vmem:[#allocation13 + $0x60] sm:$0xff]
    %v2680 = vld [vmem:[#allocation13 + $0x68] sm:$0xff]
    %v2681 = vld [vmem:[#allocation13 + $0x70] sm:$0xff]
    %v2682 = vld [vmem:[#allocation13 + $0x78] sm:$0xff]
    %v2683 = vld [vmem:[%s16] sm:$0x1]
    %v2685 = vperm.slane %v2683, 0
    %2687 = vmatpush.msra.mxu0 %v2682
    %2688 = vmatpush.msra.mxu0 %v2681
    %2689 = vmatpush.msra.mxu0 %v2680
    %2690 = vmatpush.msra.mxu0 %v2679
    %2691 = vmatpush.msra.mxu0 %v2678
    %2692 = vmatpush.msra.mxu0 %v2677
    %2693 = vmatpush.msra.mxu0 %v2676
    %2694 = vmatpush.msra.mxu0 %v2675
    %2695 = vmatpush.msra.mxu0 %v2674
    %2696 = vmatpush.msra.mxu0 %v2673
    %2697 = vmatpush.msra.mxu0 %v2672
    %2698 = vmatpush.msra.mxu0 %v2671
    %2699 = vmatpush.msra.mxu0 %v2670
    %2700 = vmatpush.msra.mxu0 %v2669
    %2701 = vmatpush.msra.mxu0 %v2668
    %2702 = vmatpush.msra.mxu0 %v2667
    %2703 = vmatmul.f32.gmra.mxu0 %v2666
    %v2704 = vpop.f32.mrf.mxu0
    %v2705 = vadd.f32 %v2685, %v2704
    %2706 = vdwg.mxu0
    %v2707 = vmax.f32 %v2705, 0.0
    %v2708 = vld [vmem:[#allocation14] sm:$0xff]
    %v2709 = vld [vmem:[#allocation14 + $0x8] sm:$0xff]
    %v2710 = vld [vmem:[#allocation14 + $0x10] sm:$0xff]
    %v2711 = vld [vmem:[#allocation14 + $0x18] sm:$0xff]
    %v2712 = vld [vmem:[#allocation14 + $0x20] sm:$0xff]
    %v2713 = vld [vmem:[#allocation14 + $0x28] sm:$0xff]
    %v2714 = vld [vmem:[#allocation14 + $0x30] sm:$0xff]
    %v2715 = vld [vmem:[#allocation14 + $0x38] sm:$0xff]
    %v2716 = vld [vmem:[#allocation14 + $0x40] sm:$0xff]
    %v2717 = vld [vmem:[#allocation14 + $0x48] sm:$0xff]
    %v2718 = vld [vmem:[#allocation14 + $0x50] sm:$0xff]
    %v2719 = vld [vmem:[#allocation14 + $0x58] sm:$0xff]
    %v2720 = vld [vmem:[#allocation14 + $0x60] sm:$0xff]
    %v2721 = vld [vmem:[#allocation14 + $0x68] sm:$0xff]
    %v2722 = vld [vmem:[#allocation14 + $0x70] sm:$0xff]
    %v2723 = vld [vmem:[#allocation14 + $0x78] sm:$0xff]
    %v2724 = vld [vmem:[%s18] sm:$0x1]
    %v2726 = vperm.slane %v2724, 0
    %2728 = vmatpush.msra.mxu0 %v2723
    %2729 = vmatpush.msra.mxu0 %v2722
    %2730 = vmatpush.msra.mxu0 %v2721
    %2731 = vmatpush.msra.mxu0 %v2720
    %2732 = vmatpush.msra.mxu0 %v2719
    %2733 = vmatpush.msra.mxu0 %v2718
    %2734 = vmatpush.msra.mxu0 %v2717
    %2735 = vmatpush.msra.mxu0 %v2716
    %2736 = vmatpush.msra.mxu0 %v2715
    %2737 = vmatpush.msra.mxu0 %v2714
    %2738 = vmatpush.msra.mxu0 %v2713
    %2739 = vmatpush.msra.mxu0 %v2712
    %2740 = vmatpush.msra.mxu0 %v2711
    %2741 = vmatpush.msra.mxu0 %v2710
    %2742 = vmatpush.msra.mxu0 %v2709
    %2743 = vmatpush.msra.mxu0 %v2708
    %2744 = vmatmul.f32.gmra.mxu0 %v2707
    %v2745 = vpop.f32.mrf.mxu0
    %v2746 = vadd.f32 %v2726, %v2745
    %2747 = vdwg.mxu0
    %2748 = vst [vmem:[#allocation16] sm:$0x3] %v2746
    // Predicated region
    $region110: #{reference_net_forward.1} parent=1 // pred_check
      _
    $region111: #{reference_net_forward.1} parent=1 // pred_check_branch
      %2750 = sbr.rel (0) target = $region113
    $region112: #{reference_net_forward.1} parent=1 // pred_region
      %2752 = vsyncadd [#allocation4], 0
      %s2754 = sshll.u32 [#allocation16], 4
      %s2755 = int_to_ptr.vmem [resolvable:$true] %s2754
      %s2756 = sshll.u32 %s19, 4
      %s2757 = int_to_ptr.hbm [resolvable:$true] %s2756
      %2759 = dma.vmem_to_hbm [thread:$0]  %s2755, 32, %s2757, [#allocation4]
    $region113: #{reference_net_forward.1} parent=1 // pred_fallthru
      _
    // Predicated region
    $region114: #{reference_net_forward.1} parent=1 // pred_check
      _
    $region115: #{reference_net_forward.1} parent=1 // pred_check_branch
      %2761 = sbr.rel (0) target = $region117
    $region116: #{reference_net_forward.1} parent=1 // pred_region
      %2763 = dma.done [#allocation4], 32
    $region117: #{reference_net_forward.1} parent=1 // pred_fallthru
      _
    %2764 = vsyncpa [#allocation3], 1
    %2765 = vsyncpa [#allocation6], 1
    %2766 = vsyncpa [#allocation9], 1
    %2767 = vsyncpa [#allocation12], 1
    %2768 = vsyncpa [#allocation15], 1
    %2769 = vsyncpa [#allocation4], 1

</llo_original>
